<compile_context>
chip_gen: v7x
topology: tpu7x:2x2x1
jax: 0.10.0
libtpu: 0.0.40
codegen_flags: <defaults>
</compile_context>

<pallas_src>
import jax
import jax.numpy as jnp
from jax.experimental import pallas as pl
from jax.experimental.pallas import tpu as pltpu

POINTS = 150
IN_FEATURES = POINTS * 3                         # 450
DIMS = [IN_FEATURES, 500, 250, 100, 50, 1]       # true layer widths
PAD_DIMS = [512, 512, 256, 128, 128]             # lane-aligned in/hidden widths
N_LAYERS = 5
TILE_B = 512                                     # 256-multiple: fills v6e/v7x MXU rows


def _pad_to(x, shape):
    return jnp.pad(x, [(0, t - s) for s, t in zip(x.shape, shape)])


def ridinet_kernel(x_ref,
                   w1, b1, w2, b2, w3, b3, w4, b4, w5v, b5,
                   out_ref):
    """One (TILE_B, 512) bf16 batch tile through the whole padded MLP.

    Layers 1-4 run on the MXU (bf16 inputs, f32 accumulation); bias-add/ReLU
    stay f32 on the VPU.  The final 50->1 layer is a VPU multiply + lane
    reduction (XLU) into a (TILE_B, 1) f32 output.
    """
    def dense_relu(h_bf16, w_ref, b_ref):
        y = jnp.dot(h_bf16, w_ref[...],
                    preferred_element_type=jnp.float32) + b_ref[...]
        return jnp.maximum(y, 0.0)

    h = x_ref[...]                                           # (TILE_B, 512) bf16
    h = dense_relu(h, w1, b1).astype(jnp.bfloat16)           # (TILE_B, 512)
    h = dense_relu(h, w2, b2).astype(jnp.bfloat16)           # (TILE_B, 256)
    h = dense_relu(h, w3, b3).astype(jnp.bfloat16)           # (TILE_B, 128)
    h4 = dense_relu(h, w4, b4)                               # (TILE_B, 128) f32
    # Last layer: out width 1 -> elementwise mul + lane reduce (no padded MXU pass).
    out_ref[...] = (jnp.sum(h4 * w5v[...], axis=-1, keepdims=True)
                    + b5[...])                               # (TILE_B, 1) f32


def init_params(key):
    """torch.nn.Linear default init (U[-1/sqrt(fan_in), 1/sqrt(fan_in)]).

    Weights stored transposed (in_features, out_features); biases (1, out)."""
    params = []
    for i in range(N_LAYERS):
        fan_in, fan_out = DIMS[i], DIMS[i + 1]
        key, kw, kb = jax.random.split(key, 3)
        bound = 1.0 / jnp.sqrt(fan_in)
        w = jax.random.uniform(kw, (fan_in, fan_out), jnp.float32, -bound, bound)
        b = jax.random.uniform(kb, (1, fan_out), jnp.float32, -bound, bound)
        params += [w, b]
    return params


def pack_params(params_f32):
    """Pad to lane-aligned shapes; MXU weights -> bf16, biases stay f32.

    Last layer (50 -> 1) packed as a (1, 128) f32 row vector + (1, 1) f32 bias
    for the in-kernel VPU multiply + lane-reduce path."""
    kp = []
    for i in range(N_LAYERS - 1):
        in_p, out_p = PAD_DIMS[i], PAD_DIMS[i + 1]
        w = _pad_to(params_f32[2 * i], (in_p, out_p)).astype(jnp.bfloat16)
        b = _pad_to(params_f32[2 * i + 1], (1, out_p)).astype(jnp.float32)
        kp += [w, b]
    w5 = params_f32[2 * (N_LAYERS - 1)]            # (50, 1)
    b5 = params_f32[2 * (N_LAYERS - 1) + 1]        # (1, 1)
    w5v = _pad_to(w5.T, (1, PAD_DIMS[-1])).astype(jnp.float32)   # (1, 128)
    kp += [w5v, b5.astype(jnp.float32)]
    return kp


@jax.jit
def ridinet_forward_batched(x_flat, kparams):
    """x_flat: (B, 450) f32 (or bf16) -> (B, 1) f32."""
    B = x_flat.shape[0]
    Bp = ((B + TILE_B - 1) // TILE_B) * TILE_B
    n_tiles = Bp // TILE_B
    # Single fused pad+cast pass: the kernel consumes bf16 (halves input DMA).
    xp = _pad_to(x_flat.astype(jnp.bfloat16), (Bp, PAD_DIMS[0]))

    # Weights/biases: whole-array blocks, constant index_map -> DMA'd once,
    # VMEM-resident across all batch tiles.
    w_specs = []
    for i in range(N_LAYERS - 1):
        in_p, out_p = PAD_DIMS[i], PAD_DIMS[i + 1]
        w_specs.append(pl.BlockSpec((in_p, out_p), lambda i_: (0, 0)))
        w_specs.append(pl.BlockSpec((1, out_p), lambda i_: (0, 0)))
    w_specs.append(pl.BlockSpec((1, PAD_DIMS[-1]), lambda i_: (0, 0)))   # w5 row
    w_specs.append(pl.BlockSpec((1, 1), lambda i_: (0, 0)))              # b5

    flops = (2 * Bp * sum(PAD_DIMS[i] * PAD_DIMS[i + 1]
                          for i in range(N_LAYERS - 1))
             + 2 * Bp * PAD_DIMS[-1])
    w_bytes = (sum(PAD_DIMS[i] * PAD_DIMS[i + 1] * 2 + PAD_DIMS[i + 1] * 4
                   for i in range(N_LAYERS - 1))
               + PAD_DIMS[-1] * 4 + 4)
    bytes_accessed = w_bytes + Bp * PAD_DIMS[0] * 2 + Bp * 4

    out = pl.pallas_call(
        ridinet_kernel,
        out_shape=jax.ShapeDtypeStruct((Bp, 1), jnp.float32),
        grid_spec=pltpu.PrefetchScalarGridSpec(
            num_scalar_prefetch=0,
            grid=(n_tiles,),
            in_specs=[pl.BlockSpec((TILE_B, PAD_DIMS[0]), lambda i_: (i_, 0))]
                     + w_specs,
            out_specs=pl.BlockSpec((TILE_B, 1), lambda i_: (i_, 0)),
        ),
        compiler_params=pltpu.CompilerParams(
            dimension_semantics=("parallel",),
            vmem_limit_bytes=32 * 1024 * 1024),
        cost_estimate=pl.CostEstimate(
            flops=flops, transcendentals=0, bytes_accessed=bytes_accessed),
    )(xp, *kparams)

    return out[:B]


def ridinet_forward(x, kparams):
    """Matches torch semantics: flatten x to one 450-vector, return shape (1,)."""
    x_flat = jnp.reshape(x, (1, IN_FEATURES))
    out = ridinet_forward_batched(x_flat, kparams)
    return jnp.reshape(out, (1,))


def ridinet_reference(x_flat, params_f32):
    """Pure-JAX reference using the same bf16-at-MXU-input numerics.

    (The original torch model is full f32; the kernel uses bf16 MXU inputs
    with f32 accumulation -> ~1e-3 relative error vs torch.)"""
    h = x_flat.astype(jnp.float32)
    for i in range(N_LAYERS - 1):
        w, b = params_f32[2 * i], params_f32[2 * i + 1]
        h = jnp.dot(h.astype(jnp.bfloat16), w.astype(jnp.bfloat16),
                    preferred_element_type=jnp.float32) + b
        h = jnp.maximum(h, 0.0)
    w5, b5 = params_f32[-2], params_f32[-1]
    return jnp.sum(h * w5[:, 0][None, :], axis=-1, keepdims=True) + b5


if __name__ == "__main__":
    key = jax.random.PRNGKey(0)
    key, kx, kb = jax.random.split(key, 3)

    params_f32 = init_params(key)
    kparams = pack_params(params_f32)

    # 1) Single sample, original torch semantics: (150, 3) -> (1,)
    x = jax.random.normal(kx, (POINTS, 3), dtype=jnp.float32)
    y = jax.block_until_ready(ridinet_forward(x, kparams))
    y_ref = ridinet_reference(jnp.reshape(x, (1, IN_FEATURES)), params_f32)
    assert y.shape == (1,)
    assert jnp.allclose(y, jnp.reshape(y_ref, (1,)), atol=2e-2, rtol=2e-2), (y, y_ref)

    # 2) Batched path: B=1000 -> Bp=1024 -> 2 tiles of 512 (exercises the
    #    parallel batch grid, batch padding and the slice-off).
    B = 1000
    xb = jax.random.normal(kb, (B, IN_FEATURES), dtype=jnp.float32)
    yb = jax.block_until_ready(ridinet_forward_batched(xb, kparams))
    yb_ref = ridinet_reference(xb, params_f32)
    assert yb.shape == (B, 1)
    assert jnp.allclose(yb, yb_ref, atol=2e-2, rtol=2e-2)

    print("KERNEL_OK")
</pallas_src>

<mosaic_0001>
module attributes {stable_mosaic.version = 11 : i64} {
  func.func @ridinet_kernel(%arg0: i32, %arg1: memref<512x512xbf16, #tpu.memory_space<vmem>>, %arg2: memref<512x512xbf16, #tpu.memory_space<vmem>>, %arg3: memref<1x512xf32, #tpu.memory_space<vmem>>, %arg4: memref<512x256xbf16, #tpu.memory_space<vmem>>, %arg5: memref<1x256xf32, #tpu.memory_space<vmem>>, %arg6: memref<256x128xbf16, #tpu.memory_space<vmem>>, %arg7: memref<1x128xf32, #tpu.memory_space<vmem>>, %arg8: memref<128x128xbf16, #tpu.memory_space<vmem>>, %arg9: memref<1x128xf32, #tpu.memory_space<vmem>>, %arg10: memref<1x128xf32, #tpu.memory_space<vmem>>, %arg11: memref<1x1xf32, #tpu.memory_space<vmem>>, %arg12: memref<512x1xf32, #tpu.memory_space<vmem>>) attributes {dimension_semantics = [#tpu.dimension_semantics<parallel>], iteration_bounds = array<i64: 1>, scalar_prefetch = 0 : i64, scratch_operands = 0 : i64, tpu.core_type = #tpu.core_type<tc>, window_params = [{transform_indices = @transform_0, window_bounds = array<i64: 512, 512>}, {pipeline_mode = #tpu.pipeline_mode<synchronous>, transform_indices = @transform_1, window_bounds = array<i64: 512, 512>}, {pipeline_mode = #tpu.pipeline_mode<synchronous>, transform_indices = @transform_2, window_bounds = array<i64: 1, 512>}, {pipeline_mode = #tpu.pipeline_mode<synchronous>, transform_indices = @transform_3, window_bounds = array<i64: 512, 256>}, {pipeline_mode = #tpu.pipeline_mode<synchronous>, transform_indices = @transform_4, window_bounds = array<i64: 1, 256>}, {pipeline_mode = #tpu.pipeline_mode<synchronous>, transform_indices = @transform_5, window_bounds = array<i64: 256, 128>}, {pipeline_mode = #tpu.pipeline_mode<synchronous>, transform_indices = @transform_6, window_bounds = array<i64: 1, 128>}, {pipeline_mode = #tpu.pipeline_mode<synchronous>, transform_indices = @transform_7, window_bounds = array<i64: 128, 128>}, {pipeline_mode = #tpu.pipeline_mode<synchronous>, transform_indices = @transform_8, window_bounds = array<i64: 1, 128>}, {pipeline_mode = #tpu.pipeline_mode<synchronous>, transform_indices = @transform_9, window_bounds = array<i64: 1, 128>}, {pipeline_mode = #tpu.pipeline_mode<synchronous>, transform_indices = @transform_10, window_bounds = array<i64: 1, 1>}, {transform_indices = @transform_11, window_bounds = array<i64: 512, 1>}]} {
    %c0 = arith.constant 0 : index
    %c0_0 = arith.constant 0 : index
    %0 = vector.load %arg1[%c0, %c0_0] : memref<512x512xbf16, #tpu.memory_space<vmem>>, vector<512x512xbf16>
    %c0_1 = arith.constant 0 : index
    %c0_2 = arith.constant 0 : index
    %1 = vector.load %arg2[%c0_1, %c0_2] : memref<512x512xbf16, #tpu.memory_space<vmem>>, vector<512x512xbf16>
    %cst = arith.constant dense<0.000000e+00> : vector<512x512xf32>
    %2 = tpu.matmul %0, %1, %cst {dimension_numbers = #tpu.dot_dimension_numbers<[1], [0], [0], [1], [0, 0, 1, 1], [], []>} : vector<512x512xbf16>, vector<512x512xbf16>, vector<512x512xf32> -> vector<512x512xf32>
    %c0_3 = arith.constant 0 : index
    %c0_4 = arith.constant 0 : index
    %3 = vector.load %arg3[%c0_3, %c0_4] : memref<1x512xf32, #tpu.memory_space<vmem>>, vector<1x512xf32>
    %4 = vector.broadcast %3 : vector<1x512xf32> to vector<512x512xf32>
    %5 = arith.addf %2, %4 : vector<512x512xf32>
    %cst_5 = arith.constant 0.000000e+00 : f32
    %6 = vector.broadcast %cst_5 : f32 to vector<512x512xf32>
    %7 = arith.maximumf %5, %6 : vector<512x512xf32>
    %8 = arith.truncf %7 : vector<512x512xf32> to vector<512x512xbf16>
    %c0_6 = arith.constant 0 : index
    %c0_7 = arith.constant 0 : index
    %9 = vector.load %arg4[%c0_6, %c0_7] : memref<512x256xbf16, #tpu.memory_space<vmem>>, vector<512x256xbf16>
    %cst_8 = arith.constant dense<0.000000e+00> : vector<512x256xf32>
    %10 = tpu.matmul %8, %9, %cst_8 {dimension_numbers = #tpu.dot_dimension_numbers<[1], [0], [0], [1], [0, 0, 1, 1], [], []>} : vector<512x512xbf16>, vector<512x256xbf16>, vector<512x256xf32> -> vector<512x256xf32>
    %c0_9 = arith.constant 0 : index
    %c0_10 = arith.constant 0 : index
    %11 = vector.load %arg5[%c0_9, %c0_10] : memref<1x256xf32, #tpu.memory_space<vmem>>, vector<1x256xf32>
    %12 = vector.broadcast %11 : vector<1x256xf32> to vector<512x256xf32>
    %13 = arith.addf %10, %12 : vector<512x256xf32>
    %cst_11 = arith.constant 0.000000e+00 : f32
    %14 = vector.broadcast %cst_11 : f32 to vector<512x256xf32>
    %15 = arith.maximumf %13, %14 : vector<512x256xf32>
    %16 = arith.truncf %15 : vector<512x256xf32> to vector<512x256xbf16>
    %c0_12 = arith.constant 0 : index
    %c0_13 = arith.constant 0 : index
    %17 = vector.load %arg6[%c0_12, %c0_13] : memref<256x128xbf16, #tpu.memory_space<vmem>>, vector<256x128xbf16>
    %cst_14 = arith.constant dense<0.000000e+00> : vector<512x128xf32>
    %18 = tpu.matmul %16, %17, %cst_14 {dimension_numbers = #tpu.dot_dimension_numbers<[1], [0], [0], [1], [0, 0, 1, 1], [], []>} : vector<512x256xbf16>, vector<256x128xbf16>, vector<512x128xf32> -> vector<512x128xf32>
    %c0_15 = arith.constant 0 : index
    %c0_16 = arith.constant 0 : index
    %19 = vector.load %arg7[%c0_15, %c0_16] : memref<1x128xf32, #tpu.memory_space<vmem>>, vector<1x128xf32>
    %20 = vector.broadcast %19 : vector<1x128xf32> to vector<512x128xf32>
    %21 = arith.addf %18, %20 : vector<512x128xf32>
    %cst_17 = arith.constant 0.000000e+00 : f32
    %22 = vector.broadcast %cst_17 : f32 to vector<512x128xf32>
    %23 = arith.maximumf %21, %22 : vector<512x128xf32>
    %24 = arith.truncf %23 : vector<512x128xf32> to vector<512x128xbf16>
    %c0_18 = arith.constant 0 : index
    %c0_19 = arith.constant 0 : index
    %25 = vector.load %arg8[%c0_18, %c0_19] : memref<128x128xbf16, #tpu.memory_space<vmem>>, vector<128x128xbf16>
    %cst_20 = arith.constant dense<0.000000e+00> : vector<512x128xf32>
    %26 = tpu.matmul %24, %25, %cst_20 {dimension_numbers = #tpu.dot_dimension_numbers<[1], [0], [0], [1], [0, 0, 1, 1], [], []>} : vector<512x128xbf16>, vector<128x128xbf16>, vector<512x128xf32> -> vector<512x128xf32>
    %c0_21 = arith.constant 0 : index
    %c0_22 = arith.constant 0 : index
    %27 = vector.load %arg9[%c0_21, %c0_22] : memref<1x128xf32, #tpu.memory_space<vmem>>, vector<1x128xf32>
    %28 = vector.broadcast %27 : vector<1x128xf32> to vector<512x128xf32>
    %29 = arith.addf %26, %28 : vector<512x128xf32>
    %cst_23 = arith.constant 0.000000e+00 : f32
    %30 = vector.broadcast %cst_23 : f32 to vector<512x128xf32>
    %31 = arith.maximumf %29, %30 : vector<512x128xf32>
    %c0_24 = arith.constant 0 : index
    %c0_25 = arith.constant 0 : index
    %32 = vector.load %arg10[%c0_24, %c0_25] : memref<1x128xf32, #tpu.memory_space<vmem>>, vector<1x128xf32>
    %33 = vector.broadcast %32 : vector<1x128xf32> to vector<512x128xf32>
    %34 = arith.mulf %31, %33 : vector<512x128xf32>
    %cst_26 = arith.constant dense<0.000000e+00> : vector<512xf32>
    %35 = vector.multi_reduction <add>, %34, %cst_26 [1] : vector<512x128xf32> to vector<512xf32>
    %36 = vector.shape_cast %35 : vector<512xf32> to vector<512x1xf32>
    %c0_27 = arith.constant 0 : index
    %c0_28 = arith.constant 0 : index
    %37 = vector.load %arg11[%c0_27, %c0_28] : memref<1x1xf32, #tpu.memory_space<vmem>>, vector<1x1xf32>
    %38 = vector.broadcast %37 : vector<1x1xf32> to vector<512x1xf32>
    %39 = arith.addf %36, %38 : vector<512x1xf32>
    %c0_29 = arith.constant 0 : index
    %c0_30 = arith.constant 0 : index
    %40 = vector.load %arg12[%c0_29, %c0_30] : memref<512x1xf32, #tpu.memory_space<vmem>>, vector<512x1xf32>
    tpu.vector_store %arg12[%c0_29, %c0_30], %39 {strides = array<i32>} : memref<512x1xf32, #tpu.memory_space<vmem>>, vector<512x1xf32>,
    return
  }
  func.func @transform_0(%arg0: i32) -> (i32, i32) {
    %c0_i32 = arith.constant 0 : i32
    %c0_i32_0 = arith.constant 0 : i32
    return %arg0, %c0_i32 : i32, i32
  }
  func.func @transform_1(%arg0: i32) -> (i32, i32) {
    %c0_i32 = arith.constant 0 : i32
    %c0_i32_0 = arith.constant 0 : i32
    %c0_i32_1 = arith.constant 0 : i32
    return %c0_i32, %c0_i32_0 : i32, i32
  }
  func.func @transform_2(%arg0: i32) -> (i32, i32) {
    %c0_i32 = arith.constant 0 : i32
    %c0_i32_0 = arith.constant 0 : i32
    %c0_i32_1 = arith.constant 0 : i32
    return %c0_i32, %c0_i32_0 : i32, i32
  }
  func.func @transform_3(%arg0: i32) -> (i32, i32) {
    %c0_i32 = arith.constant 0 : i32
    %c0_i32_0 = arith.constant 0 : i32
    %c0_i32_1 = arith.constant 0 : i32
    return %c0_i32, %c0_i32_0 : i32, i32
  }
  func.func @transform_4(%arg0: i32) -> (i32, i32) {
    %c0_i32 = arith.constant 0 : i32
    %c0_i32_0 = arith.constant 0 : i32
    %c0_i32_1 = arith.constant 0 : i32
    return %c0_i32, %c0_i32_0 : i32, i32
  }
  func.func @transform_5(%arg0: i32) -> (i32, i32) {
    %c0_i32 = arith.constant 0 : i32
    %c0_i32_0 = arith.constant 0 : i32
    %c0_i32_1 = arith.constant 0 : i32
    return %c0_i32, %c0_i32_0 : i32, i32
  }
  func.func @transform_6(%arg0: i32) -> (i32, i32) {
    %c0_i32 = arith.constant 0 : i32
    %c0_i32_0 = arith.constant 0 : i32
    %c0_i32_1 = arith.constant 0 : i32
    return %c0_i32, %c0_i32_0 : i32, i32
  }
  func.func @transform_7(%arg0: i32) -> (i32, i32) {
    %c0_i32 = arith.constant 0 : i32
    %c0_i32_0 = arith.constant 0 : i32
    %c0_i32_1 = arith.constant 0 : i32
    return %c0_i32, %c0_i32_0 : i32, i32
  }
  func.func @transform_8(%arg0: i32) -> (i32, i32) {
    %c0_i32 = arith.constant 0 : i32
    %c0_i32_0 = arith.constant 0 : i32
    %c0_i32_1 = arith.constant 0 : i32
    return %c0_i32, %c0_i32_0 : i32, i32
  }
  func.func @transform_9(%arg0: i32) -> (i32, i32) {
    %c0_i32 = arith.constant 0 : i32
    %c0_i32_0 = arith.constant 0 : i32
    %c0_i32_1 = arith.constant 0 : i32
    return %c0_i32, %c0_i32_0 : i32, i32
  }
  func.func @transform_10(%arg0: i32) -> (i32, i32) {
    %c0_i32 = arith.constant 0 : i32
    %c0_i32_0 = arith.constant 0 : i32
    %c0_i32_1 = arith.constant 0 : i32
    return %c0_i32, %c0_i32_0 : i32, i32
  }
  func.func @transform_11(%arg0: i32) -> (i32, i32) {
    %c0_i32 = arith.constant 0 : i32
    %c0_i32_0 = arith.constant 0 : i32
    return %arg0, %c0_i32 : i32, i32
  }
}

</mosaic_0001>

<llo_original>
// kernel: ridinet_forward_batched.1
$region0: #{ridinet_forward_batched.1}
  #allocation0 [shape = 'u32[]', space=smem, size = 0x4, offset = 0x4, fixed_abs, tag = 'smem constant byte address 0x4 - core index']
  #allocation1 [shape = 'u32[144,128]{1,0:T(1,128)}', space=vmem, size = 0x12000, scoped, tag = 'internal scratch']
  #allocation2 [shape = 'f32[1,1]{1,0:T(1,128)S(1)}', space=vmem, size = 0x200, scoped, tag = 'scoped memory for ridinet_forward_batched.1']
  %s0 = inlined_call_operand.vmem [shape: bf16[512,512], index: 0, kind: input, shape index: {}]
  %s1 = inlined_call_operand.vmem [shape: bf16[512,512], index: 1, kind: input, shape index: {}]
  %s2 = inlined_call_operand.vmem [shape: f32[1,512], index: 2, kind: input, shape index: {}]
  %s3 = inlined_call_operand.hbm [shape: bf16[512,256], index: 3, kind: input, shape index: {}]
  %s4 = inlined_call_operand.vmem [shape: f32[1,256], index: 4, kind: input, shape index: {}]
  %s5 = inlined_call_operand.hbm [shape: bf16[256,128], index: 5, kind: input, shape index: {}]
  %s6 = inlined_call_operand.vmem [shape: f32[1,128], index: 6, kind: input, shape index: {}]
  %s7 = inlined_call_operand.hbm [shape: bf16[128,128], index: 7, kind: input, shape index: {}]
  %s8 = inlined_call_operand.vmem [shape: f32[1,128], index: 8, kind: input, shape index: {}]
  %s9 = inlined_call_operand.vmem [shape: f32[1,128], index: 9, kind: input, shape index: {}]
  %s10 = inlined_call_operand.<no memory space> [shape: f32[1,1], index: 10, kind: input, shape index: {}]
  %s11 = inlined_call_operand.vmem [shape: f32[512,1], index: 11, kind: output, shape index: {}]
  %s12 = sld [smem:[#allocation0]]
  $region66: #{ridinet_forward_batched.1} parent=0
    _
  %s14 = ssub.s32 1, %s12
  %s15 = scalar_select 0, %s14, %s12
  %v16 = vstv %s10
  %17 = vst [vmem:[#allocation2] sm:$0x1] %v16
  $region1: #{ridinet_forward_batched.1} parent=0
    #allocation3 [shape = 'u8[262144]{0}', space=vmem, size = 0x40000, scoped, tag = 'input window, operand 3, single buffered']
    #allocation4 [shape = 's32[1]{0}', space=sflag, size = 0x4, scoped, tag = 'scoped memory for ridinet_forward_batched.1']
    #allocation5 [shape = 'u8[65536]{0}', space=vmem, size = 0x10000, scoped, tag = 'input window, operand 5, single buffered']
    #allocation6 [shape = 's32[1]{0}', space=sflag, size = 0x4, scoped, tag = 'scoped memory for ridinet_forward_batched.1']
    #allocation7 [shape = 'u8[32768]{0}', space=vmem, size = 0x8000, scoped, tag = 'input window, operand 7, single buffered']
    %18 = vsyncpa [#allocation4], 0
    %19 = vsyncpa [#allocation6], 0
    // Predicated region
    $region2: #{ridinet_forward_batched.1} parent=1 // pred_check
      _
    $region3: #{ridinet_forward_batched.1} parent=1 // pred_check_branch
      %21 = sbr.rel (0) target = $region5
    $region4: #{ridinet_forward_batched.1} parent=1 // pred_region
      _
    $region5: #{ridinet_forward_batched.1} parent=1 // pred_fallthru
      _
    // Predicated region
    $region6: #{ridinet_forward_batched.1} parent=1 // pred_check
      _
    $region7: #{ridinet_forward_batched.1} parent=1 // pred_check_branch
      %23 = sbr.rel (0) target = $region9
    $region8: #{ridinet_forward_batched.1} parent=1 // pred_region
      _
    $region9: #{ridinet_forward_batched.1} parent=1 // pred_fallthru
      _
    // Predicated region
    $region10: #{ridinet_forward_batched.1} parent=1 // pred_check
      _
    $region11: #{ridinet_forward_batched.1} parent=1 // pred_check_branch
      %25 = sbr.rel (0) target = $region13
    $region12: #{ridinet_forward_batched.1} parent=1 // pred_region
      _
    $region13: #{ridinet_forward_batched.1} parent=1 // pred_fallthru
      _
    // Predicated region
    $region14: #{ridinet_forward_batched.1} parent=1 // pred_check
      _
    $region15: #{ridinet_forward_batched.1} parent=1 // pred_check_branch
      %27 = sbr.rel (0) target = $region17
    $region16: #{ridinet_forward_batched.1} parent=1 // pred_region
      %s29 = ssub.s32 8192, 8192
      %30 = vsyncadd [#allocation4], %s29
      %s31 = sshll.u32 [#allocation3], 4
      %s32 = int_to_ptr.vmem [resolvable:$true] %s31
      %37 = dma.hbm_to_vmem [thread:$0]  %s3, 8192, %s32, [#allocation4], 128, 128, 8
    $region17: #{ridinet_forward_batched.1} parent=1 // pred_fallthru
      _
    // Predicated region
    $region18: #{ridinet_forward_batched.1} parent=1 // pred_check
      _
    $region19: #{ridinet_forward_batched.1} parent=1 // pred_check_branch
      %39 = sbr.rel (0) target = $region21
    $region20: #{ridinet_forward_batched.1} parent=1 // pred_region
      _
    $region21: #{ridinet_forward_batched.1} parent=1 // pred_fallthru
      _
    // Predicated region
    $region22: #{ridinet_forward_batched.1} parent=1 // pred_check
      _
    $region23: #{ridinet_forward_batched.1} parent=1 // pred_check_branch
      %41 = sbr.rel (0) target = $region25
    $region24: #{ridinet_forward_batched.1} parent=1 // pred_region
      %s43 = ssub.s32 2048, 2048
      %44 = vsyncadd [#allocation6], %s43
      %s45 = sshll.u32 [#allocation5], 4
      %s46 = int_to_ptr.vmem [resolvable:$true] %s45
      %51 = dma.hbm_to_vmem [thread:$0]  %s5, 2048, %s46, [#allocation6], 64, 64, 4
    $region25: #{ridinet_forward_batched.1} parent=1 // pred_fallthru
      _
    // Predicated region
    $region26: #{ridinet_forward_batched.1} parent=1 // pred_check
      _
    $region27: #{ridinet_forward_batched.1} parent=1 // pred_check_branch
      %53 = sbr.rel (0) target = $region29
    $region28: #{ridinet_forward_batched.1} parent=1 // pred_region
      _
    $region29: #{ridinet_forward_batched.1} parent=1 // pred_fallthru
      _
    // Predicated region
    $region30: #{ridinet_forward_batched.1} parent=1 // pred_check
      _
    $region31: #{ridinet_forward_batched.1} parent=1 // pred_check_branch
      %55 = sbr.rel (0) target = $region33
    $region32: #{ridinet_forward_batched.1} parent=1 // pred_region
      %s57 = ssub.s32 1024, 1024
      %58 = vsyncadd [#allocation6], %s57
      %s59 = sshll.u32 [#allocation7], 4
      %s60 = int_to_ptr.vmem [resolvable:$true] %s59
      %65 = dma.hbm_to_vmem [thread:$0]  %s7, 1024, %s60, [#allocation6], 64, 64, 4
    $region33: #{ridinet_forward_batched.1} parent=1 // pred_fallthru
      _
    // Predicated region
    $region34: #{ridinet_forward_batched.1} parent=1 // pred_check
      _
    $region35: #{ridinet_forward_batched.1} parent=1 // pred_check_branch
      %67 = sbr.rel (0) target = $region37
    $region36: #{ridinet_forward_batched.1} parent=1 // pred_region
      _
    $region37: #{ridinet_forward_batched.1} parent=1 // pred_fallthru
      _
    // Predicated region
    $region38: #{ridinet_forward_batched.1} parent=1 // pred_check
      _
    $region39: #{ridinet_forward_batched.1} parent=1 // pred_check_branch
      %69 = sbr.rel (0) target = $region41
    $region40: #{ridinet_forward_batched.1} parent=1 // pred_region
      _
    $region41: #{ridinet_forward_batched.1} parent=1 // pred_fallthru
      _
    // Predicated region
    $region42: #{ridinet_forward_batched.1} parent=1 // pred_check
      _
    $region43: #{ridinet_forward_batched.1} parent=1 // pred_check_branch
      %71 = sbr.rel (0) target = $region45
    $region44: #{ridinet_forward_batched.1} parent=1 // pred_region
      _
    $region45: #{ridinet_forward_batched.1} parent=1 // pred_fallthru
      _
    // Predicated region
    $region46: #{ridinet_forward_batched.1} parent=1 // pred_check
      _
    $region47: #{ridinet_forward_batched.1} parent=1 // pred_check_branch
      %73 = sbr.rel (0) target = $region49
    $region48: #{ridinet_forward_batched.1} parent=1 // pred_region
      %74 = dma.done [#allocation4], 8192
    $region49: #{ridinet_forward_batched.1} parent=1 // pred_fallthru
      _
    // Predicated region
    $region50: #{ridinet_forward_batched.1} parent=1 // pred_check
      _
    $region51: #{ridinet_forward_batched.1} parent=1 // pred_check_branch
      %76 = sbr.rel (0) target = $region53
    $region52: #{ridinet_forward_batched.1} parent=1 // pred_region
      %77 = dma.done [#allocation6], 2048
    $region53: #{ridinet_forward_batched.1} parent=1 // pred_fallthru
      _
    // Predicated region
    $region54: #{ridinet_forward_batched.1} parent=1 // pred_check
      _
    $region55: #{ridinet_forward_batched.1} parent=1 // pred_check_branch
      %79 = sbr.rel (0) target = $region57
    $region56: #{ridinet_forward_batched.1} parent=1 // pred_region
      %80 = dma.done [#allocation6], 1024
    $region57: #{ridinet_forward_batched.1} parent=1 // pred_fallthru
      _
    %v82 = vld [vmem:[%s0] sm:$0xff]
    %v83 = vld [vmem:[%s0 + $0x8] sm:$0xff]
    %v84 = vld [vmem:[%s0 + $0x10] sm:$0xff]
    %v85 = vld [vmem:[%s0 + $0x18] sm:$0xff]
    %v86 = vld [vmem:[%s0 + $0x20] sm:$0xff]
    %v87 = vld [vmem:[%s0 + $0x28] sm:$0xff]
    %v88 = vld [vmem:[%s0 + $0x30] sm:$0xff]
    %v89 = vld [vmem:[%s0 + $0x38] sm:$0xff]
    %v90 = vld [vmem:[%s0 + $0x40] sm:$0xff]
    %v91 = vld [vmem:[%s0 + $0x48] sm:$0xff]
    %v92 = vld [vmem:[%s0 + $0x50] sm:$0xff]
    %v93 = vld [vmem:[%s0 + $0x58] sm:$0xff]
    %v94 = vld [vmem:[%s0 + $0x60] sm:$0xff]
    %v95 = vld [vmem:[%s0 + $0x68] sm:$0xff]
    %v96 = vld [vmem:[%s0 + $0x70] sm:$0xff]
    %v97 = vld [vmem:[%s0 + $0x78] sm:$0xff]
    %v98 = vld [vmem:[%s0 + $0x80] sm:$0xff]
    %v99 = vld [vmem:[%s0 + $0x88] sm:$0xff]
    %v100 = vld [vmem:[%s0 + $0x90] sm:$0xff]
    %v101 = vld [vmem:[%s0 + $0x98] sm:$0xff]
    %v102 = vld [vmem:[%s0 + $0xa0] sm:$0xff]
    %v103 = vld [vmem:[%s0 + $0xa8] sm:$0xff]
    %v104 = vld [vmem:[%s0 + $0xb0] sm:$0xff]
    %v105 = vld [vmem:[%s0 + $0xb8] sm:$0xff]
    %v106 = vld [vmem:[%s0 + $0xc0] sm:$0xff]
    %v107 = vld [vmem:[%s0 + $0xc8] sm:$0xff]
    %v108 = vld [vmem:[%s0 + $0xd0] sm:$0xff]
    %v109 = vld [vmem:[%s0 + $0xd8] sm:$0xff]
    %v110 = vld [vmem:[%s0 + $0xe0] sm:$0xff]
    %v111 = vld [vmem:[%s0 + $0xe8] sm:$0xff]
    %v112 = vld [vmem:[%s0 + $0xf0] sm:$0xff]
    %v113 = vld [vmem:[%s0 + $0xf8] sm:$0xff]
    %v114 = vld [vmem:[%s0 + $0x100] sm:$0xff]
    %v115 = vld [vmem:[%s0 + $0x108] sm:$0xff]
    %v116 = vld [vmem:[%s0 + $0x110] sm:$0xff]
    %v117 = vld [vmem:[%s0 + $0x118] sm:$0xff]
    %v118 = vld [vmem:[%s0 + $0x120] sm:$0xff]
    %v119 = vld [vmem:[%s0 + $0x128] sm:$0xff]
    %v120 = vld [vmem:[%s0 + $0x130] sm:$0xff]
    %v121 = vld [vmem:[%s0 + $0x138] sm:$0xff]
    %v122 = vld [vmem:[%s0 + $0x140] sm:$0xff]
    %v123 = vld [vmem:[%s0 + $0x148] sm:$0xff]
    %v124 = vld [vmem:[%s0 + $0x150] sm:$0xff]
    %v125 = vld [vmem:[%s0 + $0x158] sm:$0xff]
    %v126 = vld [vmem:[%s0 + $0x160] sm:$0xff]
    %v127 = vld [vmem:[%s0 + $0x168] sm:$0xff]
    %v128 = vld [vmem:[%s0 + $0x170] sm:$0xff]
    %v129 = vld [vmem:[%s0 + $0x178] sm:$0xff]
    %v130 = vld [vmem:[%s0 + $0x180] sm:$0xff]
    %v131 = vld [vmem:[%s0 + $0x188] sm:$0xff]
    %v132 = vld [vmem:[%s0 + $0x190] sm:$0xff]
    %v133 = vld [vmem:[%s0 + $0x198] sm:$0xff]
    %v134 = vld [vmem:[%s0 + $0x1a0] sm:$0xff]
    %v135 = vld [vmem:[%s0 + $0x1a8] sm:$0xff]
    %v136 = vld [vmem:[%s0 + $0x1b0] sm:$0xff]
    %v137 = vld [vmem:[%s0 + $0x1b8] sm:$0xff]
    %v138 = vld [vmem:[%s0 + $0x1c0] sm:$0xff]
    %v139 = vld [vmem:[%s0 + $0x1c8] sm:$0xff]
    %v140 = vld [vmem:[%s0 + $0x1d0] sm:$0xff]
    %v141 = vld [vmem:[%s0 + $0x1d8] sm:$0xff]
    %v142 = vld [vmem:[%s0 + $0x1e0] sm:$0xff]
    %v143 = vld [vmem:[%s0 + $0x1e8] sm:$0xff]
    %v144 = vld [vmem:[%s0 + $0x1f0] sm:$0xff]
    %v145 = vld [vmem:[%s0 + $0x1f8] sm:$0xff]
    %v146 = vld [vmem:[%s0 + $0x200] sm:$0xff]
    %v147 = vld [vmem:[%s0 + $0x208] sm:$0xff]
    %v148 = vld [vmem:[%s0 + $0x210] sm:$0xff]
    %v149 = vld [vmem:[%s0 + $0x218] sm:$0xff]
    %v150 = vld [vmem:[%s0 + $0x220] sm:$0xff]
    %v151 = vld [vmem:[%s0 + $0x228] sm:$0xff]
    %v152 = vld [vmem:[%s0 + $0x230] sm:$0xff]
    %v153 = vld [vmem:[%s0 + $0x238] sm:$0xff]
    %v154 = vld [vmem:[%s0 + $0x240] sm:$0xff]
    %v155 = vld [vmem:[%s0 + $0x248] sm:$0xff]
    %v156 = vld [vmem:[%s0 + $0x250] sm:$0xff]
    %v157 = vld [vmem:[%s0 + $0x258] sm:$0xff]
    %v158 = vld [vmem:[%s0 + $0x260] sm:$0xff]
    %v159 = vld [vmem:[%s0 + $0x268] sm:$0xff]
    %v160 = vld [vmem:[%s0 + $0x270] sm:$0xff]
    %v161 = vld [vmem:[%s0 + $0x278] sm:$0xff]
    %v162 = vld [vmem:[%s0 + $0x280] sm:$0xff]
    %v163 = vld [vmem:[%s0 + $0x288] sm:$0xff]
    %v164 = vld [vmem:[%s0 + $0x290] sm:$0xff]
    %v165 = vld [vmem:[%s0 + $0x298] sm:$0xff]
    %v166 = vld [vmem:[%s0 + $0x2a0] sm:$0xff]
    %v167 = vld [vmem:[%s0 + $0x2a8] sm:$0xff]
    %v168 = vld [vmem:[%s0 + $0x2b0] sm:$0xff]
    %v169 = vld [vmem:[%s0 + $0x2b8] sm:$0xff]
    %v170 = vld [vmem:[%s0 + $0x2c0] sm:$0xff]
    %v171 = vld [vmem:[%s0 + $0x2c8] sm:$0xff]
    %v172 = vld [vmem:[%s0 + $0x2d0] sm:$0xff]
    %v173 = vld [vmem:[%s0 + $0x2d8] sm:$0xff]
    %v174 = vld [vmem:[%s0 + $0x2e0] sm:$0xff]
    %v175 = vld [vmem:[%s0 + $0x2e8] sm:$0xff]
    %v176 = vld [vmem:[%s0 + $0x2f0] sm:$0xff]
    %v177 = vld [vmem:[%s0 + $0x2f8] sm:$0xff]
    %v178 = vld [vmem:[%s0 + $0x300] sm:$0xff]
    %v179 = vld [vmem:[%s0 + $0x308] sm:$0xff]
    %v180 = vld [vmem:[%s0 + $0x310] sm:$0xff]
    %v181 = vld [vmem:[%s0 + $0x318] sm:$0xff]
    %v182 = vld [vmem:[%s0 + $0x320] sm:$0xff]
    %v183 = vld [vmem:[%s0 + $0x328] sm:$0xff]
    %v184 = vld [vmem:[%s0 + $0x330] sm:$0xff]
    %v185 = vld [vmem:[%s0 + $0x338] sm:$0xff]
    %v186 = vld [vmem:[%s0 + $0x340] sm:$0xff]
    %v187 = vld [vmem:[%s0 + $0x348] sm:$0xff]
    %v188 = vld [vmem:[%s0 + $0x350] sm:$0xff]
    %v189 = vld [vmem:[%s0 + $0x358] sm:$0xff]
    %v190 = vld [vmem:[%s0 + $0x360] sm:$0xff]
    %v191 = vld [vmem:[%s0 + $0x368] sm:$0xff]
    %v192 = vld [vmem:[%s0 + $0x370] sm:$0xff]
    %v193 = vld [vmem:[%s0 + $0x378] sm:$0xff]
    %v194 = vld [vmem:[%s0 + $0x380] sm:$0xff]
    %v195 = vld [vmem:[%s0 + $0x388] sm:$0xff]
    %v196 = vld [vmem:[%s0 + $0x390] sm:$0xff]
    %v197 = vld [vmem:[%s0 + $0x398] sm:$0xff]
    %v198 = vld [vmem:[%s0 + $0x3a0] sm:$0xff]
    %v199 = vld [vmem:[%s0 + $0x3a8] sm:$0xff]
    %v200 = vld [vmem:[%s0 + $0x3b0] sm:$0xff]
    %v201 = vld [vmem:[%s0 + $0x3b8] sm:$0xff]
    %v202 = vld [vmem:[%s0 + $0x3c0] sm:$0xff]
    %v203 = vld [vmem:[%s0 + $0x3c8] sm:$0xff]
    %v204 = vld [vmem:[%s0 + $0x3d0] sm:$0xff]
    %v205 = vld [vmem:[%s0 + $0x3d8] sm:$0xff]
    %v206 = vld [vmem:[%s0 + $0x3e0] sm:$0xff]
    %v207 = vld [vmem:[%s0 + $0x3e8] sm:$0xff]
    %v208 = vld [vmem:[%s0 + $0x3f0] sm:$0xff]
    %v209 = vld [vmem:[%s0 + $0x3f8] sm:$0xff]
    %v210 = vld [vmem:[%s1] sm:$0xff]
    %v211 = vld [vmem:[%s1 + $0x8] sm:$0xff]
    %v212 = vld [vmem:[%s1 + $0x10] sm:$0xff]
    %v213 = vld [vmem:[%s1 + $0x18] sm:$0xff]
    %v214 = vld [vmem:[%s1 + $0x20] sm:$0xff]
    %v215 = vld [vmem:[%s1 + $0x28] sm:$0xff]
    %v216 = vld [vmem:[%s1 + $0x30] sm:$0xff]
    %v217 = vld [vmem:[%s1 + $0x38] sm:$0xff]
    %v218 = vld [vmem:[%s1 + $0x40] sm:$0xff]
    %v219 = vld [vmem:[%s1 + $0x48] sm:$0xff]
    %v220 = vld [vmem:[%s1 + $0x50] sm:$0xff]
    %v221 = vld [vmem:[%s1 + $0x58] sm:$0xff]
    %v222 = vld [vmem:[%s1 + $0x60] sm:$0xff]
    %v223 = vld [vmem:[%s1 + $0x68] sm:$0xff]
    %v224 = vld [vmem:[%s1 + $0x70] sm:$0xff]
    %v225 = vld [vmem:[%s1 + $0x78] sm:$0xff]
    %v226 = vld [vmem:[%s1 + $0x80] sm:$0xff]
    %v227 = vld [vmem:[%s1 + $0x88] sm:$0xff]
    %v228 = vld [vmem:[%s1 + $0x90] sm:$0xff]
    %v229 = vld [vmem:[%s1 + $0x98] sm:$0xff]
    %v230 = vld [vmem:[%s1 + $0xa0] sm:$0xff]
    %v231 = vld [vmem:[%s1 + $0xa8] sm:$0xff]
    %v232 = vld [vmem:[%s1 + $0xb0] sm:$0xff]
    %v233 = vld [vmem:[%s1 + $0xb8] sm:$0xff]
    %v234 = vld [vmem:[%s1 + $0xc0] sm:$0xff]
    %v235 = vld [vmem:[%s1 + $0xc8] sm:$0xff]
    %v236 = vld [vmem:[%s1 + $0xd0] sm:$0xff]
    %v237 = vld [vmem:[%s1 + $0xd8] sm:$0xff]
    %v238 = vld [vmem:[%s1 + $0xe0] sm:$0xff]
    %v239 = vld [vmem:[%s1 + $0xe8] sm:$0xff]
    %v240 = vld [vmem:[%s1 + $0xf0] sm:$0xff]
    %v241 = vld [vmem:[%s1 + $0xf8] sm:$0xff]
    %v242 = vld [vmem:[%s1 + $0x100] sm:$0xff]
    %v243 = vld [vmem:[%s1 + $0x108] sm:$0xff]
    %v244 = vld [vmem:[%s1 + $0x110] sm:$0xff]
    %v245 = vld [vmem:[%s1 + $0x118] sm:$0xff]
    %v246 = vld [vmem:[%s1 + $0x120] sm:$0xff]
    %v247 = vld [vmem:[%s1 + $0x128] sm:$0xff]
    %v248 = vld [vmem:[%s1 + $0x130] sm:$0xff]
    %v249 = vld [vmem:[%s1 + $0x138] sm:$0xff]
    %v250 = vld [vmem:[%s1 + $0x140] sm:$0xff]
    %v251 = vld [vmem:[%s1 + $0x148] sm:$0xff]
    %v252 = vld [vmem:[%s1 + $0x150] sm:$0xff]
    %v253 = vld [vmem:[%s1 + $0x158] sm:$0xff]
    %v254 = vld [vmem:[%s1 + $0x160] sm:$0xff]
    %v255 = vld [vmem:[%s1 + $0x168] sm:$0xff]
    %v256 = vld [vmem:[%s1 + $0x170] sm:$0xff]
    %v257 = vld [vmem:[%s1 + $0x178] sm:$0xff]
    %v258 = vld [vmem:[%s1 + $0x180] sm:$0xff]
    %v259 = vld [vmem:[%s1 + $0x188] sm:$0xff]
    %v260 = vld [vmem:[%s1 + $0x190] sm:$0xff]
    %v261 = vld [vmem:[%s1 + $0x198] sm:$0xff]
    %v262 = vld [vmem:[%s1 + $0x1a0] sm:$0xff]
    %v263 = vld [vmem:[%s1 + $0x1a8] sm:$0xff]
    %v264 = vld [vmem:[%s1 + $0x1b0] sm:$0xff]
    %v265 = vld [vmem:[%s1 + $0x1b8] sm:$0xff]
    %v266 = vld [vmem:[%s1 + $0x1c0] sm:$0xff]
    %v267 = vld [vmem:[%s1 + $0x1c8] sm:$0xff]
    %v268 = vld [vmem:[%s1 + $0x1d0] sm:$0xff]
    %v269 = vld [vmem:[%s1 + $0x1d8] sm:$0xff]
    %v270 = vld [vmem:[%s1 + $0x1e0] sm:$0xff]
    %v271 = vld [vmem:[%s1 + $0x1e8] sm:$0xff]
    %v272 = vld [vmem:[%s1 + $0x1f0] sm:$0xff]
    %v273 = vld [vmem:[%s1 + $0x1f8] sm:$0xff]
    %v274 = vld [vmem:[%s1 + $0x200] sm:$0xff]
    %v275 = vld [vmem:[%s1 + $0x208] sm:$0xff]
    %v276 = vld [vmem:[%s1 + $0x210] sm:$0xff]
    %v277 = vld [vmem:[%s1 + $0x218] sm:$0xff]
    %v278 = vld [vmem:[%s1 + $0x220] sm:$0xff]
    %v279 = vld [vmem:[%s1 + $0x228] sm:$0xff]
    %v280 = vld [vmem:[%s1 + $0x230] sm:$0xff]
    %v281 = vld [vmem:[%s1 + $0x238] sm:$0xff]
    %v282 = vld [vmem:[%s1 + $0x240] sm:$0xff]
    %v283 = vld [vmem:[%s1 + $0x248] sm:$0xff]
    %v284 = vld [vmem:[%s1 + $0x250] sm:$0xff]
    %v285 = vld [vmem:[%s1 + $0x258] sm:$0xff]
    %v286 = vld [vmem:[%s1 + $0x260] sm:$0xff]
    %v287 = vld [vmem:[%s1 + $0x268] sm:$0xff]
    %v288 = vld [vmem:[%s1 + $0x270] sm:$0xff]
    %v289 = vld [vmem:[%s1 + $0x278] sm:$0xff]
    %v290 = vld [vmem:[%s1 + $0x280] sm:$0xff]
    %v291 = vld [vmem:[%s1 + $0x288] sm:$0xff]
    %v292 = vld [vmem:[%s1 + $0x290] sm:$0xff]
    %v293 = vld [vmem:[%s1 + $0x298] sm:$0xff]
    %v294 = vld [vmem:[%s1 + $0x2a0] sm:$0xff]
    %v295 = vld [vmem:[%s1 + $0x2a8] sm:$0xff]
    %v296 = vld [vmem:[%s1 + $0x2b0] sm:$0xff]
    %v297 = vld [vmem:[%s1 + $0x2b8] sm:$0xff]
    %v298 = vld [vmem:[%s1 + $0x2c0] sm:$0xff]
    %v299 = vld [vmem:[%s1 + $0x2c8] sm:$0xff]
    %v300 = vld [vmem:[%s1 + $0x2d0] sm:$0xff]
    %v301 = vld [vmem:[%s1 + $0x2d8] sm:$0xff]
    %v302 = vld [vmem:[%s1 + $0x2e0] sm:$0xff]
    %v303 = vld [vmem:[%s1 + $0x2e8] sm:$0xff]
    %v304 = vld [vmem:[%s1 + $0x2f0] sm:$0xff]
    %v305 = vld [vmem:[%s1 + $0x2f8] sm:$0xff]
    %v306 = vld [vmem:[%s1 + $0x300] sm:$0xff]
    %v307 = vld [vmem:[%s1 + $0x308] sm:$0xff]
    %v308 = vld [vmem:[%s1 + $0x310] sm:$0xff]
    %v309 = vld [vmem:[%s1 + $0x318] sm:$0xff]
    %v310 = vld [vmem:[%s1 + $0x320] sm:$0xff]
    %v311 = vld [vmem:[%s1 + $0x328] sm:$0xff]
    %v312 = vld [vmem:[%s1 + $0x330] sm:$0xff]
    %v313 = vld [vmem:[%s1 + $0x338] sm:$0xff]
    %v314 = vld [vmem:[%s1 + $0x340] sm:$0xff]
    %v315 = vld [vmem:[%s1 + $0x348] sm:$0xff]
    %v316 = vld [vmem:[%s1 + $0x350] sm:$0xff]
    %v317 = vld [vmem:[%s1 + $0x358] sm:$0xff]
    %v318 = vld [vmem:[%s1 + $0x360] sm:$0xff]
    %v319 = vld [vmem:[%s1 + $0x368] sm:$0xff]
    %v320 = vld [vmem:[%s1 + $0x370] sm:$0xff]
    %v321 = vld [vmem:[%s1 + $0x378] sm:$0xff]
    %v322 = vld [vmem:[%s1 + $0x380] sm:$0xff]
    %v323 = vld [vmem:[%s1 + $0x388] sm:$0xff]
    %v324 = vld [vmem:[%s1 + $0x390] sm:$0xff]
    %v325 = vld [vmem:[%s1 + $0x398] sm:$0xff]
    %v326 = vld [vmem:[%s1 + $0x3a0] sm:$0xff]
    %v327 = vld [vmem:[%s1 + $0x3a8] sm:$0xff]
    %v328 = vld [vmem:[%s1 + $0x3b0] sm:$0xff]
    %v329 = vld [vmem:[%s1 + $0x3b8] sm:$0xff]
    %v330 = vld [vmem:[%s1 + $0x3c0] sm:$0xff]
    %v331 = vld [vmem:[%s1 + $0x3c8] sm:$0xff]
    %v332 = vld [vmem:[%s1 + $0x3d0] sm:$0xff]
    %v333 = vld [vmem:[%s1 + $0x3d8] sm:$0xff]
    %v334 = vld [vmem:[%s1 + $0x3e0] sm:$0xff]
    %v335 = vld [vmem:[%s1 + $0x3e8] sm:$0xff]
    %v336 = vld [vmem:[%s1 + $0x3f0] sm:$0xff]
    %v337 = vld [vmem:[%s1 + $0x3f8] sm:$0xff]
    %v338 = vld [vmem:[%s2] sm:$0xf]
    %v340 = vlaneseq
    %v341 = vshrl.u32 %v340, 7
    %v342 = vsub.s32 0, %v341
    %v343 = vrot.slane %v338, %v342
    %v344 = vlaneseq
    %v345 = vshrl.u32 %v344, 7
    %v346 = vsub.s32 1, %v345
    %v347 = vrot.slane %v338, %v346
    %v348 = vlaneseq
    %v349 = vshrl.u32 %v348, 7
    %v350 = vsub.s32 2, %v349
    %v351 = vrot.slane %v338, %v350
    %v352 = vlaneseq
    %v353 = vshrl.u32 %v352, 7
    %v354 = vsub.s32 3, %v353
    %v355 = vrot.slane %v338, %v354
    %v488 = vunpack.c.l.b16 %v82
    %v489 = vunpack.c.h.b16 %v82
    %v490 = vunpack.c.l.b16 %v83
    %v491 = vunpack.c.h.b16 %v83
    %v492 = vunpack.c.l.b16 %v84
    %v493 = vunpack.c.h.b16 %v84
    %v494 = vunpack.c.l.b16 %v85
    %v495 = vunpack.c.h.b16 %v85
    %v496 = vunpack.c.l.b16 %v86
    %v497 = vunpack.c.h.b16 %v86
    %v498 = vunpack.c.l.b16 %v87
    %v499 = vunpack.c.h.b16 %v87
    %v500 = vunpack.c.l.b16 %v88
    %v501 = vunpack.c.h.b16 %v88
    %v502 = vunpack.c.l.b16 %v89
    %v503 = vunpack.c.h.b16 %v89
    %v504 = vunpack.c.l.b16 %v90
    %v505 = vunpack.c.h.b16 %v90
    %v506 = vunpack.c.l.b16 %v91
    %v507 = vunpack.c.h.b16 %v91
    %v508 = vunpack.c.l.b16 %v92
    %v509 = vunpack.c.h.b16 %v92
    %v510 = vunpack.c.l.b16 %v93
    %v511 = vunpack.c.h.b16 %v93
    %v512 = vunpack.c.l.b16 %v94
    %v513 = vunpack.c.h.b16 %v94
    %v514 = vunpack.c.l.b16 %v95
    %v515 = vunpack.c.h.b16 %v95
    %v516 = vunpack.c.l.b16 %v96
    %v517 = vunpack.c.h.b16 %v96
    %v518 = vunpack.c.l.b16 %v97
    %v519 = vunpack.c.h.b16 %v97
    %v520 = vunpack.c.l.b16 %v98
    %v521 = vunpack.c.h.b16 %v98
    %v522 = vunpack.c.l.b16 %v99
    %v523 = vunpack.c.h.b16 %v99
    %v524 = vunpack.c.l.b16 %v100
    %v525 = vunpack.c.h.b16 %v100
    %v526 = vunpack.c.l.b16 %v101
    %v527 = vunpack.c.h.b16 %v101
    %v528 = vunpack.c.l.b16 %v102
    %v529 = vunpack.c.h.b16 %v102
    %v530 = vunpack.c.l.b16 %v103
    %v531 = vunpack.c.h.b16 %v103
    %v532 = vunpack.c.l.b16 %v104
    %v533 = vunpack.c.h.b16 %v104
    %v534 = vunpack.c.l.b16 %v105
    %v535 = vunpack.c.h.b16 %v105
    %v536 = vunpack.c.l.b16 %v106
    %v537 = vunpack.c.h.b16 %v106
    %v538 = vunpack.c.l.b16 %v107
    %v539 = vunpack.c.h.b16 %v107
    %v540 = vunpack.c.l.b16 %v108
    %v541 = vunpack.c.h.b16 %v108
    %v542 = vunpack.c.l.b16 %v109
    %v543 = vunpack.c.h.b16 %v109
    %v544 = vunpack.c.l.b16 %v110
    %v545 = vunpack.c.h.b16 %v110
    %v546 = vunpack.c.l.b16 %v111
    %v547 = vunpack.c.h.b16 %v111
    %v548 = vunpack.c.l.b16 %v112
    %v549 = vunpack.c.h.b16 %v112
    %v550 = vunpack.c.l.b16 %v113
    %v551 = vunpack.c.h.b16 %v113
    %v552 = vunpack.c.l.b16 %v114
    %v553 = vunpack.c.h.b16 %v114
    %v554 = vunpack.c.l.b16 %v115
    %v555 = vunpack.c.h.b16 %v115
    %v556 = vunpack.c.l.b16 %v116
    %v557 = vunpack.c.h.b16 %v116
    %v558 = vunpack.c.l.b16 %v117
    %v559 = vunpack.c.h.b16 %v117
    %v560 = vunpack.c.l.b16 %v118
    %v561 = vunpack.c.h.b16 %v118
    %v562 = vunpack.c.l.b16 %v119
    %v563 = vunpack.c.h.b16 %v119
    %v564 = vunpack.c.l.b16 %v120
    %v565 = vunpack.c.h.b16 %v120
    %v566 = vunpack.c.l.b16 %v121
    %v567 = vunpack.c.h.b16 %v121
    %v568 = vunpack.c.l.b16 %v122
    %v569 = vunpack.c.h.b16 %v122
    %v570 = vunpack.c.l.b16 %v123
    %v571 = vunpack.c.h.b16 %v123
    %v572 = vunpack.c.l.b16 %v124
    %v573 = vunpack.c.h.b16 %v124
    %v574 = vunpack.c.l.b16 %v125
    %v575 = vunpack.c.h.b16 %v125
    %v576 = vunpack.c.l.b16 %v126
    %v577 = vunpack.c.h.b16 %v126
    %v578 = vunpack.c.l.b16 %v127
    %v579 = vunpack.c.h.b16 %v127
    %v580 = vunpack.c.l.b16 %v128
    %v581 = vunpack.c.h.b16 %v128
    %v582 = vunpack.c.l.b16 %v129
    %v583 = vunpack.c.h.b16 %v129
    %v584 = vunpack.c.l.b16 %v130
    %v585 = vunpack.c.h.b16 %v130
    %v586 = vunpack.c.l.b16 %v131
    %v587 = vunpack.c.h.b16 %v131
    %v588 = vunpack.c.l.b16 %v132
    %v589 = vunpack.c.h.b16 %v132
    %v590 = vunpack.c.l.b16 %v133
    %v591 = vunpack.c.h.b16 %v133
    %v592 = vunpack.c.l.b16 %v134
    %v593 = vunpack.c.h.b16 %v134
    %v594 = vunpack.c.l.b16 %v135
    %v595 = vunpack.c.h.b16 %v135
    %v596 = vunpack.c.l.b16 %v136
    %v597 = vunpack.c.h.b16 %v136
    %v598 = vunpack.c.l.b16 %v137
    %v599 = vunpack.c.h.b16 %v137
    %v600 = vunpack.c.l.b16 %v138
    %v601 = vunpack.c.h.b16 %v138
    %v602 = vunpack.c.l.b16 %v139
    %v603 = vunpack.c.h.b16 %v139
    %v604 = vunpack.c.l.b16 %v140
    %v605 = vunpack.c.h.b16 %v140
    %v606 = vunpack.c.l.b16 %v141
    %v607 = vunpack.c.h.b16 %v141
    %v608 = vunpack.c.l.b16 %v142
    %v609 = vunpack.c.h.b16 %v142
    %v610 = vunpack.c.l.b16 %v143
    %v611 = vunpack.c.h.b16 %v143
    %v612 = vunpack.c.l.b16 %v144
    %v613 = vunpack.c.h.b16 %v144
    %v614 = vunpack.c.l.b16 %v145
    %v615 = vunpack.c.h.b16 %v145
    %v616 = vunpack.c.l.b16 %v146
    %v617 = vunpack.c.h.b16 %v146
    %v618 = vunpack.c.l.b16 %v147
    %v619 = vunpack.c.h.b16 %v147
    %v620 = vunpack.c.l.b16 %v148
    %v621 = vunpack.c.h.b16 %v148
    %v622 = vunpack.c.l.b16 %v149
    %v623 = vunpack.c.h.b16 %v149
    %v624 = vunpack.c.l.b16 %v150
    %v625 = vunpack.c.h.b16 %v150
    %v626 = vunpack.c.l.b16 %v151
    %v627 = vunpack.c.h.b16 %v151
    %v628 = vunpack.c.l.b16 %v152
    %v629 = vunpack.c.h.b16 %v152
    %v630 = vunpack.c.l.b16 %v153
    %v631 = vunpack.c.h.b16 %v153
    %v632 = vunpack.c.l.b16 %v154
    %v633 = vunpack.c.h.b16 %v154
    %v634 = vunpack.c.l.b16 %v155
    %v635 = vunpack.c.h.b16 %v155
    %v636 = vunpack.c.l.b16 %v156
    %v637 = vunpack.c.h.b16 %v156
    %v638 = vunpack.c.l.b16 %v157
    %v639 = vunpack.c.h.b16 %v157
    %v640 = vunpack.c.l.b16 %v158
    %v641 = vunpack.c.h.b16 %v158
    %v642 = vunpack.c.l.b16 %v159
    %v643 = vunpack.c.h.b16 %v159
    %v644 = vunpack.c.l.b16 %v160
    %v645 = vunpack.c.h.b16 %v160
    %v646 = vunpack.c.l.b16 %v161
    %v647 = vunpack.c.h.b16 %v161
    %v648 = vunpack.c.l.b16 %v162
    %v649 = vunpack.c.h.b16 %v162
    %v650 = vunpack.c.l.b16 %v163
    %v651 = vunpack.c.h.b16 %v163
    %v652 = vunpack.c.l.b16 %v164
    %v653 = vunpack.c.h.b16 %v164
    %v654 = vunpack.c.l.b16 %v165
    %v655 = vunpack.c.h.b16 %v165
    %v656 = vunpack.c.l.b16 %v166
    %v657 = vunpack.c.h.b16 %v166
    %v658 = vunpack.c.l.b16 %v167
    %v659 = vunpack.c.h.b16 %v167
    %v660 = vunpack.c.l.b16 %v168
    %v661 = vunpack.c.h.b16 %v168
    %v662 = vunpack.c.l.b16 %v169
    %v663 = vunpack.c.h.b16 %v169
    %v664 = vunpack.c.l.b16 %v170
    %v665 = vunpack.c.h.b16 %v170
    %v666 = vunpack.c.l.b16 %v171
    %v667 = vunpack.c.h.b16 %v171
    %v668 = vunpack.c.l.b16 %v172
    %v669 = vunpack.c.h.b16 %v172
    %v670 = vunpack.c.l.b16 %v173
    %v671 = vunpack.c.h.b16 %v173
    %v672 = vunpack.c.l.b16 %v174
    %v673 = vunpack.c.h.b16 %v174
    %v674 = vunpack.c.l.b16 %v175
    %v675 = vunpack.c.h.b16 %v175
    %v676 = vunpack.c.l.b16 %v176
    %v677 = vunpack.c.h.b16 %v176
    %v678 = vunpack.c.l.b16 %v177
    %v679 = vunpack.c.h.b16 %v177
    %v680 = vunpack.c.l.b16 %v178
    %v681 = vunpack.c.h.b16 %v178
    %v682 = vunpack.c.l.b16 %v179
    %v683 = vunpack.c.h.b16 %v179
    %v684 = vunpack.c.l.b16 %v180
    %v685 = vunpack.c.h.b16 %v180
    %v686 = vunpack.c.l.b16 %v181
    %v687 = vunpack.c.h.b16 %v181
    %v688 = vunpack.c.l.b16 %v182
    %v689 = vunpack.c.h.b16 %v182
    %v690 = vunpack.c.l.b16 %v183
    %v691 = vunpack.c.h.b16 %v183
    %v692 = vunpack.c.l.b16 %v184
    %v693 = vunpack.c.h.b16 %v184
    %v694 = vunpack.c.l.b16 %v185
    %v695 = vunpack.c.h.b16 %v185
    %v696 = vunpack.c.l.b16 %v186
    %v697 = vunpack.c.h.b16 %v186
    %v698 = vunpack.c.l.b16 %v187
    %v699 = vunpack.c.h.b16 %v187
    %v700 = vunpack.c.l.b16 %v188
    %v701 = vunpack.c.h.b16 %v188
    %v702 = vunpack.c.l.b16 %v189
    %v703 = vunpack.c.h.b16 %v189
    %v704 = vunpack.c.l.b16 %v190
    %v705 = vunpack.c.h.b16 %v190
    %v706 = vunpack.c.l.b16 %v191
    %v707 = vunpack.c.h.b16 %v191
    %v708 = vunpack.c.l.b16 %v192
    %v709 = vunpack.c.h.b16 %v192
    %v710 = vunpack.c.l.b16 %v193
    %v711 = vunpack.c.h.b16 %v193
    %v712 = vunpack.c.l.b16 %v194
    %v713 = vunpack.c.h.b16 %v194
    %v714 = vunpack.c.l.b16 %v195
    %v715 = vunpack.c.h.b16 %v195
    %v716 = vunpack.c.l.b16 %v196
    %v717 = vunpack.c.h.b16 %v196
    %v718 = vunpack.c.l.b16 %v197
    %v719 = vunpack.c.h.b16 %v197
    %v720 = vunpack.c.l.b16 %v198
    %v721 = vunpack.c.h.b16 %v198
    %v722 = vunpack.c.l.b16 %v199
    %v723 = vunpack.c.h.b16 %v199
    %v724 = vunpack.c.l.b16 %v200
    %v725 = vunpack.c.h.b16 %v200
    %v726 = vunpack.c.l.b16 %v201
    %v727 = vunpack.c.h.b16 %v201
    %v728 = vunpack.c.l.b16 %v202
    %v729 = vunpack.c.h.b16 %v202
    %v730 = vunpack.c.l.b16 %v203
    %v731 = vunpack.c.h.b16 %v203
    %v732 = vunpack.c.l.b16 %v204
    %v733 = vunpack.c.h.b16 %v204
    %v734 = vunpack.c.l.b16 %v205
    %v735 = vunpack.c.h.b16 %v205
    %v736 = vunpack.c.l.b16 %v206
    %v737 = vunpack.c.h.b16 %v206
    %v738 = vunpack.c.l.b16 %v207
    %v739 = vunpack.c.h.b16 %v207
    %v740 = vunpack.c.l.b16 %v208
    %v741 = vunpack.c.h.b16 %v208
    %v742 = vunpack.c.l.b16 %v209
    %v743 = vunpack.c.h.b16 %v209
    %v744 = vpack.c.b16 %v492, %v488
    %v745 = vpack.c.b16 %v493, %v489
    %v746 = vpack.c.b16 %v494, %v490
    %v747 = vpack.c.b16 %v495, %v491
    %v748 = vpack.c.b16 %v500, %v496
    %v749 = vpack.c.b16 %v501, %v497
    %v750 = vpack.c.b16 %v502, %v498
    %v751 = vpack.c.b16 %v503, %v499
    %v752 = vpack.c.b16 %v508, %v504
    %v753 = vpack.c.b16 %v509, %v505
    %v754 = vpack.c.b16 %v510, %v506
    %v755 = vpack.c.b16 %v511, %v507
    %v756 = vpack.c.b16 %v516, %v512
    %v757 = vpack.c.b16 %v517, %v513
    %v758 = vpack.c.b16 %v518, %v514
    %v759 = vpack.c.b16 %v519, %v515
    %v760 = vpack.c.b16 %v524, %v520
    %v761 = vpack.c.b16 %v525, %v521
    %v762 = vpack.c.b16 %v526, %v522
    %v763 = vpack.c.b16 %v527, %v523
    %v764 = vpack.c.b16 %v532, %v528
    %v765 = vpack.c.b16 %v533, %v529
    %v766 = vpack.c.b16 %v534, %v530
    %v767 = vpack.c.b16 %v535, %v531
    %v768 = vpack.c.b16 %v540, %v536
    %v769 = vpack.c.b16 %v541, %v537
    %v770 = vpack.c.b16 %v542, %v538
    %v771 = vpack.c.b16 %v543, %v539
    %v772 = vpack.c.b16 %v548, %v544
    %v773 = vpack.c.b16 %v549, %v545
    %v774 = vpack.c.b16 %v550, %v546
    %v775 = vpack.c.b16 %v551, %v547
    %v776 = vpack.c.b16 %v556, %v552
    %v777 = vpack.c.b16 %v557, %v553
    %v778 = vpack.c.b16 %v558, %v554
    %v779 = vpack.c.b16 %v559, %v555
    %v780 = vpack.c.b16 %v564, %v560
    %v781 = vpack.c.b16 %v565, %v561
    %v782 = vpack.c.b16 %v566, %v562
    %v783 = vpack.c.b16 %v567, %v563
    %v784 = vpack.c.b16 %v572, %v568
    %v785 = vpack.c.b16 %v573, %v569
    %v786 = vpack.c.b16 %v574, %v570
    %v787 = vpack.c.b16 %v575, %v571
    %v788 = vpack.c.b16 %v580, %v576
    %v789 = vpack.c.b16 %v581, %v577
    %v790 = vpack.c.b16 %v582, %v578
    %v791 = vpack.c.b16 %v583, %v579
    %v792 = vpack.c.b16 %v588, %v584
    %v793 = vpack.c.b16 %v589, %v585
    %v794 = vpack.c.b16 %v590, %v586
    %v795 = vpack.c.b16 %v591, %v587
    %v796 = vpack.c.b16 %v596, %v592
    %v797 = vpack.c.b16 %v597, %v593
    %v798 = vpack.c.b16 %v598, %v594
    %v799 = vpack.c.b16 %v599, %v595
    %v800 = vpack.c.b16 %v604, %v600
    %v801 = vpack.c.b16 %v605, %v601
    %v802 = vpack.c.b16 %v606, %v602
    %v803 = vpack.c.b16 %v607, %v603
    %v804 = vpack.c.b16 %v612, %v608
    %v805 = vpack.c.b16 %v613, %v609
    %v806 = vpack.c.b16 %v614, %v610
    %v807 = vpack.c.b16 %v615, %v611
    %v808 = vpack.c.b16 %v620, %v616
    %v809 = vpack.c.b16 %v621, %v617
    %v810 = vpack.c.b16 %v622, %v618
    %v811 = vpack.c.b16 %v623, %v619
    %v812 = vpack.c.b16 %v628, %v624
    %v813 = vpack.c.b16 %v629, %v625
    %v814 = vpack.c.b16 %v630, %v626
    %v815 = vpack.c.b16 %v631, %v627
    %v816 = vpack.c.b16 %v636, %v632
    %v817 = vpack.c.b16 %v637, %v633
    %v818 = vpack.c.b16 %v638, %v634
    %v819 = vpack.c.b16 %v639, %v635
    %v820 = vpack.c.b16 %v644, %v640
    %v821 = vpack.c.b16 %v645, %v641
    %v822 = vpack.c.b16 %v646, %v642
    %v823 = vpack.c.b16 %v647, %v643
    %v824 = vpack.c.b16 %v652, %v648
    %v825 = vpack.c.b16 %v653, %v649
    %v826 = vpack.c.b16 %v654, %v650
    %v827 = vpack.c.b16 %v655, %v651
    %v828 = vpack.c.b16 %v660, %v656
    %v829 = vpack.c.b16 %v661, %v657
    %v830 = vpack.c.b16 %v662, %v658
    %v831 = vpack.c.b16 %v663, %v659
    %v832 = vpack.c.b16 %v668, %v664
    %v833 = vpack.c.b16 %v669, %v665
    %v834 = vpack.c.b16 %v670, %v666
    %v835 = vpack.c.b16 %v671, %v667
    %v836 = vpack.c.b16 %v676, %v672
    %v837 = vpack.c.b16 %v677, %v673
    %v838 = vpack.c.b16 %v678, %v674
    %v839 = vpack.c.b16 %v679, %v675
    %v840 = vpack.c.b16 %v684, %v680
    %v841 = vpack.c.b16 %v685, %v681
    %v842 = vpack.c.b16 %v686, %v682
    %v843 = vpack.c.b16 %v687, %v683
    %v844 = vpack.c.b16 %v692, %v688
    %v845 = vpack.c.b16 %v693, %v689
    %v846 = vpack.c.b16 %v694, %v690
    %v847 = vpack.c.b16 %v695, %v691
    %v848 = vpack.c.b16 %v700, %v696
    %v849 = vpack.c.b16 %v701, %v697
    %v850 = vpack.c.b16 %v702, %v698
    %v851 = vpack.c.b16 %v703, %v699
    %v852 = vpack.c.b16 %v708, %v704
    %v853 = vpack.c.b16 %v709, %v705
    %v854 = vpack.c.b16 %v710, %v706
    %v855 = vpack.c.b16 %v711, %v707
    %v856 = vpack.c.b16 %v716, %v712
    %v857 = vpack.c.b16 %v717, %v713
    %v858 = vpack.c.b16 %v718, %v714
    %v859 = vpack.c.b16 %v719, %v715
    %v860 = vpack.c.b16 %v724, %v720
    %v861 = vpack.c.b16 %v725, %v721
    %v862 = vpack.c.b16 %v726, %v722
    %v863 = vpack.c.b16 %v727, %v723
    %v864 = vpack.c.b16 %v732, %v728
    %v865 = vpack.c.b16 %v733, %v729
    %v866 = vpack.c.b16 %v734, %v730
    %v867 = vpack.c.b16 %v735, %v731
    %v868 = vpack.c.b16 %v740, %v736
    %v869 = vpack.c.b16 %v741, %v737
    %v870 = vpack.c.b16 %v742, %v738
    %v871 = vpack.c.b16 %v743, %v739
    %v1128 = vunpack.c.l.b16 %v210
    %v1129 = vunpack.c.h.b16 %v210
    %v1130 = vunpack.c.l.b16 %v211
    %v1131 = vunpack.c.h.b16 %v211
    %v1132 = vunpack.c.l.b16 %v212
    %v1133 = vunpack.c.h.b16 %v212
    %v1134 = vunpack.c.l.b16 %v213
    %v1135 = vunpack.c.h.b16 %v213
    %v1136 = vunpack.c.l.b16 %v214
    %v1137 = vunpack.c.h.b16 %v214
    %v1138 = vunpack.c.l.b16 %v215
    %v1139 = vunpack.c.h.b16 %v215
    %v1140 = vunpack.c.l.b16 %v216
    %v1141 = vunpack.c.h.b16 %v216
    %v1142 = vunpack.c.l.b16 %v217
    %v1143 = vunpack.c.h.b16 %v217
    %v1144 = vunpack.c.l.b16 %v218
    %v1145 = vunpack.c.h.b16 %v218
    %v1146 = vunpack.c.l.b16 %v219
    %v1147 = vunpack.c.h.b16 %v219
    %v1148 = vunpack.c.l.b16 %v220
    %v1149 = vunpack.c.h.b16 %v220
    %v1150 = vunpack.c.l.b16 %v221
    %v1151 = vunpack.c.h.b16 %v221
    %v1152 = vunpack.c.l.b16 %v222
    %v1153 = vunpack.c.h.b16 %v222
    %v1154 = vunpack.c.l.b16 %v223
    %v1155 = vunpack.c.h.b16 %v223
    %v1156 = vunpack.c.l.b16 %v224
    %v1157 = vunpack.c.h.b16 %v224
    %v1158 = vunpack.c.l.b16 %v225
    %v1159 = vunpack.c.h.b16 %v225
    %v1160 = vunpack.c.l.b16 %v226
    %v1161 = vunpack.c.h.b16 %v226
    %v1162 = vunpack.c.l.b16 %v227
    %v1163 = vunpack.c.h.b16 %v227
    %v1164 = vunpack.c.l.b16 %v228
    %v1165 = vunpack.c.h.b16 %v228
    %v1166 = vunpack.c.l.b16 %v229
    %v1167 = vunpack.c.h.b16 %v229
    %v1168 = vunpack.c.l.b16 %v230
    %v1169 = vunpack.c.h.b16 %v230
    %v1170 = vunpack.c.l.b16 %v231
    %v1171 = vunpack.c.h.b16 %v231
    %v1172 = vunpack.c.l.b16 %v232
    %v1173 = vunpack.c.h.b16 %v232
    %v1174 = vunpack.c.l.b16 %v233
    %v1175 = vunpack.c.h.b16 %v233
    %v1176 = vunpack.c.l.b16 %v234
    %v1177 = vunpack.c.h.b16 %v234
    %v1178 = vunpack.c.l.b16 %v235
    %v1179 = vunpack.c.h.b16 %v235
    %v1180 = vunpack.c.l.b16 %v236
    %v1181 = vunpack.c.h.b16 %v236
    %v1182 = vunpack.c.l.b16 %v237
    %v1183 = vunpack.c.h.b16 %v237
    %v1184 = vunpack.c.l.b16 %v238
    %v1185 = vunpack.c.h.b16 %v238
    %v1186 = vunpack.c.l.b16 %v239
    %v1187 = vunpack.c.h.b16 %v239
    %v1188 = vunpack.c.l.b16 %v240
    %v1189 = vunpack.c.h.b16 %v240
    %v1190 = vunpack.c.l.b16 %v241
    %v1191 = vunpack.c.h.b16 %v241
    %v1192 = vunpack.c.l.b16 %v242
    %v1193 = vunpack.c.h.b16 %v242
    %v1194 = vunpack.c.l.b16 %v243
    %v1195 = vunpack.c.h.b16 %v243
    %v1196 = vunpack.c.l.b16 %v244
    %v1197 = vunpack.c.h.b16 %v244
    %v1198 = vunpack.c.l.b16 %v245
    %v1199 = vunpack.c.h.b16 %v245
    %v1200 = vunpack.c.l.b16 %v246
    %v1201 = vunpack.c.h.b16 %v246
    %v1202 = vunpack.c.l.b16 %v247
    %v1203 = vunpack.c.h.b16 %v247
    %v1204 = vunpack.c.l.b16 %v248
    %v1205 = vunpack.c.h.b16 %v248
    %v1206 = vunpack.c.l.b16 %v249
    %v1207 = vunpack.c.h.b16 %v249
    %v1208 = vunpack.c.l.b16 %v250
    %v1209 = vunpack.c.h.b16 %v250
    %v1210 = vunpack.c.l.b16 %v251
    %v1211 = vunpack.c.h.b16 %v251
    %v1212 = vunpack.c.l.b16 %v252
    %v1213 = vunpack.c.h.b16 %v252
    %v1214 = vunpack.c.l.b16 %v253
    %v1215 = vunpack.c.h.b16 %v253
    %v1216 = vunpack.c.l.b16 %v254
    %v1217 = vunpack.c.h.b16 %v254
    %v1218 = vunpack.c.l.b16 %v255
    %v1219 = vunpack.c.h.b16 %v255
    %v1220 = vunpack.c.l.b16 %v256
    %v1221 = vunpack.c.h.b16 %v256
    %v1222 = vunpack.c.l.b16 %v257
    %v1223 = vunpack.c.h.b16 %v257
    %v1224 = vunpack.c.l.b16 %v258
    %v1225 = vunpack.c.h.b16 %v258
    %v1226 = vunpack.c.l.b16 %v259
    %v1227 = vunpack.c.h.b16 %v259
    %v1228 = vunpack.c.l.b16 %v260
    %v1229 = vunpack.c.h.b16 %v260
    %v1230 = vunpack.c.l.b16 %v261
    %v1231 = vunpack.c.h.b16 %v261
    %v1232 = vunpack.c.l.b16 %v262
    %v1233 = vunpack.c.h.b16 %v262
    %v1234 = vunpack.c.l.b16 %v263
    %v1235 = vunpack.c.h.b16 %v263
    %v1236 = vunpack.c.l.b16 %v264
    %v1237 = vunpack.c.h.b16 %v264
    %v1238 = vunpack.c.l.b16 %v265
    %v1239 = vunpack.c.h.b16 %v265
    %v1240 = vunpack.c.l.b16 %v266
    %v1241 = vunpack.c.h.b16 %v266
    %v1242 = vunpack.c.l.b16 %v267
    %v1243 = vunpack.c.h.b16 %v267
    %v1244 = vunpack.c.l.b16 %v268
    %v1245 = vunpack.c.h.b16 %v268
    %v1246 = vunpack.c.l.b16 %v269
    %v1247 = vunpack.c.h.b16 %v269
    %v1248 = vunpack.c.l.b16 %v270
    %v1249 = vunpack.c.h.b16 %v270
    %v1250 = vunpack.c.l.b16 %v271
    %v1251 = vunpack.c.h.b16 %v271
    %v1252 = vunpack.c.l.b16 %v272
    %v1253 = vunpack.c.h.b16 %v272
    %v1254 = vunpack.c.l.b16 %v273
    %v1255 = vunpack.c.h.b16 %v273
    %v1256 = vunpack.c.l.b16 %v274
    %v1257 = vunpack.c.h.b16 %v274
    %v1258 = vunpack.c.l.b16 %v275
    %v1259 = vunpack.c.h.b16 %v275
    %v1260 = vunpack.c.l.b16 %v276
    %v1261 = vunpack.c.h.b16 %v276
    %v1262 = vunpack.c.l.b16 %v277
    %v1263 = vunpack.c.h.b16 %v277
    %v1264 = vunpack.c.l.b16 %v278
    %v1265 = vunpack.c.h.b16 %v278
    %v1266 = vunpack.c.l.b16 %v279
    %v1267 = vunpack.c.h.b16 %v279
    %v1268 = vunpack.c.l.b16 %v280
    %v1269 = vunpack.c.h.b16 %v280
    %v1270 = vunpack.c.l.b16 %v281
    %v1271 = vunpack.c.h.b16 %v281
    %v1272 = vunpack.c.l.b16 %v282
    %v1273 = vunpack.c.h.b16 %v282
    %v1274 = vunpack.c.l.b16 %v283
    %v1275 = vunpack.c.h.b16 %v283
    %v1276 = vunpack.c.l.b16 %v284
    %v1277 = vunpack.c.h.b16 %v284
    %v1278 = vunpack.c.l.b16 %v285
    %v1279 = vunpack.c.h.b16 %v285
    %v1280 = vunpack.c.l.b16 %v286
    %v1281 = vunpack.c.h.b16 %v286
    %v1282 = vunpack.c.l.b16 %v287
    %v1283 = vunpack.c.h.b16 %v287
    %v1284 = vunpack.c.l.b16 %v288
    %v1285 = vunpack.c.h.b16 %v288
    %v1286 = vunpack.c.l.b16 %v289
    %v1287 = vunpack.c.h.b16 %v289
    %v1288 = vunpack.c.l.b16 %v290
    %v1289 = vunpack.c.h.b16 %v290
    %v1290 = vunpack.c.l.b16 %v291
    %v1291 = vunpack.c.h.b16 %v291
    %v1292 = vunpack.c.l.b16 %v292
    %v1293 = vunpack.c.h.b16 %v292
    %v1294 = vunpack.c.l.b16 %v293
    %v1295 = vunpack.c.h.b16 %v293
    %v1296 = vunpack.c.l.b16 %v294
    %v1297 = vunpack.c.h.b16 %v294
    %v1298 = vunpack.c.l.b16 %v295
    %v1299 = vunpack.c.h.b16 %v295
    %v1300 = vunpack.c.l.b16 %v296
    %v1301 = vunpack.c.h.b16 %v296
    %v1302 = vunpack.c.l.b16 %v297
    %v1303 = vunpack.c.h.b16 %v297
    %v1304 = vunpack.c.l.b16 %v298
    %v1305 = vunpack.c.h.b16 %v298
    %v1306 = vunpack.c.l.b16 %v299
    %v1307 = vunpack.c.h.b16 %v299
    %v1308 = vunpack.c.l.b16 %v300
    %v1309 = vunpack.c.h.b16 %v300
    %v1310 = vunpack.c.l.b16 %v301
    %v1311 = vunpack.c.h.b16 %v301
    %v1312 = vunpack.c.l.b16 %v302
    %v1313 = vunpack.c.h.b16 %v302
    %v1314 = vunpack.c.l.b16 %v303
    %v1315 = vunpack.c.h.b16 %v303
    %v1316 = vunpack.c.l.b16 %v304
    %v1317 = vunpack.c.h.b16 %v304
    %v1318 = vunpack.c.l.b16 %v305
    %v1319 = vunpack.c.h.b16 %v305
    %v1320 = vunpack.c.l.b16 %v306
    %v1321 = vunpack.c.h.b16 %v306
    %v1322 = vunpack.c.l.b16 %v307
    %v1323 = vunpack.c.h.b16 %v307
    %v1324 = vunpack.c.l.b16 %v308
    %v1325 = vunpack.c.h.b16 %v308
    %v1326 = vunpack.c.l.b16 %v309
    %v1327 = vunpack.c.h.b16 %v309
    %v1328 = vunpack.c.l.b16 %v310
    %v1329 = vunpack.c.h.b16 %v310
    %v1330 = vunpack.c.l.b16 %v311
    %v1331 = vunpack.c.h.b16 %v311
    %v1332 = vunpack.c.l.b16 %v312
    %v1333 = vunpack.c.h.b16 %v312
    %v1334 = vunpack.c.l.b16 %v313
    %v1335 = vunpack.c.h.b16 %v313
    %v1336 = vunpack.c.l.b16 %v314
    %v1337 = vunpack.c.h.b16 %v314
    %v1338 = vunpack.c.l.b16 %v315
    %v1339 = vunpack.c.h.b16 %v315
    %v1340 = vunpack.c.l.b16 %v316
    %v1341 = vunpack.c.h.b16 %v316
    %v1342 = vunpack.c.l.b16 %v317
    %v1343 = vunpack.c.h.b16 %v317
    %v1344 = vunpack.c.l.b16 %v318
    %v1345 = vunpack.c.h.b16 %v318
    %v1346 = vunpack.c.l.b16 %v319
    %v1347 = vunpack.c.h.b16 %v319
    %v1348 = vunpack.c.l.b16 %v320
    %v1349 = vunpack.c.h.b16 %v320
    %v1350 = vunpack.c.l.b16 %v321
    %v1351 = vunpack.c.h.b16 %v321
    %v1352 = vunpack.c.l.b16 %v322
    %v1353 = vunpack.c.h.b16 %v322
    %v1354 = vunpack.c.l.b16 %v323
    %v1355 = vunpack.c.h.b16 %v323
    %v1356 = vunpack.c.l.b16 %v324
    %v1357 = vunpack.c.h.b16 %v324
    %v1358 = vunpack.c.l.b16 %v325
    %v1359 = vunpack.c.h.b16 %v325
    %v1360 = vunpack.c.l.b16 %v326
    %v1361 = vunpack.c.h.b16 %v326
    %v1362 = vunpack.c.l.b16 %v327
    %v1363 = vunpack.c.h.b16 %v327
    %v1364 = vunpack.c.l.b16 %v328
    %v1365 = vunpack.c.h.b16 %v328
    %v1366 = vunpack.c.l.b16 %v329
    %v1367 = vunpack.c.h.b16 %v329
    %v1368 = vunpack.c.l.b16 %v330
    %v1369 = vunpack.c.h.b16 %v330
    %v1370 = vunpack.c.l.b16 %v331
    %v1371 = vunpack.c.h.b16 %v331
    %v1372 = vunpack.c.l.b16 %v332
    %v1373 = vunpack.c.h.b16 %v332
    %v1374 = vunpack.c.l.b16 %v333
    %v1375 = vunpack.c.h.b16 %v333
    %v1376 = vunpack.c.l.b16 %v334
    %v1377 = vunpack.c.h.b16 %v334
    %v1378 = vunpack.c.l.b16 %v335
    %v1379 = vunpack.c.h.b16 %v335
    %v1380 = vunpack.c.l.b16 %v336
    %v1381 = vunpack.c.h.b16 %v336
    %v1382 = vunpack.c.l.b16 %v337
    %v1383 = vunpack.c.h.b16 %v337
    %v1384 = vpack.c.b16 %v1132, %v1128
    %v1385 = vpack.c.b16 %v1133, %v1129
    %v1386 = vpack.c.b16 %v1134, %v1130
    %v1387 = vpack.c.b16 %v1135, %v1131
    %v1388 = vpack.c.b16 %v1140, %v1136
    %v1389 = vpack.c.b16 %v1141, %v1137
    %v1390 = vpack.c.b16 %v1142, %v1138
    %v1391 = vpack.c.b16 %v1143, %v1139
    %v1392 = vpack.c.b16 %v1148, %v1144
    %v1393 = vpack.c.b16 %v1149, %v1145
    %v1394 = vpack.c.b16 %v1150, %v1146
    %v1395 = vpack.c.b16 %v1151, %v1147
    %v1396 = vpack.c.b16 %v1156, %v1152
    %v1397 = vpack.c.b16 %v1157, %v1153
    %v1398 = vpack.c.b16 %v1158, %v1154
    %v1399 = vpack.c.b16 %v1159, %v1155
    %v1400 = vpack.c.b16 %v1164, %v1160
    %v1401 = vpack.c.b16 %v1165, %v1161
    %v1402 = vpack.c.b16 %v1166, %v1162
    %v1403 = vpack.c.b16 %v1167, %v1163
    %v1404 = vpack.c.b16 %v1172, %v1168
    %v1405 = vpack.c.b16 %v1173, %v1169
    %v1406 = vpack.c.b16 %v1174, %v1170
    %v1407 = vpack.c.b16 %v1175, %v1171
    %v1408 = vpack.c.b16 %v1180, %v1176
    %v1409 = vpack.c.b16 %v1181, %v1177
    %v1410 = vpack.c.b16 %v1182, %v1178
    %v1411 = vpack.c.b16 %v1183, %v1179
    %v1412 = vpack.c.b16 %v1188, %v1184
    %v1413 = vpack.c.b16 %v1189, %v1185
    %v1414 = vpack.c.b16 %v1190, %v1186
    %v1415 = vpack.c.b16 %v1191, %v1187
    %v1416 = vpack.c.b16 %v1196, %v1192
    %v1417 = vpack.c.b16 %v1197, %v1193
    %v1418 = vpack.c.b16 %v1198, %v1194
    %v1419 = vpack.c.b16 %v1199, %v1195
    %v1420 = vpack.c.b16 %v1204, %v1200
    %v1421 = vpack.c.b16 %v1205, %v1201
    %v1422 = vpack.c.b16 %v1206, %v1202
    %v1423 = vpack.c.b16 %v1207, %v1203
    %v1424 = vpack.c.b16 %v1212, %v1208
    %v1425 = vpack.c.b16 %v1213, %v1209
    %v1426 = vpack.c.b16 %v1214, %v1210
    %v1427 = vpack.c.b16 %v1215, %v1211
    %v1428 = vpack.c.b16 %v1220, %v1216
    %v1429 = vpack.c.b16 %v1221, %v1217
    %v1430 = vpack.c.b16 %v1222, %v1218
    %v1431 = vpack.c.b16 %v1223, %v1219
    %v1432 = vpack.c.b16 %v1228, %v1224
    %v1433 = vpack.c.b16 %v1229, %v1225
    %v1434 = vpack.c.b16 %v1230, %v1226
    %v1435 = vpack.c.b16 %v1231, %v1227
    %v1436 = vpack.c.b16 %v1236, %v1232
    %v1437 = vpack.c.b16 %v1237, %v1233
    %v1438 = vpack.c.b16 %v1238, %v1234
    %v1439 = vpack.c.b16 %v1239, %v1235
    %v1440 = vpack.c.b16 %v1244, %v1240
    %v1441 = vpack.c.b16 %v1245, %v1241
    %v1442 = vpack.c.b16 %v1246, %v1242
    %v1443 = vpack.c.b16 %v1247, %v1243
    %v1444 = vpack.c.b16 %v1252, %v1248
    %v1445 = vpack.c.b16 %v1253, %v1249
    %v1446 = vpack.c.b16 %v1254, %v1250
    %v1447 = vpack.c.b16 %v1255, %v1251
    %v1448 = vpack.c.b16 %v1260, %v1256
    %v1449 = vpack.c.b16 %v1261, %v1257
    %v1450 = vpack.c.b16 %v1262, %v1258
    %v1451 = vpack.c.b16 %v1263, %v1259
    %v1452 = vpack.c.b16 %v1268, %v1264
    %v1453 = vpack.c.b16 %v1269, %v1265
    %v1454 = vpack.c.b16 %v1270, %v1266
    %v1455 = vpack.c.b16 %v1271, %v1267
    %v1456 = vpack.c.b16 %v1276, %v1272
    %v1457 = vpack.c.b16 %v1277, %v1273
    %v1458 = vpack.c.b16 %v1278, %v1274
    %v1459 = vpack.c.b16 %v1279, %v1275
    %v1460 = vpack.c.b16 %v1284, %v1280
    %v1461 = vpack.c.b16 %v1285, %v1281
    %v1462 = vpack.c.b16 %v1286, %v1282
    %v1463 = vpack.c.b16 %v1287, %v1283
    %v1464 = vpack.c.b16 %v1292, %v1288
    %v1465 = vpack.c.b16 %v1293, %v1289
    %v1466 = vpack.c.b16 %v1294, %v1290
    %v1467 = vpack.c.b16 %v1295, %v1291
    %v1468 = vpack.c.b16 %v1300, %v1296
    %v1469 = vpack.c.b16 %v1301, %v1297
    %v1470 = vpack.c.b16 %v1302, %v1298
    %v1471 = vpack.c.b16 %v1303, %v1299
    %v1472 = vpack.c.b16 %v1308, %v1304
    %v1473 = vpack.c.b16 %v1309, %v1305
    %v1474 = vpack.c.b16 %v1310, %v1306
    %v1475 = vpack.c.b16 %v1311, %v1307
    %v1476 = vpack.c.b16 %v1316, %v1312
    %v1477 = vpack.c.b16 %v1317, %v1313
    %v1478 = vpack.c.b16 %v1318, %v1314
    %v1479 = vpack.c.b16 %v1319, %v1315
    %v1480 = vpack.c.b16 %v1324, %v1320
    %v1481 = vpack.c.b16 %v1325, %v1321
    %v1482 = vpack.c.b16 %v1326, %v1322
    %v1483 = vpack.c.b16 %v1327, %v1323
    %v1484 = vpack.c.b16 %v1332, %v1328
    %v1485 = vpack.c.b16 %v1333, %v1329
    %v1486 = vpack.c.b16 %v1334, %v1330
    %v1487 = vpack.c.b16 %v1335, %v1331
    %v1488 = vpack.c.b16 %v1340, %v1336
    %v1489 = vpack.c.b16 %v1341, %v1337
    %v1490 = vpack.c.b16 %v1342, %v1338
    %v1491 = vpack.c.b16 %v1343, %v1339
    %v1492 = vpack.c.b16 %v1348, %v1344
    %v1493 = vpack.c.b16 %v1349, %v1345
    %v1494 = vpack.c.b16 %v1350, %v1346
    %v1495 = vpack.c.b16 %v1351, %v1347
    %v1496 = vpack.c.b16 %v1356, %v1352
    %v1497 = vpack.c.b16 %v1357, %v1353
    %v1498 = vpack.c.b16 %v1358, %v1354
    %v1499 = vpack.c.b16 %v1359, %v1355
    %v1500 = vpack.c.b16 %v1364, %v1360
    %v1501 = vpack.c.b16 %v1365, %v1361
    %v1502 = vpack.c.b16 %v1366, %v1362
    %v1503 = vpack.c.b16 %v1367, %v1363
    %v1504 = vpack.c.b16 %v1372, %v1368
    %v1505 = vpack.c.b16 %v1373, %v1369
    %v1506 = vpack.c.b16 %v1374, %v1370
    %v1507 = vpack.c.b16 %v1375, %v1371
    %v1508 = vpack.c.b16 %v1380, %v1376
    %v1509 = vpack.c.b16 %v1381, %v1377
    %v1510 = vpack.c.b16 %v1382, %v1378
    %v1511 = vpack.c.b16 %v1383, %v1379
    %1640 = vmatprep.subr.bf16.mxu0 %v1385
    %1641 = vmatpush1.bf16.msra.mxu0 %v1384
    %1642 = vmatprep.subr.bf16.mxu0 %v1389
    %1643 = vmatpush1.bf16.msra.mxu0 %v1388
    %1644 = vmatprep.subr.bf16.mxu0 %v1393
    %1645 = vmatpush1.bf16.msra.mxu0 %v1392
    %1646 = vmatprep.subr.bf16.mxu0 %v1397
    %1647 = vmatpush1.bf16.msra.mxu0 %v1396
    %1648 = vmatprep.subr.bf16.mxu0 %v1401
    %1649 = vmatpush1.bf16.msra.mxu0 %v1400
    %1650 = vmatprep.subr.bf16.mxu0 %v1405
    %1651 = vmatpush1.bf16.msra.mxu0 %v1404
    %1652 = vmatprep.subr.bf16.mxu0 %v1409
    %1653 = vmatpush1.bf16.msra.mxu0 %v1408
    %1654 = vmatprep.subr.bf16.mxu0 %v1413
    %1655 = vmatpush1.bf16.msra.mxu0 %v1412
    %1656 = vmatprep.subr.bf16.mxu0 %v1417
    %1657 = vmatpush1.bf16.msra.mxu0 %v1416
    %1658 = vmatprep.subr.bf16.mxu0 %v1421
    %1659 = vmatpush1.bf16.msra.mxu0 %v1420
    %1660 = vmatprep.subr.bf16.mxu0 %v1425
    %1661 = vmatpush1.bf16.msra.mxu0 %v1424
    %1662 = vmatprep.subr.bf16.mxu0 %v1429
    %1663 = vmatpush1.bf16.msra.mxu0 %v1428
    %1664 = vmatprep.subr.bf16.mxu0 %v1433
    %1665 = vmatpush1.bf16.msra.mxu0 %v1432
    %1666 = vmatprep.subr.bf16.mxu0 %v1437
    %1667 = vmatpush1.bf16.msra.mxu0 %v1436
    %1668 = vmatprep.subr.bf16.mxu0 %v1441
    %1669 = vmatpush1.bf16.msra.mxu0 %v1440
    %1670 = vmatprep.subr.bf16.mxu0 %v1445
    %1671 = vmatpush1.bf16.msra.mxu0 %v1444
    %1672 = vmatprep.mubr.bf16.mxu0 %v745
    %1673 = vmatmul.mubr.bf16.gmra.mrb[0].mxu0 %v744
    %v1674 = vpop.f32.mrb[0].mxu0
    %v1675 = vadd.f32 %v343, %v1674
    %v1676 = vpop.f32.mrb[0].mxu0
    %v1677 = vadd.f32 %v347, %v1676
    %v1678 = vpop.f32.mrb[0].mxu0
    %v1679 = vadd.f32 %v343, %v1678
    %v1680 = vpop.f32.mrb[0].mxu0
    %v1681 = vadd.f32 %v347, %v1680
    %1682 = vmatprep.mubr.bf16.mxu0 %v749
    %1683 = vmatmul.mubr.bf16.gmra.mrb[0].mxu0 %v748
    %v1684 = vpop.f32.mrb[0].mxu0
    %v1685 = vadd.f32 %v343, %v1684
    %v1686 = vpop.f32.mrb[0].mxu0
    %v1687 = vadd.f32 %v347, %v1686
    %v1688 = vpop.f32.mrb[0].mxu0
    %v1689 = vadd.f32 %v343, %v1688
    %v1690 = vpop.f32.mrb[0].mxu0
    %v1691 = vadd.f32 %v347, %v1690
    %1692 = vmatprep.mubr.bf16.mxu0 %v753
    %1693 = vmatmul.mubr.bf16.gmra.mrb[0].mxu0 %v752
    %v1694 = vpop.f32.mrb[0].mxu0
    %v1695 = vadd.f32 %v343, %v1694
    %v1696 = vpop.f32.mrb[0].mxu0
    %v1697 = vadd.f32 %v347, %v1696
    %v1698 = vpop.f32.mrb[0].mxu0
    %v1699 = vadd.f32 %v343, %v1698
    %v1700 = vpop.f32.mrb[0].mxu0
    %v1701 = vadd.f32 %v347, %v1700
    %1702 = vmatprep.mubr.bf16.mxu0 %v757
    %1703 = vmatmul.mubr.bf16.gmra.mrb[0].mxu0 %v756
    %v1704 = vpop.f32.mrb[0].mxu0
    %v1705 = vadd.f32 %v343, %v1704
    %v1706 = vpop.f32.mrb[0].mxu0
    %v1707 = vadd.f32 %v347, %v1706
    %v1708 = vpop.f32.mrb[0].mxu0
    %v1709 = vadd.f32 %v343, %v1708
    %v1710 = vpop.f32.mrb[0].mxu0
    %v1711 = vadd.f32 %v347, %v1710
    %1712 = vmatprep.mubr.bf16.mxu0 %v761
    %1713 = vmatmul.mubr.bf16.gmra.mrb[0].mxu0 %v760
    %v1714 = vpop.f32.mrb[0].mxu0
    %v1715 = vadd.f32 %v343, %v1714
    %v1716 = vpop.f32.mrb[0].mxu0
    %v1717 = vadd.f32 %v347, %v1716
    %v1718 = vpop.f32.mrb[0].mxu0
    %v1719 = vadd.f32 %v343, %v1718
    %v1720 = vpop.f32.mrb[0].mxu0
    %v1721 = vadd.f32 %v347, %v1720
    %1722 = vmatprep.mubr.bf16.mxu0 %v765
    %1723 = vmatmul.mubr.bf16.gmra.mrb[0].mxu0 %v764
    %v1724 = vpop.f32.mrb[0].mxu0
    %v1725 = vadd.f32 %v343, %v1724
    %v1726 = vpop.f32.mrb[0].mxu0
    %v1727 = vadd.f32 %v347, %v1726
    %v1728 = vpop.f32.mrb[0].mxu0
    %v1729 = vadd.f32 %v343, %v1728
    %v1730 = vpop.f32.mrb[0].mxu0
    %v1731 = vadd.f32 %v347, %v1730
    %1732 = vmatprep.mubr.bf16.mxu0 %v769
    %1733 = vmatmul.mubr.bf16.gmra.mrb[0].mxu0 %v768
    %v1734 = vpop.f32.mrb[0].mxu0
    %v1735 = vadd.f32 %v343, %v1734
    %v1736 = vpop.f32.mrb[0].mxu0
    %v1737 = vadd.f32 %v347, %v1736
    %v1738 = vpop.f32.mrb[0].mxu0
    %v1739 = vadd.f32 %v343, %v1738
    %v1740 = vpop.f32.mrb[0].mxu0
    %v1741 = vadd.f32 %v347, %v1740
    %1742 = vmatprep.mubr.bf16.mxu0 %v773
    %1743 = vmatmul.mubr.bf16.gmra.mrb[0].mxu0 %v772
    %v1744 = vpop.f32.mrb[0].mxu0
    %v1745 = vadd.f32 %v343, %v1744
    %v1746 = vpop.f32.mrb[0].mxu0
    %v1747 = vadd.f32 %v347, %v1746
    %v1748 = vpop.f32.mrb[0].mxu0
    %v1749 = vadd.f32 %v343, %v1748
    %v1750 = vpop.f32.mrb[0].mxu0
    %v1751 = vadd.f32 %v347, %v1750
    %1752 = vmatprep.mubr.bf16.mxu0 %v777
    %1753 = vmatmul.mubr.bf16.gmra.mrb[0].mxu0 %v776
    %v1754 = vpop.f32.mrb[0].mxu0
    %v1755 = vadd.f32 %v343, %v1754
    %v1756 = vpop.f32.mrb[0].mxu0
    %v1757 = vadd.f32 %v347, %v1756
    %v1758 = vpop.f32.mrb[0].mxu0
    %v1759 = vadd.f32 %v343, %v1758
    %v1760 = vpop.f32.mrb[0].mxu0
    %v1761 = vadd.f32 %v347, %v1760
    %1762 = vmatprep.mubr.bf16.mxu0 %v781
    %1763 = vmatmul.mubr.bf16.gmra.mrb[0].mxu0 %v780
    %v1764 = vpop.f32.mrb[0].mxu0
    %v1765 = vadd.f32 %v343, %v1764
    %v1766 = vpop.f32.mrb[0].mxu0
    %v1767 = vadd.f32 %v347, %v1766
    %v1768 = vpop.f32.mrb[0].mxu0
    %v1769 = vadd.f32 %v343, %v1768
    %v1770 = vpop.f32.mrb[0].mxu0
    %v1771 = vadd.f32 %v347, %v1770
    %1772 = vmatprep.mubr.bf16.mxu0 %v785
    %1773 = vmatmul.mubr.bf16.gmra.mrb[0].mxu0 %v784
    %v1774 = vpop.f32.mrb[0].mxu0
    %v1775 = vadd.f32 %v343, %v1774
    %v1776 = vpop.f32.mrb[0].mxu0
    %v1777 = vadd.f32 %v347, %v1776
    %v1778 = vpop.f32.mrb[0].mxu0
    %v1779 = vadd.f32 %v343, %v1778
    %v1780 = vpop.f32.mrb[0].mxu0
    %v1781 = vadd.f32 %v347, %v1780
    %1782 = vmatprep.mubr.bf16.mxu0 %v789
    %1783 = vmatmul.mubr.bf16.gmra.mrb[0].mxu0 %v788
    %v1784 = vpop.f32.mrb[0].mxu0
    %v1785 = vadd.f32 %v343, %v1784
    %v1786 = vpop.f32.mrb[0].mxu0
    %v1787 = vadd.f32 %v347, %v1786
    %v1788 = vpop.f32.mrb[0].mxu0
    %v1789 = vadd.f32 %v343, %v1788
    %v1790 = vpop.f32.mrb[0].mxu0
    %v1791 = vadd.f32 %v347, %v1790
    %1792 = vmatprep.mubr.bf16.mxu0 %v793
    %1793 = vmatmul.mubr.bf16.gmra.mrb[0].mxu0 %v792
    %v1794 = vpop.f32.mrb[0].mxu0
    %v1795 = vadd.f32 %v343, %v1794
    %v1796 = vpop.f32.mrb[0].mxu0
    %v1797 = vadd.f32 %v347, %v1796
    %v1798 = vpop.f32.mrb[0].mxu0
    %v1799 = vadd.f32 %v343, %v1798
    %v1800 = vpop.f32.mrb[0].mxu0
    %v1801 = vadd.f32 %v347, %v1800
    %1802 = vmatprep.mubr.bf16.mxu0 %v797
    %1803 = vmatmul.mubr.bf16.gmra.mrb[0].mxu0 %v796
    %v1804 = vpop.f32.mrb[0].mxu0
    %v1805 = vadd.f32 %v343, %v1804
    %v1806 = vpop.f32.mrb[0].mxu0
    %v1807 = vadd.f32 %v347, %v1806
    %v1808 = vpop.f32.mrb[0].mxu0
    %v1809 = vadd.f32 %v343, %v1808
    %v1810 = vpop.f32.mrb[0].mxu0
    %v1811 = vadd.f32 %v347, %v1810
    %1812 = vmatprep.mubr.bf16.mxu0 %v801
    %1813 = vmatmul.mubr.bf16.gmra.mrb[0].mxu0 %v800
    %v1814 = vpop.f32.mrb[0].mxu0
    %v1815 = vadd.f32 %v343, %v1814
    %v1816 = vpop.f32.mrb[0].mxu0
    %v1817 = vadd.f32 %v347, %v1816
    %v1818 = vpop.f32.mrb[0].mxu0
    %v1819 = vadd.f32 %v343, %v1818
    %v1820 = vpop.f32.mrb[0].mxu0
    %v1821 = vadd.f32 %v347, %v1820
    %1822 = vmatprep.mubr.bf16.mxu0 %v805
    %1823 = vmatmul.mubr.bf16.gmra.mrb[0].mxu0 %v804
    %v1824 = vpop.f32.mrb[0].mxu0
    %v1825 = vadd.f32 %v343, %v1824
    %v1826 = vpop.f32.mrb[0].mxu0
    %v1827 = vadd.f32 %v347, %v1826
    %v1828 = vpop.f32.mrb[0].mxu0
    %v1829 = vadd.f32 %v343, %v1828
    %v1830 = vpop.f32.mrb[0].mxu0
    %v1831 = vadd.f32 %v347, %v1830
    %1832 = vmatprep.mubr.bf16.mxu0 %v809
    %1833 = vmatmul.mubr.bf16.gmra.mrb[0].mxu0 %v808
    %v1834 = vpop.f32.mrb[0].mxu0
    %v1835 = vadd.f32 %v343, %v1834
    %v1836 = vpop.f32.mrb[0].mxu0
    %v1837 = vadd.f32 %v347, %v1836
    %v1838 = vpop.f32.mrb[0].mxu0
    %v1839 = vadd.f32 %v343, %v1838
    %v1840 = vpop.f32.mrb[0].mxu0
    %v1841 = vadd.f32 %v347, %v1840
    %1842 = vmatprep.mubr.bf16.mxu0 %v813
    %1843 = vmatmul.mubr.bf16.gmra.mrb[0].mxu0 %v812
    %v1844 = vpop.f32.mrb[0].mxu0
    %v1845 = vadd.f32 %v343, %v1844
    %v1846 = vpop.f32.mrb[0].mxu0
    %v1847 = vadd.f32 %v347, %v1846
    %v1848 = vpop.f32.mrb[0].mxu0
    %v1849 = vadd.f32 %v343, %v1848
    %v1850 = vpop.f32.mrb[0].mxu0
    %v1851 = vadd.f32 %v347, %v1850
    %1852 = vmatprep.mubr.bf16.mxu0 %v817
    %1853 = vmatmul.mubr.bf16.gmra.mrb[0].mxu0 %v816
    %v1854 = vpop.f32.mrb[0].mxu0
    %v1855 = vadd.f32 %v343, %v1854
    %v1856 = vpop.f32.mrb[0].mxu0
    %v1857 = vadd.f32 %v347, %v1856
    %v1858 = vpop.f32.mrb[0].mxu0
    %v1859 = vadd.f32 %v343, %v1858
    %v1860 = vpop.f32.mrb[0].mxu0
    %v1861 = vadd.f32 %v347, %v1860
    %1862 = vmatprep.mubr.bf16.mxu0 %v821
    %1863 = vmatmul.mubr.bf16.gmra.mrb[0].mxu0 %v820
    %v1864 = vpop.f32.mrb[0].mxu0
    %v1865 = vadd.f32 %v343, %v1864
    %v1866 = vpop.f32.mrb[0].mxu0
    %v1867 = vadd.f32 %v347, %v1866
    %v1868 = vpop.f32.mrb[0].mxu0
    %v1869 = vadd.f32 %v343, %v1868
    %v1870 = vpop.f32.mrb[0].mxu0
    %v1871 = vadd.f32 %v347, %v1870
    %1872 = vmatprep.mubr.bf16.mxu0 %v825
    %1873 = vmatmul.mubr.bf16.gmra.mrb[0].mxu0 %v824
    %v1874 = vpop.f32.mrb[0].mxu0
    %v1875 = vadd.f32 %v343, %v1874
    %v1876 = vpop.f32.mrb[0].mxu0
    %v1877 = vadd.f32 %v347, %v1876
    %v1878 = vpop.f32.mrb[0].mxu0
    %v1879 = vadd.f32 %v343, %v1878
    %v1880 = vpop.f32.mrb[0].mxu0
    %v1881 = vadd.f32 %v347, %v1880
    %1882 = vmatprep.mubr.bf16.mxu0 %v829
    %1883 = vmatmul.mubr.bf16.gmra.mrb[0].mxu0 %v828
    %v1884 = vpop.f32.mrb[0].mxu0
    %v1885 = vadd.f32 %v343, %v1884
    %v1886 = vpop.f32.mrb[0].mxu0
    %v1887 = vadd.f32 %v347, %v1886
    %v1888 = vpop.f32.mrb[0].mxu0
    %v1889 = vadd.f32 %v343, %v1888
    %v1890 = vpop.f32.mrb[0].mxu0
    %v1891 = vadd.f32 %v347, %v1890
    %1892 = vmatprep.mubr.bf16.mxu0 %v833
    %1893 = vmatmul.mubr.bf16.gmra.mrb[0].mxu0 %v832
    %v1894 = vpop.f32.mrb[0].mxu0
    %v1895 = vadd.f32 %v343, %v1894
    %v1896 = vpop.f32.mrb[0].mxu0
    %v1897 = vadd.f32 %v347, %v1896
    %v1898 = vpop.f32.mrb[0].mxu0
    %v1899 = vadd.f32 %v343, %v1898
    %v1900 = vpop.f32.mrb[0].mxu0
    %v1901 = vadd.f32 %v347, %v1900
    %1902 = vmatprep.mubr.bf16.mxu0 %v837
    %1903 = vmatmul.mubr.bf16.gmra.mrb[0].mxu0 %v836
    %v1904 = vpop.f32.mrb[0].mxu0
    %v1905 = vadd.f32 %v343, %v1904
    %v1906 = vpop.f32.mrb[0].mxu0
    %v1907 = vadd.f32 %v347, %v1906
    %v1908 = vpop.f32.mrb[0].mxu0
    %v1909 = vadd.f32 %v343, %v1908
    %v1910 = vpop.f32.mrb[0].mxu0
    %v1911 = vadd.f32 %v347, %v1910
    %1912 = vmatprep.mubr.bf16.mxu0 %v841
    %1913 = vmatmul.mubr.bf16.gmra.mrb[0].mxu0 %v840
    %v1914 = vpop.f32.mrb[0].mxu0
    %v1915 = vadd.f32 %v343, %v1914
    %v1916 = vpop.f32.mrb[0].mxu0
    %v1917 = vadd.f32 %v347, %v1916
    %v1918 = vpop.f32.mrb[0].mxu0
    %v1919 = vadd.f32 %v343, %v1918
    %v1920 = vpop.f32.mrb[0].mxu0
    %v1921 = vadd.f32 %v347, %v1920
    %1922 = vmatprep.mubr.bf16.mxu0 %v845
    %1923 = vmatmul.mubr.bf16.gmra.mrb[0].mxu0 %v844
    %v1924 = vpop.f32.mrb[0].mxu0
    %v1925 = vadd.f32 %v343, %v1924
    %v1926 = vpop.f32.mrb[0].mxu0
    %v1927 = vadd.f32 %v347, %v1926
    %v1928 = vpop.f32.mrb[0].mxu0
    %v1929 = vadd.f32 %v343, %v1928
    %v1930 = vpop.f32.mrb[0].mxu0
    %v1931 = vadd.f32 %v347, %v1930
    %1932 = vmatprep.mubr.bf16.mxu0 %v849
    %1933 = vmatmul.mubr.bf16.gmra.mrb[0].mxu0 %v848
    %v1934 = vpop.f32.mrb[0].mxu0
    %v1935 = vadd.f32 %v343, %v1934
    %v1936 = vpop.f32.mrb[0].mxu0
    %v1937 = vadd.f32 %v347, %v1936
    %v1938 = vpop.f32.mrb[0].mxu0
    %v1939 = vadd.f32 %v343, %v1938
    %v1940 = vpop.f32.mrb[0].mxu0
    %v1941 = vadd.f32 %v347, %v1940
    %1942 = vmatprep.mubr.bf16.mxu0 %v853
    %1943 = vmatmul.mubr.bf16.gmra.mrb[0].mxu0 %v852
    %v1944 = vpop.f32.mrb[0].mxu0
    %v1945 = vadd.f32 %v343, %v1944
    %v1946 = vpop.f32.mrb[0].mxu0
    %v1947 = vadd.f32 %v347, %v1946
    %v1948 = vpop.f32.mrb[0].mxu0
    %v1949 = vadd.f32 %v343, %v1948
    %v1950 = vpop.f32.mrb[0].mxu0
    %v1951 = vadd.f32 %v347, %v1950
    %1952 = vmatprep.mubr.bf16.mxu0 %v857
    %1953 = vmatmul.mubr.bf16.gmra.mrb[0].mxu0 %v856
    %v1954 = vpop.f32.mrb[0].mxu0
    %v1955 = vadd.f32 %v343, %v1954
    %v1956 = vpop.f32.mrb[0].mxu0
    %v1957 = vadd.f32 %v347, %v1956
    %v1958 = vpop.f32.mrb[0].mxu0
    %v1959 = vadd.f32 %v343, %v1958
    %v1960 = vpop.f32.mrb[0].mxu0
    %v1961 = vadd.f32 %v347, %v1960
    %1962 = vmatprep.mubr.bf16.mxu0 %v861
    %1963 = vmatmul.mubr.bf16.gmra.mrb[0].mxu0 %v860
    %v1964 = vpop.f32.mrb[0].mxu0
    %v1965 = vadd.f32 %v343, %v1964
    %v1966 = vpop.f32.mrb[0].mxu0
    %v1967 = vadd.f32 %v347, %v1966
    %v1968 = vpop.f32.mrb[0].mxu0
    %v1969 = vadd.f32 %v343, %v1968
    %v1970 = vpop.f32.mrb[0].mxu0
    %v1971 = vadd.f32 %v347, %v1970
    %1972 = vmatprep.mubr.bf16.mxu0 %v865
    %1973 = vmatmul.mubr.bf16.gmra.mrb[0].mxu0 %v864
    %v1974 = vpop.f32.mrb[0].mxu0
    %v1975 = vadd.f32 %v343, %v1974
    %v1976 = vpop.f32.mrb[0].mxu0
    %v1977 = vadd.f32 %v347, %v1976
    %v1978 = vpop.f32.mrb[0].mxu0
    %v1979 = vadd.f32 %v343, %v1978
    %v1980 = vpop.f32.mrb[0].mxu0
    %v1981 = vadd.f32 %v347, %v1980
    %1982 = vmatprep.mubr.bf16.mxu0 %v869
    %1983 = vmatmul.mubr.bf16.gmra.mrb[0].mxu0 %v868
    %v1984 = vpop.f32.mrb[0].mxu0
    %v1985 = vadd.f32 %v343, %v1984
    %v1986 = vpop.f32.mrb[0].mxu0
    %v1987 = vadd.f32 %v347, %v1986
    %v1988 = vpop.f32.mrb[0].mxu0
    %v1989 = vadd.f32 %v343, %v1988
    %v1990 = vpop.f32.mrb[0].mxu0
    %v1991 = vadd.f32 %v347, %v1990
    %1992 = vdwg.mxu0
    %1993 = vmatprep.subr.bf16.mxu0 %v1449
    %1994 = vmatpush1.bf16.msra.mxu0 %v1448
    %1995 = vmatprep.subr.bf16.mxu0 %v1453
    %1996 = vmatpush1.bf16.msra.mxu0 %v1452
    %1997 = vmatprep.subr.bf16.mxu0 %v1457
    %1998 = vmatpush1.bf16.msra.mxu0 %v1456
    %1999 = vmatprep.subr.bf16.mxu0 %v1461
    %2000 = vmatpush1.bf16.msra.mxu0 %v1460
    %2001 = vmatprep.subr.bf16.mxu0 %v1465
    %2002 = vmatpush1.bf16.msra.mxu0 %v1464
    %2003 = vmatprep.subr.bf16.mxu0 %v1469
    %2004 = vmatpush1.bf16.msra.mxu0 %v1468
    %2005 = vmatprep.subr.bf16.mxu0 %v1473
    %2006 = vmatpush1.bf16.msra.mxu0 %v1472
    %2007 = vmatprep.subr.bf16.mxu0 %v1477
    %2008 = vmatpush1.bf16.msra.mxu0 %v1476
    %2009 = vmatprep.subr.bf16.mxu0 %v1481
    %2010 = vmatpush1.bf16.msra.mxu0 %v1480
    %2011 = vmatprep.subr.bf16.mxu0 %v1485
    %2012 = vmatpush1.bf16.msra.mxu0 %v1484
    %2013 = vmatprep.subr.bf16.mxu0 %v1489
    %2014 = vmatpush1.bf16.msra.mxu0 %v1488
    %2015 = vmatprep.subr.bf16.mxu0 %v1493
    %2016 = vmatpush1.bf16.msra.mxu0 %v1492
    %2017 = vmatprep.subr.bf16.mxu0 %v1497
    %2018 = vmatpush1.bf16.msra.mxu0 %v1496
    %2019 = vmatprep.subr.bf16.mxu0 %v1501
    %2020 = vmatpush1.bf16.msra.mxu0 %v1500
    %2021 = vmatprep.subr.bf16.mxu0 %v1505
    %2022 = vmatpush1.bf16.msra.mxu0 %v1504
    %2023 = vmatprep.subr.bf16.mxu0 %v1509
    %2024 = vmatpush1.bf16.msra.mxu0 %v1508
    %2025 = vmatprep.mubr.bf16.mxu0 %v747
    %2026 = vmatmul.mubr.bf16.gmra.mrb[0].mxu0 %v746
    %v2027 = vpop.f32.mrb[0].mxu0
    %v2028 = vadd.f32 %v1675, %v2027
    %v2029 = vpop.f32.mrb[0].mxu0
    %v2030 = vadd.f32 %v1677, %v2029
    %v2031 = vpop.f32.mrb[0].mxu0
    %v2032 = vadd.f32 %v1679, %v2031
    %v2033 = vpop.f32.mrb[0].mxu0
    %v2034 = vadd.f32 %v1681, %v2033
    %2035 = vmatprep.mubr.bf16.mxu0 %v751
    %2036 = vmatmul.mubr.bf16.gmra.mrb[0].mxu0 %v750
    %v2037 = vpop.f32.mrb[0].mxu0
    %v2038 = vadd.f32 %v1685, %v2037
    %v2039 = vpop.f32.mrb[0].mxu0
    %v2040 = vadd.f32 %v1687, %v2039
    %v2041 = vpop.f32.mrb[0].mxu0
    %v2042 = vadd.f32 %v1689, %v2041
    %v2043 = vpop.f32.mrb[0].mxu0
    %v2044 = vadd.f32 %v1691, %v2043
    %2045 = vmatprep.mubr.bf16.mxu0 %v755
    %2046 = vmatmul.mubr.bf16.gmra.mrb[0].mxu0 %v754
    %v2047 = vpop.f32.mrb[0].mxu0
    %v2048 = vadd.f32 %v1695, %v2047
    %v2049 = vpop.f32.mrb[0].mxu0
    %v2050 = vadd.f32 %v1697, %v2049
    %v2051 = vpop.f32.mrb[0].mxu0
    %v2052 = vadd.f32 %v1699, %v2051
    %v2053 = vpop.f32.mrb[0].mxu0
    %v2054 = vadd.f32 %v1701, %v2053
    %2055 = vmatprep.mubr.bf16.mxu0 %v759
    %2056 = vmatmul.mubr.bf16.gmra.mrb[0].mxu0 %v758
    %v2057 = vpop.f32.mrb[0].mxu0
    %v2058 = vadd.f32 %v1705, %v2057
    %v2059 = vpop.f32.mrb[0].mxu0
    %v2060 = vadd.f32 %v1707, %v2059
    %v2061 = vpop.f32.mrb[0].mxu0
    %v2062 = vadd.f32 %v1709, %v2061
    %v2063 = vpop.f32.mrb[0].mxu0
    %v2064 = vadd.f32 %v1711, %v2063
    %2065 = vmatprep.mubr.bf16.mxu0 %v763
    %2066 = vmatmul.mubr.bf16.gmra.mrb[0].mxu0 %v762
    %v2067 = vpop.f32.mrb[0].mxu0
    %v2068 = vadd.f32 %v1715, %v2067
    %v2069 = vpop.f32.mrb[0].mxu0
    %v2070 = vadd.f32 %v1717, %v2069
    %v2071 = vpop.f32.mrb[0].mxu0
    %v2072 = vadd.f32 %v1719, %v2071
    %v2073 = vpop.f32.mrb[0].mxu0
    %v2074 = vadd.f32 %v1721, %v2073
    %2075 = vmatprep.mubr.bf16.mxu0 %v767
    %2076 = vmatmul.mubr.bf16.gmra.mrb[0].mxu0 %v766
    %v2077 = vpop.f32.mrb[0].mxu0
    %v2078 = vadd.f32 %v1725, %v2077
    %v2079 = vpop.f32.mrb[0].mxu0
    %v2080 = vadd.f32 %v1727, %v2079
    %v2081 = vpop.f32.mrb[0].mxu0
    %v2082 = vadd.f32 %v1729, %v2081
    %v2083 = vpop.f32.mrb[0].mxu0
    %v2084 = vadd.f32 %v1731, %v2083
    %2085 = vmatprep.mubr.bf16.mxu0 %v771
    %2086 = vmatmul.mubr.bf16.gmra.mrb[0].mxu0 %v770
    %v2087 = vpop.f32.mrb[0].mxu0
    %v2088 = vadd.f32 %v1735, %v2087
    %v2089 = vpop.f32.mrb[0].mxu0
    %v2090 = vadd.f32 %v1737, %v2089
    %v2091 = vpop.f32.mrb[0].mxu0
    %v2092 = vadd.f32 %v1739, %v2091
    %v2093 = vpop.f32.mrb[0].mxu0
    %v2094 = vadd.f32 %v1741, %v2093
    %2095 = vmatprep.mubr.bf16.mxu0 %v775
    %2096 = vmatmul.mubr.bf16.gmra.mrb[0].mxu0 %v774
    %v2097 = vpop.f32.mrb[0].mxu0
    %v2098 = vadd.f32 %v1745, %v2097
    %v2099 = vpop.f32.mrb[0].mxu0
    %v2100 = vadd.f32 %v1747, %v2099
    %v2101 = vpop.f32.mrb[0].mxu0
    %v2102 = vadd.f32 %v1749, %v2101
    %v2103 = vpop.f32.mrb[0].mxu0
    %v2104 = vadd.f32 %v1751, %v2103
    %2105 = vmatprep.mubr.bf16.mxu0 %v779
    %2106 = vmatmul.mubr.bf16.gmra.mrb[0].mxu0 %v778
    %v2107 = vpop.f32.mrb[0].mxu0
    %v2108 = vadd.f32 %v1755, %v2107
    %v2109 = vpop.f32.mrb[0].mxu0
    %v2110 = vadd.f32 %v1757, %v2109
    %v2111 = vpop.f32.mrb[0].mxu0
    %v2112 = vadd.f32 %v1759, %v2111
    %v2113 = vpop.f32.mrb[0].mxu0
    %v2114 = vadd.f32 %v1761, %v2113
    %2115 = vmatprep.mubr.bf16.mxu0 %v783
    %2116 = vmatmul.mubr.bf16.gmra.mrb[0].mxu0 %v782
    %v2117 = vpop.f32.mrb[0].mxu0
    %v2118 = vadd.f32 %v1765, %v2117
    %v2119 = vpop.f32.mrb[0].mxu0
    %v2120 = vadd.f32 %v1767, %v2119
    %v2121 = vpop.f32.mrb[0].mxu0
    %v2122 = vadd.f32 %v1769, %v2121
    %v2123 = vpop.f32.mrb[0].mxu0
    %v2124 = vadd.f32 %v1771, %v2123
    %2125 = vmatprep.mubr.bf16.mxu0 %v787
    %2126 = vmatmul.mubr.bf16.gmra.mrb[0].mxu0 %v786
    %v2127 = vpop.f32.mrb[0].mxu0
    %v2128 = vadd.f32 %v1775, %v2127
    %v2129 = vpop.f32.mrb[0].mxu0
    %v2130 = vadd.f32 %v1777, %v2129
    %v2131 = vpop.f32.mrb[0].mxu0
    %v2132 = vadd.f32 %v1779, %v2131
    %v2133 = vpop.f32.mrb[0].mxu0
    %v2134 = vadd.f32 %v1781, %v2133
    %2135 = vmatprep.mubr.bf16.mxu0 %v791
    %2136 = vmatmul.mubr.bf16.gmra.mrb[0].mxu0 %v790
    %v2137 = vpop.f32.mrb[0].mxu0
    %v2138 = vadd.f32 %v1785, %v2137
    %v2139 = vpop.f32.mrb[0].mxu0
    %v2140 = vadd.f32 %v1787, %v2139
    %v2141 = vpop.f32.mrb[0].mxu0
    %v2142 = vadd.f32 %v1789, %v2141
    %v2143 = vpop.f32.mrb[0].mxu0
    %v2144 = vadd.f32 %v1791, %v2143
    %2145 = vmatprep.mubr.bf16.mxu0 %v795
    %2146 = vmatmul.mubr.bf16.gmra.mrb[0].mxu0 %v794
    %v2147 = vpop.f32.mrb[0].mxu0
    %v2148 = vadd.f32 %v1795, %v2147
    %v2149 = vpop.f32.mrb[0].mxu0
    %v2150 = vadd.f32 %v1797, %v2149
    %v2151 = vpop.f32.mrb[0].mxu0
    %v2152 = vadd.f32 %v1799, %v2151
    %v2153 = vpop.f32.mrb[0].mxu0
    %v2154 = vadd.f32 %v1801, %v2153
    %2155 = vmatprep.mubr.bf16.mxu0 %v799
    %2156 = vmatmul.mubr.bf16.gmra.mrb[0].mxu0 %v798
    %v2157 = vpop.f32.mrb[0].mxu0
    %v2158 = vadd.f32 %v1805, %v2157
    %v2159 = vpop.f32.mrb[0].mxu0
    %v2160 = vadd.f32 %v1807, %v2159
    %v2161 = vpop.f32.mrb[0].mxu0
    %v2162 = vadd.f32 %v1809, %v2161
    %v2163 = vpop.f32.mrb[0].mxu0
    %v2164 = vadd.f32 %v1811, %v2163
    %2165 = vmatprep.mubr.bf16.mxu0 %v803
    %2166 = vmatmul.mubr.bf16.gmra.mrb[0].mxu0 %v802
    %v2167 = vpop.f32.mrb[0].mxu0
    %v2168 = vadd.f32 %v1815, %v2167
    %v2169 = vpop.f32.mrb[0].mxu0
    %v2170 = vadd.f32 %v1817, %v2169
    %v2171 = vpop.f32.mrb[0].mxu0
    %v2172 = vadd.f32 %v1819, %v2171
    %v2173 = vpop.f32.mrb[0].mxu0
    %v2174 = vadd.f32 %v1821, %v2173
    %2175 = vmatprep.mubr.bf16.mxu0 %v807
    %2176 = vmatmul.mubr.bf16.gmra.mrb[0].mxu0 %v806
    %v2177 = vpop.f32.mrb[0].mxu0
    %v2178 = vadd.f32 %v1825, %v2177
    %v2179 = vpop.f32.mrb[0].mxu0
    %v2180 = vadd.f32 %v1827, %v2179
    %v2181 = vpop.f32.mrb[0].mxu0
    %v2182 = vadd.f32 %v1829, %v2181
    %v2183 = vpop.f32.mrb[0].mxu0
    %v2184 = vadd.f32 %v1831, %v2183
    %2185 = vmatprep.mubr.bf16.mxu0 %v811
    %2186 = vmatmul.mubr.bf16.gmra.mrb[0].mxu0 %v810
    %v2187 = vpop.f32.mrb[0].mxu0
    %v2188 = vadd.f32 %v1835, %v2187
    %v2189 = vpop.f32.mrb[0].mxu0
    %v2190 = vadd.f32 %v1837, %v2189
    %v2191 = vpop.f32.mrb[0].mxu0
    %v2192 = vadd.f32 %v1839, %v2191
    %v2193 = vpop.f32.mrb[0].mxu0
    %v2194 = vadd.f32 %v1841, %v2193
    %2195 = vmatprep.mubr.bf16.mxu0 %v815
    %2196 = vmatmul.mubr.bf16.gmra.mrb[0].mxu0 %v814
    %v2197 = vpop.f32.mrb[0].mxu0
    %v2198 = vadd.f32 %v1845, %v2197
    %v2199 = vpop.f32.mrb[0].mxu0
    %v2200 = vadd.f32 %v1847, %v2199
    %v2201 = vpop.f32.mrb[0].mxu0
    %v2202 = vadd.f32 %v1849, %v2201
    %v2203 = vpop.f32.mrb[0].mxu0
    %v2204 = vadd.f32 %v1851, %v2203
    %2205 = vmatprep.mubr.bf16.mxu0 %v819
    %2206 = vmatmul.mubr.bf16.gmra.mrb[0].mxu0 %v818
    %v2207 = vpop.f32.mrb[0].mxu0
    %v2208 = vadd.f32 %v1855, %v2207
    %v2209 = vpop.f32.mrb[0].mxu0
    %v2210 = vadd.f32 %v1857, %v2209
    %v2211 = vpop.f32.mrb[0].mxu0
    %v2212 = vadd.f32 %v1859, %v2211
    %v2213 = vpop.f32.mrb[0].mxu0
    %v2214 = vadd.f32 %v1861, %v2213
    %2215 = vmatprep.mubr.bf16.mxu0 %v823
    %2216 = vmatmul.mubr.bf16.gmra.mrb[0].mxu0 %v822
    %v2217 = vpop.f32.mrb[0].mxu0
    %v2218 = vadd.f32 %v1865, %v2217
    %v2219 = vpop.f32.mrb[0].mxu0
    %v2220 = vadd.f32 %v1867, %v2219
    %v2221 = vpop.f32.mrb[0].mxu0
    %v2222 = vadd.f32 %v1869, %v2221
    %v2223 = vpop.f32.mrb[0].mxu0
    %v2224 = vadd.f32 %v1871, %v2223
    %2225 = vmatprep.mubr.bf16.mxu0 %v827
    %2226 = vmatmul.mubr.bf16.gmra.mrb[0].mxu0 %v826
    %v2227 = vpop.f32.mrb[0].mxu0
    %v2228 = vadd.f32 %v1875, %v2227
    %v2229 = vpop.f32.mrb[0].mxu0
    %v2230 = vadd.f32 %v1877, %v2229
    %v2231 = vpop.f32.mrb[0].mxu0
    %v2232 = vadd.f32 %v1879, %v2231
    %v2233 = vpop.f32.mrb[0].mxu0
    %v2234 = vadd.f32 %v1881, %v2233
    %2235 = vmatprep.mubr.bf16.mxu0 %v831
    %2236 = vmatmul.mubr.bf16.gmra.mrb[0].mxu0 %v830
    %v2237 = vpop.f32.mrb[0].mxu0
    %v2238 = vadd.f32 %v1885, %v2237
    %v2239 = vpop.f32.mrb[0].mxu0
    %v2240 = vadd.f32 %v1887, %v2239
    %v2241 = vpop.f32.mrb[0].mxu0
    %v2242 = vadd.f32 %v1889, %v2241
    %v2243 = vpop.f32.mrb[0].mxu0
    %v2244 = vadd.f32 %v1891, %v2243
    %2245 = vmatprep.mubr.bf16.mxu0 %v835
    %2246 = vmatmul.mubr.bf16.gmra.mrb[0].mxu0 %v834
    %v2247 = vpop.f32.mrb[0].mxu0
    %v2248 = vadd.f32 %v1895, %v2247
    %v2249 = vpop.f32.mrb[0].mxu0
    %v2250 = vadd.f32 %v1897, %v2249
    %v2251 = vpop.f32.mrb[0].mxu0
    %v2252 = vadd.f32 %v1899, %v2251
    %v2253 = vpop.f32.mrb[0].mxu0
    %v2254 = vadd.f32 %v1901, %v2253
    %2255 = vmatprep.mubr.bf16.mxu0 %v839
    %2256 = vmatmul.mubr.bf16.gmra.mrb[0].mxu0 %v838
    %v2257 = vpop.f32.mrb[0].mxu0
    %v2258 = vadd.f32 %v1905, %v2257
    %v2259 = vpop.f32.mrb[0].mxu0
    %v2260 = vadd.f32 %v1907, %v2259
    %v2261 = vpop.f32.mrb[0].mxu0
    %v2262 = vadd.f32 %v1909, %v2261
    %v2263 = vpop.f32.mrb[0].mxu0
    %v2264 = vadd.f32 %v1911, %v2263
    %2265 = vmatprep.mubr.bf16.mxu0 %v843
    %2266 = vmatmul.mubr.bf16.gmra.mrb[0].mxu0 %v842
    %v2267 = vpop.f32.mrb[0].mxu0
    %v2268 = vadd.f32 %v1915, %v2267
    %v2269 = vpop.f32.mrb[0].mxu0
    %v2270 = vadd.f32 %v1917, %v2269
    %v2271 = vpop.f32.mrb[0].mxu0
    %v2272 = vadd.f32 %v1919, %v2271
    %v2273 = vpop.f32.mrb[0].mxu0
    %v2274 = vadd.f32 %v1921, %v2273
    %2275 = vmatprep.mubr.bf16.mxu0 %v847
    %2276 = vmatmul.mubr.bf16.gmra.mrb[0].mxu0 %v846
    %v2277 = vpop.f32.mrb[0].mxu0
    %v2278 = vadd.f32 %v1925, %v2277
    %v2279 = vpop.f32.mrb[0].mxu0
    %v2280 = vadd.f32 %v1927, %v2279
    %v2281 = vpop.f32.mrb[0].mxu0
    %v2282 = vadd.f32 %v1929, %v2281
    %v2283 = vpop.f32.mrb[0].mxu0
    %v2284 = vadd.f32 %v1931, %v2283
    %2285 = vmatprep.mubr.bf16.mxu0 %v851
    %2286 = vmatmul.mubr.bf16.gmra.mrb[0].mxu0 %v850
    %v2287 = vpop.f32.mrb[0].mxu0
    %v2288 = vadd.f32 %v1935, %v2287
    %v2289 = vpop.f32.mrb[0].mxu0
    %v2290 = vadd.f32 %v1937, %v2289
    %v2291 = vpop.f32.mrb[0].mxu0
    %v2292 = vadd.f32 %v1939, %v2291
    %v2293 = vpop.f32.mrb[0].mxu0
    %v2294 = vadd.f32 %v1941, %v2293
    %2295 = vmatprep.mubr.bf16.mxu0 %v855
    %2296 = vmatmul.mubr.bf16.gmra.mrb[0].mxu0 %v854
    %v2297 = vpop.f32.mrb[0].mxu0
    %v2298 = vadd.f32 %v1945, %v2297
    %v2299 = vpop.f32.mrb[0].mxu0
    %v2300 = vadd.f32 %v1947, %v2299
    %v2301 = vpop.f32.mrb[0].mxu0
    %v2302 = vadd.f32 %v1949, %v2301
    %v2303 = vpop.f32.mrb[0].mxu0
    %v2304 = vadd.f32 %v1951, %v2303
    %2305 = vmatprep.mubr.bf16.mxu0 %v859
    %2306 = vmatmul.mubr.bf16.gmra.mrb[0].mxu0 %v858
    %v2307 = vpop.f32.mrb[0].mxu0
    %v2308 = vadd.f32 %v1955, %v2307
    %v2309 = vpop.f32.mrb[0].mxu0
    %v2310 = vadd.f32 %v1957, %v2309
    %v2311 = vpop.f32.mrb[0].mxu0
    %v2312 = vadd.f32 %v1959, %v2311
    %v2313 = vpop.f32.mrb[0].mxu0
    %v2314 = vadd.f32 %v1961, %v2313
    %2315 = vmatprep.mubr.bf16.mxu0 %v863
    %2316 = vmatmul.mubr.bf16.gmra.mrb[0].mxu0 %v862
    %v2317 = vpop.f32.mrb[0].mxu0
    %v2318 = vadd.f32 %v1965, %v2317
    %v2319 = vpop.f32.mrb[0].mxu0
    %v2320 = vadd.f32 %v1967, %v2319
    %v2321 = vpop.f32.mrb[0].mxu0
    %v2322 = vadd.f32 %v1969, %v2321
    %v2323 = vpop.f32.mrb[0].mxu0
    %v2324 = vadd.f32 %v1971, %v2323
    %2325 = vmatprep.mubr.bf16.mxu0 %v867
    %2326 = vmatmul.mubr.bf16.gmra.mrb[0].mxu0 %v866
    %v2327 = vpop.f32.mrb[0].mxu0
    %v2328 = vadd.f32 %v1975, %v2327
    %v2329 = vpop.f32.mrb[0].mxu0
    %v2330 = vadd.f32 %v1977, %v2329
    %v2331 = vpop.f32.mrb[0].mxu0
    %v2332 = vadd.f32 %v1979, %v2331
    %v2333 = vpop.f32.mrb[0].mxu0
    %v2334 = vadd.f32 %v1981, %v2333
    %2335 = vmatprep.mubr.bf16.mxu0 %v871
    %2336 = vmatmul.mubr.bf16.gmra.mrb[0].mxu0 %v870
    %v2337 = vpop.f32.mrb[0].mxu0
    %v2338 = vadd.f32 %v1985, %v2337
    %v2339 = vpop.f32.mrb[0].mxu0
    %v2340 = vadd.f32 %v1987, %v2339
    %v2341 = vpop.f32.mrb[0].mxu0
    %v2342 = vadd.f32 %v1989, %v2341
    %v2343 = vpop.f32.mrb[0].mxu0
    %v2344 = vadd.f32 %v1991, %v2343
    %2345 = vdwg.mxu0
    %2346 = vmatprep.subr.bf16.mxu0 %v1387
    %2347 = vmatpush1.bf16.msra.mxu0 %v1386
    %2348 = vmatprep.subr.bf16.mxu0 %v1391
    %2349 = vmatpush1.bf16.msra.mxu0 %v1390
    %2350 = vmatprep.subr.bf16.mxu0 %v1395
    %2351 = vmatpush1.bf16.msra.mxu0 %v1394
    %2352 = vmatprep.subr.bf16.mxu0 %v1399
    %2353 = vmatpush1.bf16.msra.mxu0 %v1398
    %2354 = vmatprep.subr.bf16.mxu0 %v1403
    %2355 = vmatpush1.bf16.msra.mxu0 %v1402
    %2356 = vmatprep.subr.bf16.mxu0 %v1407
    %2357 = vmatpush1.bf16.msra.mxu0 %v1406
    %2358 = vmatprep.subr.bf16.mxu0 %v1411
    %2359 = vmatpush1.bf16.msra.mxu0 %v1410
    %2360 = vmatprep.subr.bf16.mxu0 %v1415
    %2361 = vmatpush1.bf16.msra.mxu0 %v1414
    %2362 = vmatprep.subr.bf16.mxu0 %v1419
    %2363 = vmatpush1.bf16.msra.mxu0 %v1418
    %2364 = vmatprep.subr.bf16.mxu0 %v1423
    %2365 = vmatpush1.bf16.msra.mxu0 %v1422
    %2366 = vmatprep.subr.bf16.mxu0 %v1427
    %2367 = vmatpush1.bf16.msra.mxu0 %v1426
    %2368 = vmatprep.subr.bf16.mxu0 %v1431
    %2369 = vmatpush1.bf16.msra.mxu0 %v1430
    %2370 = vmatprep.subr.bf16.mxu0 %v1435
    %2371 = vmatpush1.bf16.msra.mxu0 %v1434
    %2372 = vmatprep.subr.bf16.mxu0 %v1439
    %2373 = vmatpush1.bf16.msra.mxu0 %v1438
    %2374 = vmatprep.subr.bf16.mxu0 %v1443
    %2375 = vmatpush1.bf16.msra.mxu0 %v1442
    %2376 = vmatprep.subr.bf16.mxu0 %v1447
    %2377 = vmatpush1.bf16.msra.mxu0 %v1446
    %2378 = vmatprep.mubr.bf16.mxu0 %v745
    %2379 = vmatmul.mubr.bf16.gmra.mrb[0].mxu0 %v744
    %v2380 = vpop.f32.mrb[0].mxu0
    %v2381 = vadd.f32 %v351, %v2380
    %v2382 = vpop.f32.mrb[0].mxu0
    %v2383 = vadd.f32 %v355, %v2382
    %v2384 = vpop.f32.mrb[0].mxu0
    %v2385 = vadd.f32 %v351, %v2384
    %v2386 = vpop.f32.mrb[0].mxu0
    %v2387 = vadd.f32 %v355, %v2386
    %2388 = vmatprep.mubr.bf16.mxu0 %v749
    %2389 = vmatmul.mubr.bf16.gmra.mrb[0].mxu0 %v748
    %v2390 = vpop.f32.mrb[0].mxu0
    %v2391 = vadd.f32 %v351, %v2390
    %v2392 = vpop.f32.mrb[0].mxu0
    %v2393 = vadd.f32 %v355, %v2392
    %v2394 = vpop.f32.mrb[0].mxu0
    %v2395 = vadd.f32 %v351, %v2394
    %v2396 = vpop.f32.mrb[0].mxu0
    %v2397 = vadd.f32 %v355, %v2396
    %2398 = vmatprep.mubr.bf16.mxu0 %v753
    %2399 = vmatmul.mubr.bf16.gmra.mrb[0].mxu0 %v752
    %v2400 = vpop.f32.mrb[0].mxu0
    %v2401 = vadd.f32 %v351, %v2400
    %v2402 = vpop.f32.mrb[0].mxu0
    %v2403 = vadd.f32 %v355, %v2402
    %v2404 = vpop.f32.mrb[0].mxu0
    %v2405 = vadd.f32 %v351, %v2404
    %v2406 = vpop.f32.mrb[0].mxu0
    %v2407 = vadd.f32 %v355, %v2406
    %2408 = vmatprep.mubr.bf16.mxu0 %v757
    %2409 = vmatmul.mubr.bf16.gmra.mrb[0].mxu0 %v756
    %v2410 = vpop.f32.mrb[0].mxu0
    %v2411 = vadd.f32 %v351, %v2410
    %v2412 = vpop.f32.mrb[0].mxu0
    %v2413 = vadd.f32 %v355, %v2412
    %v2414 = vpop.f32.mrb[0].mxu0
    %v2415 = vadd.f32 %v351, %v2414
    %v2416 = vpop.f32.mrb[0].mxu0
    %v2417 = vadd.f32 %v355, %v2416
    %2418 = vmatprep.mubr.bf16.mxu0 %v761
    %2419 = vmatmul.mubr.bf16.gmra.mrb[0].mxu0 %v760
    %v2420 = vpop.f32.mrb[0].mxu0
    %v2421 = vadd.f32 %v351, %v2420
    %v2422 = vpop.f32.mrb[0].mxu0
    %v2423 = vadd.f32 %v355, %v2422
    %v2424 = vpop.f32.mrb[0].mxu0
    %v2425 = vadd.f32 %v351, %v2424
    %v2426 = vpop.f32.mrb[0].mxu0
    %v2427 = vadd.f32 %v355, %v2426
    %2428 = vmatprep.mubr.bf16.mxu0 %v765
    %2429 = vmatmul.mubr.bf16.gmra.mrb[0].mxu0 %v764
    %v2430 = vpop.f32.mrb[0].mxu0
    %v2431 = vadd.f32 %v351, %v2430
    %v2432 = vpop.f32.mrb[0].mxu0
    %v2433 = vadd.f32 %v355, %v2432
    %v2434 = vpop.f32.mrb[0].mxu0
    %v2435 = vadd.f32 %v351, %v2434
    %v2436 = vpop.f32.mrb[0].mxu0
    %v2437 = vadd.f32 %v355, %v2436
    %2438 = vmatprep.mubr.bf16.mxu0 %v769
    %2439 = vmatmul.mubr.bf16.gmra.mrb[0].mxu0 %v768
    %v2440 = vpop.f32.mrb[0].mxu0
    %v2441 = vadd.f32 %v351, %v2440
    %v2442 = vpop.f32.mrb[0].mxu0
    %v2443 = vadd.f32 %v355, %v2442
    %v2444 = vpop.f32.mrb[0].mxu0
    %v2445 = vadd.f32 %v351, %v2444
    %v2446 = vpop.f32.mrb[0].mxu0
    %v2447 = vadd.f32 %v355, %v2446
    %2448 = vmatprep.mubr.bf16.mxu0 %v773
    %2449 = vmatmul.mubr.bf16.gmra.mrb[0].mxu0 %v772
    %v2450 = vpop.f32.mrb[0].mxu0
    %v2451 = vadd.f32 %v351, %v2450
    %v2452 = vpop.f32.mrb[0].mxu0
    %v2453 = vadd.f32 %v355, %v2452
    %v2454 = vpop.f32.mrb[0].mxu0
    %v2455 = vadd.f32 %v351, %v2454
    %v2456 = vpop.f32.mrb[0].mxu0
    %v2457 = vadd.f32 %v355, %v2456
    %2458 = vmatprep.mubr.bf16.mxu0 %v777
    %2459 = vmatmul.mubr.bf16.gmra.mrb[0].mxu0 %v776
    %v2460 = vpop.f32.mrb[0].mxu0
    %v2461 = vadd.f32 %v351, %v2460
    %v2462 = vpop.f32.mrb[0].mxu0
    %v2463 = vadd.f32 %v355, %v2462
    %v2464 = vpop.f32.mrb[0].mxu0
    %v2465 = vadd.f32 %v351, %v2464
    %v2466 = vpop.f32.mrb[0].mxu0
    %v2467 = vadd.f32 %v355, %v2466
    %2468 = vmatprep.mubr.bf16.mxu0 %v781
    %2469 = vmatmul.mubr.bf16.gmra.mrb[0].mxu0 %v780
    %v2470 = vpop.f32.mrb[0].mxu0
    %v2471 = vadd.f32 %v351, %v2470
    %v2472 = vpop.f32.mrb[0].mxu0
    %v2473 = vadd.f32 %v355, %v2472
    %v2474 = vpop.f32.mrb[0].mxu0
    %v2475 = vadd.f32 %v351, %v2474
    %v2476 = vpop.f32.mrb[0].mxu0
    %v2477 = vadd.f32 %v355, %v2476
    %2478 = vmatprep.mubr.bf16.mxu0 %v785
    %2479 = vmatmul.mubr.bf16.gmra.mrb[0].mxu0 %v784
    %v2480 = vpop.f32.mrb[0].mxu0
    %v2481 = vadd.f32 %v351, %v2480
    %v2482 = vpop.f32.mrb[0].mxu0
    %v2483 = vadd.f32 %v355, %v2482
    %v2484 = vpop.f32.mrb[0].mxu0
    %v2485 = vadd.f32 %v351, %v2484
    %v2486 = vpop.f32.mrb[0].mxu0
    %v2487 = vadd.f32 %v355, %v2486
    %2488 = vmatprep.mubr.bf16.mxu0 %v789
    %2489 = vmatmul.mubr.bf16.gmra.mrb[0].mxu0 %v788
    %v2490 = vpop.f32.mrb[0].mxu0
    %v2491 = vadd.f32 %v351, %v2490
    %v2492 = vpop.f32.mrb[0].mxu0
    %v2493 = vadd.f32 %v355, %v2492
    %v2494 = vpop.f32.mrb[0].mxu0
    %v2495 = vadd.f32 %v351, %v2494
    %v2496 = vpop.f32.mrb[0].mxu0
    %v2497 = vadd.f32 %v355, %v2496
    %2498 = vmatprep.mubr.bf16.mxu0 %v793
    %2499 = vmatmul.mubr.bf16.gmra.mrb[0].mxu0 %v792
    %v2500 = vpop.f32.mrb[0].mxu0
    %v2501 = vadd.f32 %v351, %v2500
    %v2502 = vpop.f32.mrb[0].mxu0
    %v2503 = vadd.f32 %v355, %v2502
    %v2504 = vpop.f32.mrb[0].mxu0
    %v2505 = vadd.f32 %v351, %v2504
    %v2506 = vpop.f32.mrb[0].mxu0
    %v2507 = vadd.f32 %v355, %v2506
    %2508 = vmatprep.mubr.bf16.mxu0 %v797
    %2509 = vmatmul.mubr.bf16.gmra.mrb[0].mxu0 %v796
    %v2510 = vpop.f32.mrb[0].mxu0
    %v2511 = vadd.f32 %v351, %v2510
    %v2512 = vpop.f32.mrb[0].mxu0
    %v2513 = vadd.f32 %v355, %v2512
    %v2514 = vpop.f32.mrb[0].mxu0
    %v2515 = vadd.f32 %v351, %v2514
    %v2516 = vpop.f32.mrb[0].mxu0
    %v2517 = vadd.f32 %v355, %v2516
    %2518 = vmatprep.mubr.bf16.mxu0 %v801
    %2519 = vmatmul.mubr.bf16.gmra.mrb[0].mxu0 %v800
    %v2520 = vpop.f32.mrb[0].mxu0
    %v2521 = vadd.f32 %v351, %v2520
    %v2522 = vpop.f32.mrb[0].mxu0
    %v2523 = vadd.f32 %v355, %v2522
    %v2524 = vpop.f32.mrb[0].mxu0
    %v2525 = vadd.f32 %v351, %v2524
    %v2526 = vpop.f32.mrb[0].mxu0
    %v2527 = vadd.f32 %v355, %v2526
    %2528 = vmatprep.mubr.bf16.mxu0 %v805
    %2529 = vmatmul.mubr.bf16.gmra.mrb[0].mxu0 %v804
    %v2530 = vpop.f32.mrb[0].mxu0
    %v2531 = vadd.f32 %v351, %v2530
    %v2532 = vpop.f32.mrb[0].mxu0
    %v2533 = vadd.f32 %v355, %v2532
    %v2534 = vpop.f32.mrb[0].mxu0
    %v2535 = vadd.f32 %v351, %v2534
    %v2536 = vpop.f32.mrb[0].mxu0
    %v2537 = vadd.f32 %v355, %v2536
    %2538 = vmatprep.mubr.bf16.mxu0 %v809
    %2539 = vmatmul.mubr.bf16.gmra.mrb[0].mxu0 %v808
    %v2540 = vpop.f32.mrb[0].mxu0
    %v2541 = vadd.f32 %v351, %v2540
    %v2542 = vpop.f32.mrb[0].mxu0
    %v2543 = vadd.f32 %v355, %v2542
    %v2544 = vpop.f32.mrb[0].mxu0
    %v2545 = vadd.f32 %v351, %v2544
    %v2546 = vpop.f32.mrb[0].mxu0
    %v2547 = vadd.f32 %v355, %v2546
    %2548 = vmatprep.mubr.bf16.mxu0 %v813
    %2549 = vmatmul.mubr.bf16.gmra.mrb[0].mxu0 %v812
    %v2550 = vpop.f32.mrb[0].mxu0
    %v2551 = vadd.f32 %v351, %v2550
    %v2552 = vpop.f32.mrb[0].mxu0
    %v2553 = vadd.f32 %v355, %v2552
    %v2554 = vpop.f32.mrb[0].mxu0
    %v2555 = vadd.f32 %v351, %v2554
    %v2556 = vpop.f32.mrb[0].mxu0
    %v2557 = vadd.f32 %v355, %v2556
    %2558 = vmatprep.mubr.bf16.mxu0 %v817
    %2559 = vmatmul.mubr.bf16.gmra.mrb[0].mxu0 %v816
    %v2560 = vpop.f32.mrb[0].mxu0
    %v2561 = vadd.f32 %v351, %v2560
    %v2562 = vpop.f32.mrb[0].mxu0
    %v2563 = vadd.f32 %v355, %v2562
    %v2564 = vpop.f32.mrb[0].mxu0
    %v2565 = vadd.f32 %v351, %v2564
    %v2566 = vpop.f32.mrb[0].mxu0
    %v2567 = vadd.f32 %v355, %v2566
    %2568 = vmatprep.mubr.bf16.mxu0 %v821
    %2569 = vmatmul.mubr.bf16.gmra.mrb[0].mxu0 %v820
    %v2570 = vpop.f32.mrb[0].mxu0
    %v2571 = vadd.f32 %v351, %v2570
    %v2572 = vpop.f32.mrb[0].mxu0
    %v2573 = vadd.f32 %v355, %v2572
    %v2574 = vpop.f32.mrb[0].mxu0
    %v2575 = vadd.f32 %v351, %v2574
    %v2576 = vpop.f32.mrb[0].mxu0
    %v2577 = vadd.f32 %v355, %v2576
    %2578 = vmatprep.mubr.bf16.mxu0 %v825
    %2579 = vmatmul.mubr.bf16.gmra.mrb[0].mxu0 %v824
    %v2580 = vpop.f32.mrb[0].mxu0
    %v2581 = vadd.f32 %v351, %v2580
    %v2582 = vpop.f32.mrb[0].mxu0
    %v2583 = vadd.f32 %v355, %v2582
    %v2584 = vpop.f32.mrb[0].mxu0
    %v2585 = vadd.f32 %v351, %v2584
    %v2586 = vpop.f32.mrb[0].mxu0
    %v2587 = vadd.f32 %v355, %v2586
    %2588 = vmatprep.mubr.bf16.mxu0 %v829
    %2589 = vmatmul.mubr.bf16.gmra.mrb[0].mxu0 %v828
    %v2590 = vpop.f32.mrb[0].mxu0
    %v2591 = vadd.f32 %v351, %v2590
    %v2592 = vpop.f32.mrb[0].mxu0
    %v2593 = vadd.f32 %v355, %v2592
    %v2594 = vpop.f32.mrb[0].mxu0
    %v2595 = vadd.f32 %v351, %v2594
    %v2596 = vpop.f32.mrb[0].mxu0
    %v2597 = vadd.f32 %v355, %v2596
    %2598 = vmatprep.mubr.bf16.mxu0 %v833
    %2599 = vmatmul.mubr.bf16.gmra.mrb[0].mxu0 %v832
    %v2600 = vpop.f32.mrb[0].mxu0
    %v2601 = vadd.f32 %v351, %v2600
    %v2602 = vpop.f32.mrb[0].mxu0
    %v2603 = vadd.f32 %v355, %v2602
    %v2604 = vpop.f32.mrb[0].mxu0
    %v2605 = vadd.f32 %v351, %v2604
    %v2606 = vpop.f32.mrb[0].mxu0
    %v2607 = vadd.f32 %v355, %v2606
    %2608 = vmatprep.mubr.bf16.mxu0 %v837
    %2609 = vmatmul.mubr.bf16.gmra.mrb[0].mxu0 %v836
    %v2610 = vpop.f32.mrb[0].mxu0
    %v2611 = vadd.f32 %v351, %v2610
    %v2612 = vpop.f32.mrb[0].mxu0
    %v2613 = vadd.f32 %v355, %v2612
    %v2614 = vpop.f32.mrb[0].mxu0
    %v2615 = vadd.f32 %v351, %v2614
    %v2616 = vpop.f32.mrb[0].mxu0
    %v2617 = vadd.f32 %v355, %v2616
    %2618 = vmatprep.mubr.bf16.mxu0 %v841
    %2619 = vmatmul.mubr.bf16.gmra.mrb[0].mxu0 %v840
    %v2620 = vpop.f32.mrb[0].mxu0
    %v2621 = vadd.f32 %v351, %v2620
    %v2622 = vpop.f32.mrb[0].mxu0
    %v2623 = vadd.f32 %v355, %v2622
    %v2624 = vpop.f32.mrb[0].mxu0
    %v2625 = vadd.f32 %v351, %v2624
    %v2626 = vpop.f32.mrb[0].mxu0
    %v2627 = vadd.f32 %v355, %v2626
    %2628 = vmatprep.mubr.bf16.mxu0 %v845
    %2629 = vmatmul.mubr.bf16.gmra.mrb[0].mxu0 %v844
    %v2630 = vpop.f32.mrb[0].mxu0
    %v2631 = vadd.f32 %v351, %v2630
    %v2632 = vpop.f32.mrb[0].mxu0
    %v2633 = vadd.f32 %v355, %v2632
    %v2634 = vpop.f32.mrb[0].mxu0
    %v2635 = vadd.f32 %v351, %v2634
    %v2636 = vpop.f32.mrb[0].mxu0
    %v2637 = vadd.f32 %v355, %v2636
    %2638 = vmatprep.mubr.bf16.mxu0 %v849
    %2639 = vmatmul.mubr.bf16.gmra.mrb[0].mxu0 %v848
    %v2640 = vpop.f32.mrb[0].mxu0
    %v2641 = vadd.f32 %v351, %v2640
    %v2642 = vpop.f32.mrb[0].mxu0
    %v2643 = vadd.f32 %v355, %v2642
    %v2644 = vpop.f32.mrb[0].mxu0
    %v2645 = vadd.f32 %v351, %v2644
    %v2646 = vpop.f32.mrb[0].mxu0
    %v2647 = vadd.f32 %v355, %v2646
    %2648 = vmatprep.mubr.bf16.mxu0 %v853
    %2649 = vmatmul.mubr.bf16.gmra.mrb[0].mxu0 %v852
    %v2650 = vpop.f32.mrb[0].mxu0
    %v2651 = vadd.f32 %v351, %v2650
    %v2652 = vpop.f32.mrb[0].mxu0
    %v2653 = vadd.f32 %v355, %v2652
    %v2654 = vpop.f32.mrb[0].mxu0
    %v2655 = vadd.f32 %v351, %v2654
    %v2656 = vpop.f32.mrb[0].mxu0
    %v2657 = vadd.f32 %v355, %v2656
    %2658 = vmatprep.mubr.bf16.mxu0 %v857
    %2659 = vmatmul.mubr.bf16.gmra.mrb[0].mxu0 %v856
    %v2660 = vpop.f32.mrb[0].mxu0
    %v2661 = vadd.f32 %v351, %v2660
    %v2662 = vpop.f32.mrb[0].mxu0
    %v2663 = vadd.f32 %v355, %v2662
    %v2664 = vpop.f32.mrb[0].mxu0
    %v2665 = vadd.f32 %v351, %v2664
    %v2666 = vpop.f32.mrb[0].mxu0
    %v2667 = vadd.f32 %v355, %v2666
    %2668 = vmatprep.mubr.bf16.mxu0 %v861
    %2669 = vmatmul.mubr.bf16.gmra.mrb[0].mxu0 %v860
    %v2670 = vpop.f32.mrb[0].mxu0
    %v2671 = vadd.f32 %v351, %v2670
    %v2672 = vpop.f32.mrb[0].mxu0
    %v2673 = vadd.f32 %v355, %v2672
    %v2674 = vpop.f32.mrb[0].mxu0
    %v2675 = vadd.f32 %v351, %v2674
    %v2676 = vpop.f32.mrb[0].mxu0
    %v2677 = vadd.f32 %v355, %v2676
    %2678 = vmatprep.mubr.bf16.mxu0 %v865
    %2679 = vmatmul.mubr.bf16.gmra.mrb[0].mxu0 %v864
    %v2680 = vpop.f32.mrb[0].mxu0
    %v2681 = vadd.f32 %v351, %v2680
    %v2682 = vpop.f32.mrb[0].mxu0
    %v2683 = vadd.f32 %v355, %v2682
    %v2684 = vpop.f32.mrb[0].mxu0
    %v2685 = vadd.f32 %v351, %v2684
    %v2686 = vpop.f32.mrb[0].mxu0
    %v2687 = vadd.f32 %v355, %v2686
    %2688 = vmatprep.mubr.bf16.mxu0 %v869
    %2689 = vmatmul.mubr.bf16.gmra.mrb[0].mxu0 %v868
    %v2690 = vpop.f32.mrb[0].mxu0
    %v2691 = vadd.f32 %v351, %v2690
    %v2692 = vpop.f32.mrb[0].mxu0
    %v2693 = vadd.f32 %v355, %v2692
    %v2694 = vpop.f32.mrb[0].mxu0
    %v2695 = vadd.f32 %v351, %v2694
    %v2696 = vpop.f32.mrb[0].mxu0
    %v2697 = vadd.f32 %v355, %v2696
    %2698 = vdwg.mxu0
    %2699 = vmatprep.subr.bf16.mxu0 %v1451
    %2700 = vmatpush1.bf16.msra.mxu0 %v1450
    %2701 = vmatprep.subr.bf16.mxu0 %v1455
    %2702 = vmatpush1.bf16.msra.mxu0 %v1454
    %2703 = vmatprep.subr.bf16.mxu0 %v1459
    %2704 = vmatpush1.bf16.msra.mxu0 %v1458
    %2705 = vmatprep.subr.bf16.mxu0 %v1463
    %2706 = vmatpush1.bf16.msra.mxu0 %v1462
    %2707 = vmatprep.subr.bf16.mxu0 %v1467
    %2708 = vmatpush1.bf16.msra.mxu0 %v1466
    %2709 = vmatprep.subr.bf16.mxu0 %v1471
    %2710 = vmatpush1.bf16.msra.mxu0 %v1470
    %2711 = vmatprep.subr.bf16.mxu0 %v1475
    %2712 = vmatpush1.bf16.msra.mxu0 %v1474
    %2713 = vmatprep.subr.bf16.mxu0 %v1479
    %2714 = vmatpush1.bf16.msra.mxu0 %v1478
    %2715 = vmatprep.subr.bf16.mxu0 %v1483
    %2716 = vmatpush1.bf16.msra.mxu0 %v1482
    %2717 = vmatprep.subr.bf16.mxu0 %v1487
    %2718 = vmatpush1.bf16.msra.mxu0 %v1486
    %2719 = vmatprep.subr.bf16.mxu0 %v1491
    %2720 = vmatpush1.bf16.msra.mxu0 %v1490
    %2721 = vmatprep.subr.bf16.mxu0 %v1495
    %2722 = vmatpush1.bf16.msra.mxu0 %v1494
    %2723 = vmatprep.subr.bf16.mxu0 %v1499
    %2724 = vmatpush1.bf16.msra.mxu0 %v1498
    %2725 = vmatprep.subr.bf16.mxu0 %v1503
    %2726 = vmatpush1.bf16.msra.mxu0 %v1502
    %2727 = vmatprep.subr.bf16.mxu0 %v1507
    %2728 = vmatpush1.bf16.msra.mxu0 %v1506
    %2729 = vmatprep.subr.bf16.mxu0 %v1511
    %2730 = vmatpush1.bf16.msra.mxu0 %v1510
    %2731 = vmatprep.mubr.bf16.mxu0 %v747
    %2732 = vmatmul.mubr.bf16.gmra.mrb[0].mxu0 %v746
    %v2733 = vpop.f32.mrb[0].mxu0
    %v2734 = vadd.f32 %v2381, %v2733
    %v2735 = vpop.f32.mrb[0].mxu0
    %v2736 = vadd.f32 %v2383, %v2735
    %v2737 = vpop.f32.mrb[0].mxu0
    %v2738 = vadd.f32 %v2385, %v2737
    %v2739 = vpop.f32.mrb[0].mxu0
    %v2740 = vadd.f32 %v2387, %v2739
    %2741 = vmatprep.mubr.bf16.mxu0 %v751
    %2742 = vmatmul.mubr.bf16.gmra.mrb[0].mxu0 %v750
    %v2743 = vpop.f32.mrb[0].mxu0
    %v2744 = vadd.f32 %v2391, %v2743
    %v2745 = vpop.f32.mrb[0].mxu0
    %v2746 = vadd.f32 %v2393, %v2745
    %v2747 = vpop.f32.mrb[0].mxu0
    %v2748 = vadd.f32 %v2395, %v2747
    %v2749 = vpop.f32.mrb[0].mxu0
    %v2750 = vadd.f32 %v2397, %v2749
    %2751 = vmatprep.mubr.bf16.mxu0 %v755
    %2752 = vmatmul.mubr.bf16.gmra.mrb[0].mxu0 %v754
    %v2753 = vpop.f32.mrb[0].mxu0
    %v2754 = vadd.f32 %v2401, %v2753
    %v2755 = vpop.f32.mrb[0].mxu0
    %v2756 = vadd.f32 %v2403, %v2755
    %v2757 = vpop.f32.mrb[0].mxu0
    %v2758 = vadd.f32 %v2405, %v2757
    %v2759 = vpop.f32.mrb[0].mxu0
    %v2760 = vadd.f32 %v2407, %v2759
    %2761 = vmatprep.mubr.bf16.mxu0 %v759
    %2762 = vmatmul.mubr.bf16.gmra.mrb[0].mxu0 %v758
    %v2763 = vpop.f32.mrb[0].mxu0
    %v2764 = vadd.f32 %v2411, %v2763
    %v2765 = vpop.f32.mrb[0].mxu0
    %v2766 = vadd.f32 %v2413, %v2765
    %v2767 = vpop.f32.mrb[0].mxu0
    %v2768 = vadd.f32 %v2415, %v2767
    %v2769 = vpop.f32.mrb[0].mxu0
    %v2770 = vadd.f32 %v2417, %v2769
    %2771 = vmatprep.mubr.bf16.mxu0 %v763
    %2772 = vmatmul.mubr.bf16.gmra.mrb[0].mxu0 %v762
    %v2773 = vpop.f32.mrb[0].mxu0
    %v2774 = vadd.f32 %v2421, %v2773
    %v2775 = vpop.f32.mrb[0].mxu0
    %v2776 = vadd.f32 %v2423, %v2775
    %v2777 = vpop.f32.mrb[0].mxu0
    %v2778 = vadd.f32 %v2425, %v2777
    %v2779 = vpop.f32.mrb[0].mxu0
    %v2780 = vadd.f32 %v2427, %v2779
    %2781 = vmatprep.mubr.bf16.mxu0 %v767
    %2782 = vmatmul.mubr.bf16.gmra.mrb[0].mxu0 %v766
    %v2783 = vpop.f32.mrb[0].mxu0
    %v2784 = vadd.f32 %v2431, %v2783
    %v2785 = vpop.f32.mrb[0].mxu0
    %v2786 = vadd.f32 %v2433, %v2785
    %v2787 = vpop.f32.mrb[0].mxu0
    %v2788 = vadd.f32 %v2435, %v2787
    %v2789 = vpop.f32.mrb[0].mxu0
    %v2790 = vadd.f32 %v2437, %v2789
    %2791 = vmatprep.mubr.bf16.mxu0 %v771
    %2792 = vmatmul.mubr.bf16.gmra.mrb[0].mxu0 %v770
    %v2793 = vpop.f32.mrb[0].mxu0
    %v2794 = vadd.f32 %v2441, %v2793
    %v2795 = vpop.f32.mrb[0].mxu0
    %v2796 = vadd.f32 %v2443, %v2795
    %v2797 = vpop.f32.mrb[0].mxu0
    %v2798 = vadd.f32 %v2445, %v2797
    %v2799 = vpop.f32.mrb[0].mxu0
    %v2800 = vadd.f32 %v2447, %v2799
    %2801 = vmatprep.mubr.bf16.mxu0 %v775
    %2802 = vmatmul.mubr.bf16.gmra.mrb[0].mxu0 %v774
    %v2803 = vpop.f32.mrb[0].mxu0
    %v2804 = vadd.f32 %v2451, %v2803
    %v2805 = vpop.f32.mrb[0].mxu0
    %v2806 = vadd.f32 %v2453, %v2805
    %v2807 = vpop.f32.mrb[0].mxu0
    %v2808 = vadd.f32 %v2455, %v2807
    %v2809 = vpop.f32.mrb[0].mxu0
    %v2810 = vadd.f32 %v2457, %v2809
    %2811 = vmatprep.mubr.bf16.mxu0 %v779
    %2812 = vmatmul.mubr.bf16.gmra.mrb[0].mxu0 %v778
    %v2813 = vpop.f32.mrb[0].mxu0
    %v2814 = vadd.f32 %v2461, %v2813
    %v2815 = vpop.f32.mrb[0].mxu0
    %v2816 = vadd.f32 %v2463, %v2815
    %v2817 = vpop.f32.mrb[0].mxu0
    %v2818 = vadd.f32 %v2465, %v2817
    %v2819 = vpop.f32.mrb[0].mxu0
    %v2820 = vadd.f32 %v2467, %v2819
    %2821 = vmatprep.mubr.bf16.mxu0 %v783
    %2822 = vmatmul.mubr.bf16.gmra.mrb[0].mxu0 %v782
    %v2823 = vpop.f32.mrb[0].mxu0
    %v2824 = vadd.f32 %v2471, %v2823
    %v2825 = vpop.f32.mrb[0].mxu0
    %v2826 = vadd.f32 %v2473, %v2825
    %v2827 = vpop.f32.mrb[0].mxu0
    %v2828 = vadd.f32 %v2475, %v2827
    %v2829 = vpop.f32.mrb[0].mxu0
    %v2830 = vadd.f32 %v2477, %v2829
    %2831 = vmatprep.mubr.bf16.mxu0 %v787
    %2832 = vmatmul.mubr.bf16.gmra.mrb[0].mxu0 %v786
    %v2833 = vpop.f32.mrb[0].mxu0
    %v2834 = vadd.f32 %v2481, %v2833
    %v2835 = vpop.f32.mrb[0].mxu0
    %v2836 = vadd.f32 %v2483, %v2835
    %v2837 = vpop.f32.mrb[0].mxu0
    %v2838 = vadd.f32 %v2485, %v2837
    %v2839 = vpop.f32.mrb[0].mxu0
    %v2840 = vadd.f32 %v2487, %v2839
    %2841 = vmatprep.mubr.bf16.mxu0 %v791
    %2842 = vmatmul.mubr.bf16.gmra.mrb[0].mxu0 %v790
    %v2843 = vpop.f32.mrb[0].mxu0
    %v2844 = vadd.f32 %v2491, %v2843
    %v2845 = vpop.f32.mrb[0].mxu0
    %v2846 = vadd.f32 %v2493, %v2845
    %v2847 = vpop.f32.mrb[0].mxu0
    %v2848 = vadd.f32 %v2495, %v2847
    %v2849 = vpop.f32.mrb[0].mxu0
    %v2850 = vadd.f32 %v2497, %v2849
    %2851 = vmatprep.mubr.bf16.mxu0 %v795
    %2852 = vmatmul.mubr.bf16.gmra.mrb[0].mxu0 %v794
    %v2853 = vpop.f32.mrb[0].mxu0
    %v2854 = vadd.f32 %v2501, %v2853
    %v2855 = vpop.f32.mrb[0].mxu0
    %v2856 = vadd.f32 %v2503, %v2855
    %v2857 = vpop.f32.mrb[0].mxu0
    %v2858 = vadd.f32 %v2505, %v2857
    %v2859 = vpop.f32.mrb[0].mxu0
    %v2860 = vadd.f32 %v2507, %v2859
    %2861 = vmatprep.mubr.bf16.mxu0 %v799
    %2862 = vmatmul.mubr.bf16.gmra.mrb[0].mxu0 %v798
    %v2863 = vpop.f32.mrb[0].mxu0
    %v2864 = vadd.f32 %v2511, %v2863
    %v2865 = vpop.f32.mrb[0].mxu0
    %v2866 = vadd.f32 %v2513, %v2865
    %v2867 = vpop.f32.mrb[0].mxu0
    %v2868 = vadd.f32 %v2515, %v2867
    %v2869 = vpop.f32.mrb[0].mxu0
    %v2870 = vadd.f32 %v2517, %v2869
    %2871 = vmatprep.mubr.bf16.mxu0 %v803
    %2872 = vmatmul.mubr.bf16.gmra.mrb[0].mxu0 %v802
    %v2873 = vpop.f32.mrb[0].mxu0
    %v2874 = vadd.f32 %v2521, %v2873
    %v2875 = vpop.f32.mrb[0].mxu0
    %v2876 = vadd.f32 %v2523, %v2875
    %v2877 = vpop.f32.mrb[0].mxu0
    %v2878 = vadd.f32 %v2525, %v2877
    %v2879 = vpop.f32.mrb[0].mxu0
    %v2880 = vadd.f32 %v2527, %v2879
    %2881 = vmatprep.mubr.bf16.mxu0 %v807
    %2882 = vmatmul.mubr.bf16.gmra.mrb[0].mxu0 %v806
    %v2883 = vpop.f32.mrb[0].mxu0
    %v2884 = vadd.f32 %v2531, %v2883
    %v2885 = vpop.f32.mrb[0].mxu0
    %v2886 = vadd.f32 %v2533, %v2885
    %v2887 = vpop.f32.mrb[0].mxu0
    %v2888 = vadd.f32 %v2535, %v2887
    %v2889 = vpop.f32.mrb[0].mxu0
    %v2890 = vadd.f32 %v2537, %v2889
    %2891 = vmatprep.mubr.bf16.mxu0 %v811
    %2892 = vmatmul.mubr.bf16.gmra.mrb[0].mxu0 %v810
    %v2893 = vpop.f32.mrb[0].mxu0
    %v2894 = vadd.f32 %v2541, %v2893
    %v2895 = vpop.f32.mrb[0].mxu0
    %v2896 = vadd.f32 %v2543, %v2895
    %v2897 = vpop.f32.mrb[0].mxu0
    %v2898 = vadd.f32 %v2545, %v2897
    %v2899 = vpop.f32.mrb[0].mxu0
    %v2900 = vadd.f32 %v2547, %v2899
    %2901 = vmatprep.mubr.bf16.mxu0 %v815
    %2902 = vmatmul.mubr.bf16.gmra.mrb[0].mxu0 %v814
    %v2903 = vpop.f32.mrb[0].mxu0
    %v2904 = vadd.f32 %v2551, %v2903
    %v2905 = vpop.f32.mrb[0].mxu0
    %v2906 = vadd.f32 %v2553, %v2905
    %v2907 = vpop.f32.mrb[0].mxu0
    %v2908 = vadd.f32 %v2555, %v2907
    %v2909 = vpop.f32.mrb[0].mxu0
    %v2910 = vadd.f32 %v2557, %v2909
    %2911 = vmatprep.mubr.bf16.mxu0 %v819
    %2912 = vmatmul.mubr.bf16.gmra.mrb[0].mxu0 %v818
    %v2913 = vpop.f32.mrb[0].mxu0
    %v2914 = vadd.f32 %v2561, %v2913
    %v2915 = vpop.f32.mrb[0].mxu0
    %v2916 = vadd.f32 %v2563, %v2915
    %v2917 = vpop.f32.mrb[0].mxu0
    %v2918 = vadd.f32 %v2565, %v2917
    %v2919 = vpop.f32.mrb[0].mxu0
    %v2920 = vadd.f32 %v2567, %v2919
    %2921 = vmatprep.mubr.bf16.mxu0 %v823
    %2922 = vmatmul.mubr.bf16.gmra.mrb[0].mxu0 %v822
    %v2923 = vpop.f32.mrb[0].mxu0
    %v2924 = vadd.f32 %v2571, %v2923
    %v2925 = vpop.f32.mrb[0].mxu0
    %v2926 = vadd.f32 %v2573, %v2925
    %v2927 = vpop.f32.mrb[0].mxu0
    %v2928 = vadd.f32 %v2575, %v2927
    %v2929 = vpop.f32.mrb[0].mxu0
    %v2930 = vadd.f32 %v2577, %v2929
    %2931 = vmatprep.mubr.bf16.mxu0 %v827
    %2932 = vmatmul.mubr.bf16.gmra.mrb[0].mxu0 %v826
    %v2933 = vpop.f32.mrb[0].mxu0
    %v2934 = vadd.f32 %v2581, %v2933
    %v2935 = vpop.f32.mrb[0].mxu0
    %v2936 = vadd.f32 %v2583, %v2935
    %v2937 = vpop.f32.mrb[0].mxu0
    %v2938 = vadd.f32 %v2585, %v2937
    %v2939 = vpop.f32.mrb[0].mxu0
    %v2940 = vadd.f32 %v2587, %v2939
    %2941 = vmatprep.mubr.bf16.mxu0 %v831
    %2942 = vmatmul.mubr.bf16.gmra.mrb[0].mxu0 %v830
    %v2943 = vpop.f32.mrb[0].mxu0
    %v2944 = vadd.f32 %v2591, %v2943
    %v2945 = vpop.f32.mrb[0].mxu0
    %v2946 = vadd.f32 %v2593, %v2945
    %v2947 = vpop.f32.mrb[0].mxu0
    %v2948 = vadd.f32 %v2595, %v2947
    %v2949 = vpop.f32.mrb[0].mxu0
    %v2950 = vadd.f32 %v2597, %v2949
    %2951 = vmatprep.mubr.bf16.mxu0 %v835
    %2952 = vmatmul.mubr.bf16.gmra.mrb[0].mxu0 %v834
    %v2953 = vpop.f32.mrb[0].mxu0
    %v2954 = vadd.f32 %v2601, %v2953
    %v2955 = vpop.f32.mrb[0].mxu0
    %v2956 = vadd.f32 %v2603, %v2955
    %v2957 = vpop.f32.mrb[0].mxu0
    %v2958 = vadd.f32 %v2605, %v2957
    %v2959 = vpop.f32.mrb[0].mxu0
    %v2960 = vadd.f32 %v2607, %v2959
    %2961 = vmatprep.mubr.bf16.mxu0 %v839
    %2962 = vmatmul.mubr.bf16.gmra.mrb[0].mxu0 %v838
    %v2963 = vpop.f32.mrb[0].mxu0
    %v2964 = vadd.f32 %v2611, %v2963
    %v2965 = vpop.f32.mrb[0].mxu0
    %v2966 = vadd.f32 %v2613, %v2965
    %v2967 = vpop.f32.mrb[0].mxu0
    %v2968 = vadd.f32 %v2615, %v2967
    %v2969 = vpop.f32.mrb[0].mxu0
    %v2970 = vadd.f32 %v2617, %v2969
    %2971 = vmatprep.mubr.bf16.mxu0 %v843
    %2972 = vmatmul.mubr.bf16.gmra.mrb[0].mxu0 %v842
    %v2973 = vpop.f32.mrb[0].mxu0
    %v2974 = vadd.f32 %v2621, %v2973
    %v2975 = vpop.f32.mrb[0].mxu0
    %v2976 = vadd.f32 %v2623, %v2975
    %v2977 = vpop.f32.mrb[0].mxu0
    %v2978 = vadd.f32 %v2625, %v2977
    %v2979 = vpop.f32.mrb[0].mxu0
    %v2980 = vadd.f32 %v2627, %v2979
    %2981 = vmatprep.mubr.bf16.mxu0 %v847
    %2982 = vmatmul.mubr.bf16.gmra.mrb[0].mxu0 %v846
    %v2983 = vpop.f32.mrb[0].mxu0
    %v2984 = vadd.f32 %v2631, %v2983
    %v2985 = vpop.f32.mrb[0].mxu0
    %v2986 = vadd.f32 %v2633, %v2985
    %v2987 = vpop.f32.mrb[0].mxu0
    %v2988 = vadd.f32 %v2635, %v2987
    %v2989 = vpop.f32.mrb[0].mxu0
    %v2990 = vadd.f32 %v2637, %v2989
    %2991 = vmatprep.mubr.bf16.mxu0 %v851
    %2992 = vmatmul.mubr.bf16.gmra.mrb[0].mxu0 %v850
    %v2993 = vpop.f32.mrb[0].mxu0
    %v2994 = vadd.f32 %v2641, %v2993
    %v2995 = vpop.f32.mrb[0].mxu0
    %v2996 = vadd.f32 %v2643, %v2995
    %v2997 = vpop.f32.mrb[0].mxu0
    %v2998 = vadd.f32 %v2645, %v2997
    %v2999 = vpop.f32.mrb[0].mxu0
    %v3000 = vadd.f32 %v2647, %v2999
    %3001 = vmatprep.mubr.bf16.mxu0 %v855
    %3002 = vmatmul.mubr.bf16.gmra.mrb[0].mxu0 %v854
    %v3003 = vpop.f32.mrb[0].mxu0
    %v3004 = vadd.f32 %v2651, %v3003
    %v3005 = vpop.f32.mrb[0].mxu0
    %v3006 = vadd.f32 %v2653, %v3005
    %v3007 = vpop.f32.mrb[0].mxu0
    %v3008 = vadd.f32 %v2655, %v3007
    %v3009 = vpop.f32.mrb[0].mxu0
    %v3010 = vadd.f32 %v2657, %v3009
    %3011 = vmatprep.mubr.bf16.mxu0 %v859
    %3012 = vmatmul.mubr.bf16.gmra.mrb[0].mxu0 %v858
    %v3013 = vpop.f32.mrb[0].mxu0
    %v3014 = vadd.f32 %v2661, %v3013
    %v3015 = vpop.f32.mrb[0].mxu0
    %v3016 = vadd.f32 %v2663, %v3015
    %v3017 = vpop.f32.mrb[0].mxu0
    %v3018 = vadd.f32 %v2665, %v3017
    %v3019 = vpop.f32.mrb[0].mxu0
    %v3020 = vadd.f32 %v2667, %v3019
    %3021 = vmatprep.mubr.bf16.mxu0 %v863
    %3022 = vmatmul.mubr.bf16.gmra.mrb[0].mxu0 %v862
    %v3023 = vpop.f32.mrb[0].mxu0
    %v3024 = vadd.f32 %v2671, %v3023
    %v3025 = vpop.f32.mrb[0].mxu0
    %v3026 = vadd.f32 %v2673, %v3025
    %v3027 = vpop.f32.mrb[0].mxu0
    %v3028 = vadd.f32 %v2675, %v3027
    %v3029 = vpop.f32.mrb[0].mxu0
    %v3030 = vadd.f32 %v2677, %v3029
    %3031 = vmatprep.mubr.bf16.mxu0 %v867
    %3032 = vmatmul.mubr.bf16.gmra.mrb[0].mxu0 %v866
    %v3033 = vpop.f32.mrb[0].mxu0
    %v3034 = vadd.f32 %v2681, %v3033
    %v3035 = vpop.f32.mrb[0].mxu0
    %v3036 = vadd.f32 %v2683, %v3035
    %v3037 = vpop.f32.mrb[0].mxu0
    %v3038 = vadd.f32 %v2685, %v3037
    %v3039 = vpop.f32.mrb[0].mxu0
    %v3040 = vadd.f32 %v2687, %v3039
    %3041 = vmatprep.mubr.bf16.mxu0 %v871
    %3042 = vmatmul.mubr.bf16.gmra.mrb[0].mxu0 %v870
    %v3043 = vpop.f32.mrb[0].mxu0
    %v3044 = vadd.f32 %v2691, %v3043
    %v3045 = vpop.f32.mrb[0].mxu0
    %v3046 = vadd.f32 %v2693, %v3045
    %v3047 = vpop.f32.mrb[0].mxu0
    %v3048 = vadd.f32 %v2695, %v3047
    %v3049 = vpop.f32.mrb[0].mxu0
    %v3050 = vadd.f32 %v2697, %v3049
    %3051 = vdwg.mxu0
    %v3052 = vmax.f32 %v2028, 0.0
    %v3053 = vmax.f32 %v2030, 0.0
    %v3054 = vmax.f32 %v2734, 0.0
    %v3055 = vmax.f32 %v2736, 0.0
    %v3056 = vmax.f32 %v2032, 0.0
    %v3057 = vmax.f32 %v2034, 0.0
    %v3058 = vmax.f32 %v2738, 0.0
    %v3059 = vmax.f32 %v2740, 0.0
    %v3060 = vmax.f32 %v2038, 0.0
    %v3061 = vmax.f32 %v2040, 0.0
    %v3062 = vmax.f32 %v2744, 0.0
    %v3063 = vmax.f32 %v2746, 0.0
    %v3064 = vmax.f32 %v2042, 0.0
    %v3065 = vmax.f32 %v2044, 0.0
    %v3066 = vmax.f32 %v2748, 0.0
    %v3067 = vmax.f32 %v2750, 0.0
    %v3068 = vmax.f32 %v2048, 0.0
    %v3069 = vmax.f32 %v2050, 0.0
    %v3070 = vmax.f32 %v2754, 0.0
    %v3071 = vmax.f32 %v2756, 0.0
    %v3072 = vmax.f32 %v2052, 0.0
    %v3073 = vmax.f32 %v2054, 0.0
    %v3074 = vmax.f32 %v2758, 0.0
    %v3075 = vmax.f32 %v2760, 0.0
    %v3076 = vmax.f32 %v2058, 0.0
    %v3077 = vmax.f32 %v2060, 0.0
    %v3078 = vmax.f32 %v2764, 0.0
    %v3079 = vmax.f32 %v2766, 0.0
    %v3080 = vmax.f32 %v2062, 0.0
    %v3081 = vmax.f32 %v2064, 0.0
    %v3082 = vmax.f32 %v2768, 0.0
    %v3083 = vmax.f32 %v2770, 0.0
    %v3084 = vmax.f32 %v2068, 0.0
    %v3085 = vmax.f32 %v2070, 0.0
    %v3086 = vmax.f32 %v2774, 0.0
    %v3087 = vmax.f32 %v2776, 0.0
    %v3088 = vmax.f32 %v2072, 0.0
    %v3089 = vmax.f32 %v2074, 0.0
    %v3090 = vmax.f32 %v2778, 0.0
    %v3091 = vmax.f32 %v2780, 0.0
    %v3092 = vmax.f32 %v2078, 0.0
    %v3093 = vmax.f32 %v2080, 0.0
    %v3094 = vmax.f32 %v2784, 0.0
    %v3095 = vmax.f32 %v2786, 0.0
    %v3096 = vmax.f32 %v2082, 0.0
    %v3097 = vmax.f32 %v2084, 0.0
    %v3098 = vmax.f32 %v2788, 0.0
    %v3099 = vmax.f32 %v2790, 0.0
    %v3100 = vmax.f32 %v2088, 0.0
    %v3101 = vmax.f32 %v2090, 0.0
    %v3102 = vmax.f32 %v2794, 0.0
    %v3103 = vmax.f32 %v2796, 0.0
    %v3104 = vmax.f32 %v2092, 0.0
    %v3105 = vmax.f32 %v2094, 0.0
    %v3106 = vmax.f32 %v2798, 0.0
    %v3107 = vmax.f32 %v2800, 0.0
    %v3108 = vmax.f32 %v2098, 0.0
    %v3109 = vmax.f32 %v2100, 0.0
    %v3110 = vmax.f32 %v2804, 0.0
    %v3111 = vmax.f32 %v2806, 0.0
    %v3112 = vmax.f32 %v2102, 0.0
    %v3113 = vmax.f32 %v2104, 0.0
    %v3114 = vmax.f32 %v2808, 0.0
    %v3115 = vmax.f32 %v2810, 0.0
    %v3116 = vmax.f32 %v2108, 0.0
    %v3117 = vmax.f32 %v2110, 0.0
    %v3118 = vmax.f32 %v2814, 0.0
    %v3119 = vmax.f32 %v2816, 0.0
    %v3120 = vmax.f32 %v2112, 0.0
    %v3121 = vmax.f32 %v2114, 0.0
    %v3122 = vmax.f32 %v2818, 0.0
    %v3123 = vmax.f32 %v2820, 0.0
    %v3124 = vmax.f32 %v2118, 0.0
    %v3125 = vmax.f32 %v2120, 0.0
    %v3126 = vmax.f32 %v2824, 0.0
    %v3127 = vmax.f32 %v2826, 0.0
    %v3128 = vmax.f32 %v2122, 0.0
    %v3129 = vmax.f32 %v2124, 0.0
    %v3130 = vmax.f32 %v2828, 0.0
    %v3131 = vmax.f32 %v2830, 0.0
    %v3132 = vmax.f32 %v2128, 0.0
    %v3133 = vmax.f32 %v2130, 0.0
    %v3134 = vmax.f32 %v2834, 0.0
    %v3135 = vmax.f32 %v2836, 0.0
    %v3136 = vmax.f32 %v2132, 0.0
    %v3137 = vmax.f32 %v2134, 0.0
    %v3138 = vmax.f32 %v2838, 0.0
    %v3139 = vmax.f32 %v2840, 0.0
    %v3140 = vmax.f32 %v2138, 0.0
    %v3141 = vmax.f32 %v2140, 0.0
    %v3142 = vmax.f32 %v2844, 0.0
    %v3143 = vmax.f32 %v2846, 0.0
    %v3144 = vmax.f32 %v2142, 0.0
    %v3145 = vmax.f32 %v2144, 0.0
    %v3146 = vmax.f32 %v2848, 0.0
    %v3147 = vmax.f32 %v2850, 0.0
    %v3148 = vmax.f32 %v2148, 0.0
    %v3149 = vmax.f32 %v2150, 0.0
    %v3150 = vmax.f32 %v2854, 0.0
    %v3151 = vmax.f32 %v2856, 0.0
    %v3152 = vmax.f32 %v2152, 0.0
    %v3153 = vmax.f32 %v2154, 0.0
    %v3154 = vmax.f32 %v2858, 0.0
    %v3155 = vmax.f32 %v2860, 0.0
    %v3156 = vmax.f32 %v2158, 0.0
    %v3157 = vmax.f32 %v2160, 0.0
    %v3158 = vmax.f32 %v2864, 0.0
    %v3159 = vmax.f32 %v2866, 0.0
    %v3160 = vmax.f32 %v2162, 0.0
    %v3161 = vmax.f32 %v2164, 0.0
    %v3162 = vmax.f32 %v2868, 0.0
    %v3163 = vmax.f32 %v2870, 0.0
    %v3164 = vmax.f32 %v2168, 0.0
    %v3165 = vmax.f32 %v2170, 0.0
    %v3166 = vmax.f32 %v2874, 0.0
    %v3167 = vmax.f32 %v2876, 0.0
    %v3168 = vmax.f32 %v2172, 0.0
    %v3169 = vmax.f32 %v2174, 0.0
    %v3170 = vmax.f32 %v2878, 0.0
    %v3171 = vmax.f32 %v2880, 0.0
    %v3172 = vmax.f32 %v2178, 0.0
    %v3173 = vmax.f32 %v2180, 0.0
    %v3174 = vmax.f32 %v2884, 0.0
    %v3175 = vmax.f32 %v2886, 0.0
    %v3176 = vmax.f32 %v2182, 0.0
    %v3177 = vmax.f32 %v2184, 0.0
    %v3178 = vmax.f32 %v2888, 0.0
    %v3179 = vmax.f32 %v2890, 0.0
    %v3180 = vmax.f32 %v2188, 0.0
    %v3181 = vmax.f32 %v2190, 0.0
    %v3182 = vmax.f32 %v2894, 0.0
    %v3183 = vmax.f32 %v2896, 0.0
    %v3184 = vmax.f32 %v2192, 0.0
    %v3185 = vmax.f32 %v2194, 0.0
    %v3186 = vmax.f32 %v2898, 0.0
    %v3187 = vmax.f32 %v2900, 0.0
    %v3188 = vmax.f32 %v2198, 0.0
    %v3189 = vmax.f32 %v2200, 0.0
    %v3190 = vmax.f32 %v2904, 0.0
    %v3191 = vmax.f32 %v2906, 0.0
    %v3192 = vmax.f32 %v2202, 0.0
    %v3193 = vmax.f32 %v2204, 0.0
    %v3194 = vmax.f32 %v2908, 0.0
    %v3195 = vmax.f32 %v2910, 0.0
    %v3196 = vmax.f32 %v2208, 0.0
    %v3197 = vmax.f32 %v2210, 0.0
    %v3198 = vmax.f32 %v2914, 0.0
    %v3199 = vmax.f32 %v2916, 0.0
    %v3200 = vmax.f32 %v2212, 0.0
    %v3201 = vmax.f32 %v2214, 0.0
    %v3202 = vmax.f32 %v2918, 0.0
    %v3203 = vmax.f32 %v2920, 0.0
    %v3204 = vmax.f32 %v2218, 0.0
    %v3205 = vmax.f32 %v2220, 0.0
    %v3206 = vmax.f32 %v2924, 0.0
    %v3207 = vmax.f32 %v2926, 0.0
    %v3208 = vmax.f32 %v2222, 0.0
    %v3209 = vmax.f32 %v2224, 0.0
    %v3210 = vmax.f32 %v2928, 0.0
    %v3211 = vmax.f32 %v2930, 0.0
    %v3212 = vmax.f32 %v2228, 0.0
    %v3213 = vmax.f32 %v2230, 0.0
    %v3214 = vmax.f32 %v2934, 0.0
    %v3215 = vmax.f32 %v2936, 0.0
    %v3216 = vmax.f32 %v2232, 0.0
    %v3217 = vmax.f32 %v2234, 0.0
    %v3218 = vmax.f32 %v2938, 0.0
    %v3219 = vmax.f32 %v2940, 0.0
    %v3220 = vmax.f32 %v2238, 0.0
    %v3221 = vmax.f32 %v2240, 0.0
    %v3222 = vmax.f32 %v2944, 0.0
    %v3223 = vmax.f32 %v2946, 0.0
    %v3224 = vmax.f32 %v2242, 0.0
    %v3225 = vmax.f32 %v2244, 0.0
    %v3226 = vmax.f32 %v2948, 0.0
    %v3227 = vmax.f32 %v2950, 0.0
    %v3228 = vmax.f32 %v2248, 0.0
    %v3229 = vmax.f32 %v2250, 0.0
    %v3230 = vmax.f32 %v2954, 0.0
    %v3231 = vmax.f32 %v2956, 0.0
    %v3232 = vmax.f32 %v2252, 0.0
    %v3233 = vmax.f32 %v2254, 0.0
    %v3234 = vmax.f32 %v2958, 0.0
    %v3235 = vmax.f32 %v2960, 0.0
    %v3236 = vmax.f32 %v2258, 0.0
    %v3237 = vmax.f32 %v2260, 0.0
    %v3238 = vmax.f32 %v2964, 0.0
    %v3239 = vmax.f32 %v2966, 0.0
    %v3240 = vmax.f32 %v2262, 0.0
    %v3241 = vmax.f32 %v2264, 0.0
    %v3242 = vmax.f32 %v2968, 0.0
    %v3243 = vmax.f32 %v2970, 0.0
    %v3244 = vmax.f32 %v2268, 0.0
    %v3245 = vmax.f32 %v2270, 0.0
    %v3246 = vmax.f32 %v2974, 0.0
    %v3247 = vmax.f32 %v2976, 0.0
    %v3248 = vmax.f32 %v2272, 0.0
    %v3249 = vmax.f32 %v2274, 0.0
    %v3250 = vmax.f32 %v2978, 0.0
    %v3251 = vmax.f32 %v2980, 0.0
    %v3252 = vmax.f32 %v2278, 0.0
    %v3253 = vmax.f32 %v2280, 0.0
    %v3254 = vmax.f32 %v2984, 0.0
    %v3255 = vmax.f32 %v2986, 0.0
    %v3256 = vmax.f32 %v2282, 0.0
    %v3257 = vmax.f32 %v2284, 0.0
    %v3258 = vmax.f32 %v2988, 0.0
    %v3259 = vmax.f32 %v2990, 0.0
    %v3260 = vmax.f32 %v2288, 0.0
    %v3261 = vmax.f32 %v2290, 0.0
    %v3262 = vmax.f32 %v2994, 0.0
    %v3263 = vmax.f32 %v2996, 0.0
    %v3264 = vmax.f32 %v2292, 0.0
    %v3265 = vmax.f32 %v2294, 0.0
    %v3266 = vmax.f32 %v2998, 0.0
    %v3267 = vmax.f32 %v3000, 0.0
    %v3268 = vmax.f32 %v2298, 0.0
    %v3269 = vmax.f32 %v2300, 0.0
    %v3270 = vmax.f32 %v3004, 0.0
    %v3271 = vmax.f32 %v3006, 0.0
    %v3272 = vmax.f32 %v2302, 0.0
    %v3273 = vmax.f32 %v2304, 0.0
    %v3274 = vmax.f32 %v3008, 0.0
    %v3275 = vmax.f32 %v3010, 0.0
    %v3276 = vmax.f32 %v2308, 0.0
    %v3277 = vmax.f32 %v2310, 0.0
    %v3278 = vmax.f32 %v3014, 0.0
    %v3279 = vmax.f32 %v3016, 0.0
    %v3280 = vmax.f32 %v2312, 0.0
    %v3281 = vmax.f32 %v2314, 0.0
    %v3282 = vmax.f32 %v3018, 0.0
    %v3283 = vmax.f32 %v3020, 0.0
    %v3284 = vmax.f32 %v2318, 0.0
    %v3285 = vmax.f32 %v2320, 0.0
    %v3286 = vmax.f32 %v3024, 0.0
    %v3287 = vmax.f32 %v3026, 0.0
    %v3288 = vmax.f32 %v2322, 0.0
    %v3289 = vmax.f32 %v2324, 0.0
    %v3290 = vmax.f32 %v3028, 0.0
    %v3291 = vmax.f32 %v3030, 0.0
    %v3292 = vmax.f32 %v2328, 0.0
    %v3293 = vmax.f32 %v2330, 0.0
    %v3294 = vmax.f32 %v3034, 0.0
    %v3295 = vmax.f32 %v3036, 0.0
    %v3296 = vmax.f32 %v2332, 0.0
    %v3297 = vmax.f32 %v2334, 0.0
    %v3298 = vmax.f32 %v3038, 0.0
    %v3299 = vmax.f32 %v3040, 0.0
    %v3300 = vmax.f32 %v2338, 0.0
    %v3301 = vmax.f32 %v2340, 0.0
    %v3302 = vmax.f32 %v3044, 0.0
    %v3303 = vmax.f32 %v3046, 0.0
    %v3304 = vmax.f32 %v2342, 0.0
    %v3305 = vmax.f32 %v2344, 0.0
    %v3306 = vmax.f32 %v3048, 0.0
    %v3307 = vmax.f32 %v3050, 0.0
    %v3308 = vpack.c.bf16 %v3056, %v3052
    %v3309 = vpack.c.bf16 %v3057, %v3053
    %v3310 = vpack.c.bf16 %v3058, %v3054
    %v3311 = vpack.c.bf16 %v3059, %v3055
    %v3312 = vpack.c.bf16 %v3064, %v3060
    %v3313 = vpack.c.bf16 %v3065, %v3061
    %v3314 = vpack.c.bf16 %v3066, %v3062
    %v3315 = vpack.c.bf16 %v3067, %v3063
    %v3316 = vpack.c.bf16 %v3072, %v3068
    %v3317 = vpack.c.bf16 %v3073, %v3069
    %v3318 = vpack.c.bf16 %v3074, %v3070
    %v3319 = vpack.c.bf16 %v3075, %v3071
    %v3320 = vpack.c.bf16 %v3080, %v3076
    %v3321 = vpack.c.bf16 %v3081, %v3077
    %v3322 = vpack.c.bf16 %v3082, %v3078
    %v3323 = vpack.c.bf16 %v3083, %v3079
    %v3324 = vpack.c.bf16 %v3088, %v3084
    %v3325 = vpack.c.bf16 %v3089, %v3085
    %v3326 = vpack.c.bf16 %v3090, %v3086
    %v3327 = vpack.c.bf16 %v3091, %v3087
    %v3328 = vpack.c.bf16 %v3096, %v3092
    %v3329 = vpack.c.bf16 %v3097, %v3093
    %v3330 = vpack.c.bf16 %v3098, %v3094
    %v3331 = vpack.c.bf16 %v3099, %v3095
    %v3332 = vpack.c.bf16 %v3104, %v3100
    %v3333 = vpack.c.bf16 %v3105, %v3101
    %v3334 = vpack.c.bf16 %v3106, %v3102
    %v3335 = vpack.c.bf16 %v3107, %v3103
    %v3336 = vpack.c.bf16 %v3112, %v3108
    %v3337 = vpack.c.bf16 %v3113, %v3109
    %v3338 = vpack.c.bf16 %v3114, %v3110
    %v3339 = vpack.c.bf16 %v3115, %v3111
    %v3340 = vpack.c.bf16 %v3120, %v3116
    %v3341 = vpack.c.bf16 %v3121, %v3117
    %v3342 = vpack.c.bf16 %v3122, %v3118
    %v3343 = vpack.c.bf16 %v3123, %v3119
    %v3344 = vpack.c.bf16 %v3128, %v3124
    %v3345 = vpack.c.bf16 %v3129, %v3125
    %v3346 = vpack.c.bf16 %v3130, %v3126
    %v3347 = vpack.c.bf16 %v3131, %v3127
    %v3348 = vpack.c.bf16 %v3136, %v3132
    %v3349 = vpack.c.bf16 %v3137, %v3133
    %v3350 = vpack.c.bf16 %v3138, %v3134
    %v3351 = vpack.c.bf16 %v3139, %v3135
    %v3352 = vpack.c.bf16 %v3144, %v3140
    %v3353 = vpack.c.bf16 %v3145, %v3141
    %v3354 = vpack.c.bf16 %v3146, %v3142
    %v3355 = vpack.c.bf16 %v3147, %v3143
    %v3356 = vpack.c.bf16 %v3152, %v3148
    %v3357 = vpack.c.bf16 %v3153, %v3149
    %v3358 = vpack.c.bf16 %v3154, %v3150
    %v3359 = vpack.c.bf16 %v3155, %v3151
    %v3360 = vpack.c.bf16 %v3160, %v3156
    %v3361 = vpack.c.bf16 %v3161, %v3157
    %v3362 = vpack.c.bf16 %v3162, %v3158
    %v3363 = vpack.c.bf16 %v3163, %v3159
    %v3364 = vpack.c.bf16 %v3168, %v3164
    %v3365 = vpack.c.bf16 %v3169, %v3165
    %v3366 = vpack.c.bf16 %v3170, %v3166
    %v3367 = vpack.c.bf16 %v3171, %v3167
    %v3368 = vpack.c.bf16 %v3176, %v3172
    %v3369 = vpack.c.bf16 %v3177, %v3173
    %v3370 = vpack.c.bf16 %v3178, %v3174
    %v3371 = vpack.c.bf16 %v3179, %v3175
    %v3372 = vpack.c.bf16 %v3184, %v3180
    %v3373 = vpack.c.bf16 %v3185, %v3181
    %v3374 = vpack.c.bf16 %v3186, %v3182
    %v3375 = vpack.c.bf16 %v3187, %v3183
    %v3376 = vpack.c.bf16 %v3192, %v3188
    %v3377 = vpack.c.bf16 %v3193, %v3189
    %v3378 = vpack.c.bf16 %v3194, %v3190
    %v3379 = vpack.c.bf16 %v3195, %v3191
    %v3380 = vpack.c.bf16 %v3200, %v3196
    %v3381 = vpack.c.bf16 %v3201, %v3197
    %v3382 = vpack.c.bf16 %v3202, %v3198
    %v3383 = vpack.c.bf16 %v3203, %v3199
    %v3384 = vpack.c.bf16 %v3208, %v3204
    %v3385 = vpack.c.bf16 %v3209, %v3205
    %v3386 = vpack.c.bf16 %v3210, %v3206
    %v3387 = vpack.c.bf16 %v3211, %v3207
    %v3388 = vpack.c.bf16 %v3216, %v3212
    %v3389 = vpack.c.bf16 %v3217, %v3213
    %v3390 = vpack.c.bf16 %v3218, %v3214
    %v3391 = vpack.c.bf16 %v3219, %v3215
    %v3392 = vpack.c.bf16 %v3224, %v3220
    %v3393 = vpack.c.bf16 %v3225, %v3221
    %v3394 = vpack.c.bf16 %v3226, %v3222
    %v3395 = vpack.c.bf16 %v3227, %v3223
    %v3396 = vpack.c.bf16 %v3232, %v3228
    %v3397 = vpack.c.bf16 %v3233, %v3229
    %v3398 = vpack.c.bf16 %v3234, %v3230
    %v3399 = vpack.c.bf16 %v3235, %v3231
    %v3400 = vpack.c.bf16 %v3240, %v3236
    %v3401 = vpack.c.bf16 %v3241, %v3237
    %v3402 = vpack.c.bf16 %v3242, %v3238
    %v3403 = vpack.c.bf16 %v3243, %v3239
    %v3404 = vpack.c.bf16 %v3248, %v3244
    %v3405 = vpack.c.bf16 %v3249, %v3245
    %v3406 = vpack.c.bf16 %v3250, %v3246
    %v3407 = vpack.c.bf16 %v3251, %v3247
    %v3408 = vpack.c.bf16 %v3256, %v3252
    %v3409 = vpack.c.bf16 %v3257, %v3253
    %v3410 = vpack.c.bf16 %v3258, %v3254
    %v3411 = vpack.c.bf16 %v3259, %v3255
    %v3412 = vpack.c.bf16 %v3264, %v3260
    %v3413 = vpack.c.bf16 %v3265, %v3261
    %v3414 = vpack.c.bf16 %v3266, %v3262
    %v3415 = vpack.c.bf16 %v3267, %v3263
    %v3416 = vpack.c.bf16 %v3272, %v3268
    %v3417 = vpack.c.bf16 %v3273, %v3269
    %v3418 = vpack.c.bf16 %v3274, %v3270
    %v3419 = vpack.c.bf16 %v3275, %v3271
    %v3420 = vpack.c.bf16 %v3280, %v3276
    %v3421 = vpack.c.bf16 %v3281, %v3277
    %v3422 = vpack.c.bf16 %v3282, %v3278
    %v3423 = vpack.c.bf16 %v3283, %v3279
    %v3424 = vpack.c.bf16 %v3288, %v3284
    %v3425 = vpack.c.bf16 %v3289, %v3285
    %v3426 = vpack.c.bf16 %v3290, %v3286
    %v3427 = vpack.c.bf16 %v3291, %v3287
    %v3428 = vpack.c.bf16 %v3296, %v3292
    %v3429 = vpack.c.bf16 %v3297, %v3293
    %v3430 = vpack.c.bf16 %v3298, %v3294
    %v3431 = vpack.c.bf16 %v3299, %v3295
    %v3432 = vpack.c.bf16 %v3304, %v3300
    %v3433 = vpack.c.bf16 %v3305, %v3301
    %v3434 = vpack.c.bf16 %v3306, %v3302
    %v3435 = vpack.c.bf16 %v3307, %v3303
    %v3436 = vld [vmem:[#allocation3] sm:$0xff]
    %v3437 = vld [vmem:[#allocation3 + $0x8] sm:$0xff]
    %v3438 = vld [vmem:[#allocation3 + $0x10] sm:$0xff]
    %v3439 = vld [vmem:[#allocation3 + $0x18] sm:$0xff]
    %v3440 = vld [vmem:[#allocation3 + $0x20] sm:$0xff]
    %v3441 = vld [vmem:[#allocation3 + $0x28] sm:$0xff]
    %v3442 = vld [vmem:[#allocation3 + $0x30] sm:$0xff]
    %v3443 = vld [vmem:[#allocation3 + $0x38] sm:$0xff]
    %v3444 = vld [vmem:[#allocation3 + $0x40] sm:$0xff]
    %v3445 = vld [vmem:[#allocation3 + $0x48] sm:$0xff]
    %v3446 = vld [vmem:[#allocation3 + $0x50] sm:$0xff]
    %v3447 = vld [vmem:[#allocation3 + $0x58] sm:$0xff]
    %v3448 = vld [vmem:[#allocation3 + $0x60] sm:$0xff]
    %v3449 = vld [vmem:[#allocation3 + $0x68] sm:$0xff]
    %v3450 = vld [vmem:[#allocation3 + $0x70] sm:$0xff]
    %v3451 = vld [vmem:[#allocation3 + $0x78] sm:$0xff]
    %v3452 = vld [vmem:[#allocation3 + $0x80] sm:$0xff]
    %v3453 = vld [vmem:[#allocation3 + $0x88] sm:$0xff]
    %v3454 = vld [vmem:[#allocation3 + $0x90] sm:$0xff]
    %v3455 = vld [vmem:[#allocation3 + $0x98] sm:$0xff]
    %v3456 = vld [vmem:[#allocation3 + $0xa0] sm:$0xff]
    %v3457 = vld [vmem:[#allocation3 + $0xa8] sm:$0xff]
    %v3458 = vld [vmem:[#allocation3 + $0xb0] sm:$0xff]
    %v3459 = vld [vmem:[#allocation3 + $0xb8] sm:$0xff]
    %v3460 = vld [vmem:[#allocation3 + $0xc0] sm:$0xff]
    %v3461 = vld [vmem:[#allocation3 + $0xc8] sm:$0xff]
    %v3462 = vld [vmem:[#allocation3 + $0xd0] sm:$0xff]
    %v3463 = vld [vmem:[#allocation3 + $0xd8] sm:$0xff]
    %v3464 = vld [vmem:[#allocation3 + $0xe0] sm:$0xff]
    %v3465 = vld [vmem:[#allocation3 + $0xe8] sm:$0xff]
    %v3466 = vld [vmem:[#allocation3 + $0xf0] sm:$0xff]
    %v3467 = vld [vmem:[#allocation3 + $0xf8] sm:$0xff]
    %v3468 = vld [vmem:[#allocation3 + $0x100] sm:$0xff]
    %v3469 = vld [vmem:[#allocation3 + $0x108] sm:$0xff]
    %v3470 = vld [vmem:[#allocation3 + $0x110] sm:$0xff]
    %v3471 = vld [vmem:[#allocation3 + $0x118] sm:$0xff]
    %v3472 = vld [vmem:[#allocation3 + $0x120] sm:$0xff]
    %v3473 = vld [vmem:[#allocation3 + $0x128] sm:$0xff]
    %v3474 = vld [vmem:[#allocation3 + $0x130] sm:$0xff]
    %v3475 = vld [vmem:[#allocation3 + $0x138] sm:$0xff]
    %v3476 = vld [vmem:[#allocation3 + $0x140] sm:$0xff]
    %v3477 = vld [vmem:[#allocation3 + $0x148] sm:$0xff]
    %v3478 = vld [vmem:[#allocation3 + $0x150] sm:$0xff]
    %v3479 = vld [vmem:[#allocation3 + $0x158] sm:$0xff]
    %v3480 = vld [vmem:[#allocation3 + $0x160] sm:$0xff]
    %v3481 = vld [vmem:[#allocation3 + $0x168] sm:$0xff]
    %v3482 = vld [vmem:[#allocation3 + $0x170] sm:$0xff]
    %v3483 = vld [vmem:[#allocation3 + $0x178] sm:$0xff]
    %v3484 = vld [vmem:[#allocation3 + $0x180] sm:$0xff]
    %v3485 = vld [vmem:[#allocation3 + $0x188] sm:$0xff]
    %v3486 = vld [vmem:[#allocation3 + $0x190] sm:$0xff]
    %v3487 = vld [vmem:[#allocation3 + $0x198] sm:$0xff]
    %v3488 = vld [vmem:[#allocation3 + $0x1a0] sm:$0xff]
    %v3489 = vld [vmem:[#allocation3 + $0x1a8] sm:$0xff]
    %v3490 = vld [vmem:[#allocation3 + $0x1b0] sm:$0xff]
    %v3491 = vld [vmem:[#allocation3 + $0x1b8] sm:$0xff]
    %v3492 = vld [vmem:[#allocation3 + $0x1c0] sm:$0xff]
    %v3493 = vld [vmem:[#allocation3 + $0x1c8] sm:$0xff]
    %v3494 = vld [vmem:[#allocation3 + $0x1d0] sm:$0xff]
    %v3495 = vld [vmem:[#allocation3 + $0x1d8] sm:$0xff]
    %v3496 = vld [vmem:[#allocation3 + $0x1e0] sm:$0xff]
    %v3497 = vld [vmem:[#allocation3 + $0x1e8] sm:$0xff]
    %v3498 = vld [vmem:[#allocation3 + $0x1f0] sm:$0xff]
    %v3499 = vld [vmem:[#allocation3 + $0x1f8] sm:$0xff]
    %v3500 = vld [vmem:[%s4] sm:$0x3]
    %v3502 = vlaneseq
    %v3503 = vshrl.u32 %v3502, 7
    %v3504 = vsub.s32 0, %v3503
    %v3505 = vrot.slane %v3500, %v3504
    %v3506 = vlaneseq
    %v3507 = vshrl.u32 %v3506, 7
    %v3508 = vsub.s32 1, %v3507
    %v3509 = vrot.slane %v3500, %v3508
    %v3576 = vunpack.c.l.b16 %v3436
    %v3577 = vunpack.c.h.b16 %v3436
    %v3578 = vunpack.c.l.b16 %v3437
    %v3579 = vunpack.c.h.b16 %v3437
    %v3580 = vunpack.c.l.b16 %v3438
    %v3581 = vunpack.c.h.b16 %v3438
    %v3582 = vunpack.c.l.b16 %v3439
    %v3583 = vunpack.c.h.b16 %v3439
    %v3584 = vunpack.c.l.b16 %v3440
    %v3585 = vunpack.c.h.b16 %v3440
    %v3586 = vunpack.c.l.b16 %v3441
    %v3587 = vunpack.c.h.b16 %v3441
    %v3588 = vunpack.c.l.b16 %v3442
    %v3589 = vunpack.c.h.b16 %v3442
    %v3590 = vunpack.c.l.b16 %v3443
    %v3591 = vunpack.c.h.b16 %v3443
    %v3592 = vunpack.c.l.b16 %v3444
    %v3593 = vunpack.c.h.b16 %v3444
    %v3594 = vunpack.c.l.b16 %v3445
    %v3595 = vunpack.c.h.b16 %v3445
    %v3596 = vunpack.c.l.b16 %v3446
    %v3597 = vunpack.c.h.b16 %v3446
    %v3598 = vunpack.c.l.b16 %v3447
    %v3599 = vunpack.c.h.b16 %v3447
    %v3600 = vunpack.c.l.b16 %v3448
    %v3601 = vunpack.c.h.b16 %v3448
    %v3602 = vunpack.c.l.b16 %v3449
    %v3603 = vunpack.c.h.b16 %v3449
    %v3604 = vunpack.c.l.b16 %v3450
    %v3605 = vunpack.c.h.b16 %v3450
    %v3606 = vunpack.c.l.b16 %v3451
    %v3607 = vunpack.c.h.b16 %v3451
    %v3608 = vunpack.c.l.b16 %v3452
    %v3609 = vunpack.c.h.b16 %v3452
    %v3610 = vunpack.c.l.b16 %v3453
    %v3611 = vunpack.c.h.b16 %v3453
    %v3612 = vunpack.c.l.b16 %v3454
    %v3613 = vunpack.c.h.b16 %v3454
    %v3614 = vunpack.c.l.b16 %v3455
    %v3615 = vunpack.c.h.b16 %v3455
    %v3616 = vunpack.c.l.b16 %v3456
    %v3617 = vunpack.c.h.b16 %v3456
    %v3618 = vunpack.c.l.b16 %v3457
    %v3619 = vunpack.c.h.b16 %v3457
    %v3620 = vunpack.c.l.b16 %v3458
    %v3621 = vunpack.c.h.b16 %v3458
    %v3622 = vunpack.c.l.b16 %v3459
    %v3623 = vunpack.c.h.b16 %v3459
    %v3624 = vunpack.c.l.b16 %v3460
    %v3625 = vunpack.c.h.b16 %v3460
    %v3626 = vunpack.c.l.b16 %v3461
    %v3627 = vunpack.c.h.b16 %v3461
    %v3628 = vunpack.c.l.b16 %v3462
    %v3629 = vunpack.c.h.b16 %v3462
    %v3630 = vunpack.c.l.b16 %v3463
    %v3631 = vunpack.c.h.b16 %v3463
    %v3632 = vunpack.c.l.b16 %v3464
    %v3633 = vunpack.c.h.b16 %v3464
    %v3634 = vunpack.c.l.b16 %v3465
    %v3635 = vunpack.c.h.b16 %v3465
    %v3636 = vunpack.c.l.b16 %v3466
    %v3637 = vunpack.c.h.b16 %v3466
    %v3638 = vunpack.c.l.b16 %v3467
    %v3639 = vunpack.c.h.b16 %v3467
    %v3640 = vunpack.c.l.b16 %v3468
    %v3641 = vunpack.c.h.b16 %v3468
    %v3642 = vunpack.c.l.b16 %v3469
    %v3643 = vunpack.c.h.b16 %v3469
    %v3644 = vunpack.c.l.b16 %v3470
    %v3645 = vunpack.c.h.b16 %v3470
    %v3646 = vunpack.c.l.b16 %v3471
    %v3647 = vunpack.c.h.b16 %v3471
    %v3648 = vunpack.c.l.b16 %v3472
    %v3649 = vunpack.c.h.b16 %v3472
    %v3650 = vunpack.c.l.b16 %v3473
    %v3651 = vunpack.c.h.b16 %v3473
    %v3652 = vunpack.c.l.b16 %v3474
    %v3653 = vunpack.c.h.b16 %v3474
    %v3654 = vunpack.c.l.b16 %v3475
    %v3655 = vunpack.c.h.b16 %v3475
    %v3656 = vunpack.c.l.b16 %v3476
    %v3657 = vunpack.c.h.b16 %v3476
    %v3658 = vunpack.c.l.b16 %v3477
    %v3659 = vunpack.c.h.b16 %v3477
    %v3660 = vunpack.c.l.b16 %v3478
    %v3661 = vunpack.c.h.b16 %v3478
    %v3662 = vunpack.c.l.b16 %v3479
    %v3663 = vunpack.c.h.b16 %v3479
    %v3664 = vunpack.c.l.b16 %v3480
    %v3665 = vunpack.c.h.b16 %v3480
    %v3666 = vunpack.c.l.b16 %v3481
    %v3667 = vunpack.c.h.b16 %v3481
    %v3668 = vunpack.c.l.b16 %v3482
    %v3669 = vunpack.c.h.b16 %v3482
    %v3670 = vunpack.c.l.b16 %v3483
    %v3671 = vunpack.c.h.b16 %v3483
    %v3672 = vunpack.c.l.b16 %v3484
    %v3673 = vunpack.c.h.b16 %v3484
    %v3674 = vunpack.c.l.b16 %v3485
    %v3675 = vunpack.c.h.b16 %v3485
    %v3676 = vunpack.c.l.b16 %v3486
    %v3677 = vunpack.c.h.b16 %v3486
    %v3678 = vunpack.c.l.b16 %v3487
    %v3679 = vunpack.c.h.b16 %v3487
    %v3680 = vunpack.c.l.b16 %v3488
    %v3681 = vunpack.c.h.b16 %v3488
    %v3682 = vunpack.c.l.b16 %v3489
    %v3683 = vunpack.c.h.b16 %v3489
    %v3684 = vunpack.c.l.b16 %v3490
    %v3685 = vunpack.c.h.b16 %v3490
    %v3686 = vunpack.c.l.b16 %v3491
    %v3687 = vunpack.c.h.b16 %v3491
    %v3688 = vunpack.c.l.b16 %v3492
    %v3689 = vunpack.c.h.b16 %v3492
    %v3690 = vunpack.c.l.b16 %v3493
    %v3691 = vunpack.c.h.b16 %v3493
    %v3692 = vunpack.c.l.b16 %v3494
    %v3693 = vunpack.c.h.b16 %v3494
    %v3694 = vunpack.c.l.b16 %v3495
    %v3695 = vunpack.c.h.b16 %v3495
    %v3696 = vunpack.c.l.b16 %v3496
    %v3697 = vunpack.c.h.b16 %v3496
    %v3698 = vunpack.c.l.b16 %v3497
    %v3699 = vunpack.c.h.b16 %v3497
    %v3700 = vunpack.c.l.b16 %v3498
    %v3701 = vunpack.c.h.b16 %v3498
    %v3702 = vunpack.c.l.b16 %v3499
    %v3703 = vunpack.c.h.b16 %v3499
    %v3704 = vpack.c.b16 %v3578, %v3576
    %v3705 = vpack.c.b16 %v3579, %v3577
    %v3706 = vpack.c.b16 %v3582, %v3580
    %v3707 = vpack.c.b16 %v3583, %v3581
    %v3708 = vpack.c.b16 %v3586, %v3584
    %v3709 = vpack.c.b16 %v3587, %v3585
    %v3710 = vpack.c.b16 %v3590, %v3588
    %v3711 = vpack.c.b16 %v3591, %v3589
    %v3712 = vpack.c.b16 %v3594, %v3592
    %v3713 = vpack.c.b16 %v3595, %v3593
    %v3714 = vpack.c.b16 %v3598, %v3596
    %v3715 = vpack.c.b16 %v3599, %v3597
    %v3716 = vpack.c.b16 %v3602, %v3600
    %v3717 = vpack.c.b16 %v3603, %v3601
    %v3718 = vpack.c.b16 %v3606, %v3604
    %v3719 = vpack.c.b16 %v3607, %v3605
    %v3720 = vpack.c.b16 %v3610, %v3608
    %v3721 = vpack.c.b16 %v3611, %v3609
    %v3722 = vpack.c.b16 %v3614, %v3612
    %v3723 = vpack.c.b16 %v3615, %v3613
    %v3724 = vpack.c.b16 %v3618, %v3616
    %v3725 = vpack.c.b16 %v3619, %v3617
    %v3726 = vpack.c.b16 %v3622, %v3620
    %v3727 = vpack.c.b16 %v3623, %v3621
    %v3728 = vpack.c.b16 %v3626, %v3624
    %v3729 = vpack.c.b16 %v3627, %v3625
    %v3730 = vpack.c.b16 %v3630, %v3628
    %v3731 = vpack.c.b16 %v3631, %v3629
    %v3732 = vpack.c.b16 %v3634, %v3632
    %v3733 = vpack.c.b16 %v3635, %v3633
    %v3734 = vpack.c.b16 %v3638, %v3636
    %v3735 = vpack.c.b16 %v3639, %v3637
    %v3736 = vpack.c.b16 %v3642, %v3640
    %v3737 = vpack.c.b16 %v3643, %v3641
    %v3738 = vpack.c.b16 %v3646, %v3644
    %v3739 = vpack.c.b16 %v3647, %v3645
    %v3740 = vpack.c.b16 %v3650, %v3648
    %v3741 = vpack.c.b16 %v3651, %v3649
    %v3742 = vpack.c.b16 %v3654, %v3652
    %v3743 = vpack.c.b16 %v3655, %v3653
    %v3744 = vpack.c.b16 %v3658, %v3656
    %v3745 = vpack.c.b16 %v3659, %v3657
    %v3746 = vpack.c.b16 %v3662, %v3660
    %v3747 = vpack.c.b16 %v3663, %v3661
    %v3748 = vpack.c.b16 %v3666, %v3664
    %v3749 = vpack.c.b16 %v3667, %v3665
    %v3750 = vpack.c.b16 %v3670, %v3668
    %v3751 = vpack.c.b16 %v3671, %v3669
    %v3752 = vpack.c.b16 %v3674, %v3672
    %v3753 = vpack.c.b16 %v3675, %v3673
    %v3754 = vpack.c.b16 %v3678, %v3676
    %v3755 = vpack.c.b16 %v3679, %v3677
    %v3756 = vpack.c.b16 %v3682, %v3680
    %v3757 = vpack.c.b16 %v3683, %v3681
    %v3758 = vpack.c.b16 %v3686, %v3684
    %v3759 = vpack.c.b16 %v3687, %v3685
    %v3760 = vpack.c.b16 %v3690, %v3688
    %v3761 = vpack.c.b16 %v3691, %v3689
    %v3762 = vpack.c.b16 %v3694, %v3692
    %v3763 = vpack.c.b16 %v3695, %v3693
    %v3764 = vpack.c.b16 %v3698, %v3696
    %v3765 = vpack.c.b16 %v3699, %v3697
    %v3766 = vpack.c.b16 %v3702, %v3700
    %v3767 = vpack.c.b16 %v3703, %v3701
    %3832 = vmatprep.subr.bf16.mxu0 %v3705
    %3833 = vmatpush1.bf16.msra.mxu0 %v3704
    %3834 = vmatprep.subr.bf16.mxu0 %v3707
    %3835 = vmatpush1.bf16.msra.mxu0 %v3706
    %3836 = vmatprep.subr.bf16.mxu0 %v3709
    %3837 = vmatpush1.bf16.msra.mxu0 %v3708
    %3838 = vmatprep.subr.bf16.mxu0 %v3711
    %3839 = vmatpush1.bf16.msra.mxu0 %v3710
    %3840 = vmatprep.subr.bf16.mxu0 %v3713
    %3841 = vmatpush1.bf16.msra.mxu0 %v3712
    %3842 = vmatprep.subr.bf16.mxu0 %v3715
    %3843 = vmatpush1.bf16.msra.mxu0 %v3714
    %3844 = vmatprep.subr.bf16.mxu0 %v3717
    %3845 = vmatpush1.bf16.msra.mxu0 %v3716
    %3846 = vmatprep.subr.bf16.mxu0 %v3719
    %3847 = vmatpush1.bf16.msra.mxu0 %v3718
    %3848 = vmatprep.subr.bf16.mxu0 %v3721
    %3849 = vmatpush1.bf16.msra.mxu0 %v3720
    %3850 = vmatprep.subr.bf16.mxu0 %v3723
    %3851 = vmatpush1.bf16.msra.mxu0 %v3722
    %3852 = vmatprep.subr.bf16.mxu0 %v3725
    %3853 = vmatpush1.bf16.msra.mxu0 %v3724
    %3854 = vmatprep.subr.bf16.mxu0 %v3727
    %3855 = vmatpush1.bf16.msra.mxu0 %v3726
    %3856 = vmatprep.subr.bf16.mxu0 %v3729
    %3857 = vmatpush1.bf16.msra.mxu0 %v3728
    %3858 = vmatprep.subr.bf16.mxu0 %v3731
    %3859 = vmatpush1.bf16.msra.mxu0 %v3730
    %3860 = vmatprep.subr.bf16.mxu0 %v3733
    %3861 = vmatpush1.bf16.msra.mxu0 %v3732
    %3862 = vmatprep.subr.bf16.mxu0 %v3735
    %3863 = vmatpush1.bf16.msra.mxu0 %v3734
    %3864 = vmatprep.mubr.bf16.mxu0 %v3309
    %3865 = vmatmul.mubr.bf16.gmra.mrb[0].mxu0 %v3308
    %v3866 = vpop.f32.mrb[0].mxu0
    %v3867 = vadd.f32 %v3505, %v3866
    %v3868 = vpop.f32.mrb[0].mxu0
    %v3869 = vadd.f32 %v3509, %v3868
    %v3870 = vpop.f32.mrb[0].mxu0
    %v3871 = vadd.f32 %v3505, %v3870
    %v3872 = vpop.f32.mrb[0].mxu0
    %v3873 = vadd.f32 %v3509, %v3872
    %3874 = vmatprep.mubr.bf16.mxu0 %v3313
    %3875 = vmatmul.mubr.bf16.gmra.mrb[0].mxu0 %v3312
    %v3876 = vpop.f32.mrb[0].mxu0
    %v3877 = vadd.f32 %v3505, %v3876
    %v3878 = vpop.f32.mrb[0].mxu0
    %v3879 = vadd.f32 %v3509, %v3878
    %v3880 = vpop.f32.mrb[0].mxu0
    %v3881 = vadd.f32 %v3505, %v3880
    %v3882 = vpop.f32.mrb[0].mxu0
    %v3883 = vadd.f32 %v3509, %v3882
    %3884 = vmatprep.mubr.bf16.mxu0 %v3317
    %3885 = vmatmul.mubr.bf16.gmra.mrb[0].mxu0 %v3316
    %v3886 = vpop.f32.mrb[0].mxu0
    %v3887 = vadd.f32 %v3505, %v3886
    %v3888 = vpop.f32.mrb[0].mxu0
    %v3889 = vadd.f32 %v3509, %v3888
    %v3890 = vpop.f32.mrb[0].mxu0
    %v3891 = vadd.f32 %v3505, %v3890
    %v3892 = vpop.f32.mrb[0].mxu0
    %v3893 = vadd.f32 %v3509, %v3892
    %3894 = vmatprep.mubr.bf16.mxu0 %v3321
    %3895 = vmatmul.mubr.bf16.gmra.mrb[0].mxu0 %v3320
    %v3896 = vpop.f32.mrb[0].mxu0
    %v3897 = vadd.f32 %v3505, %v3896
    %v3898 = vpop.f32.mrb[0].mxu0
    %v3899 = vadd.f32 %v3509, %v3898
    %v3900 = vpop.f32.mrb[0].mxu0
    %v3901 = vadd.f32 %v3505, %v3900
    %v3902 = vpop.f32.mrb[0].mxu0
    %v3903 = vadd.f32 %v3509, %v3902
    %3904 = vmatprep.mubr.bf16.mxu0 %v3325
    %3905 = vmatmul.mubr.bf16.gmra.mrb[0].mxu0 %v3324
    %v3906 = vpop.f32.mrb[0].mxu0
    %v3907 = vadd.f32 %v3505, %v3906
    %v3908 = vpop.f32.mrb[0].mxu0
    %v3909 = vadd.f32 %v3509, %v3908
    %v3910 = vpop.f32.mrb[0].mxu0
    %v3911 = vadd.f32 %v3505, %v3910
    %v3912 = vpop.f32.mrb[0].mxu0
    %v3913 = vadd.f32 %v3509, %v3912
    %3914 = vmatprep.mubr.bf16.mxu0 %v3329
    %3915 = vmatmul.mubr.bf16.gmra.mrb[0].mxu0 %v3328
    %v3916 = vpop.f32.mrb[0].mxu0
    %v3917 = vadd.f32 %v3505, %v3916
    %v3918 = vpop.f32.mrb[0].mxu0
    %v3919 = vadd.f32 %v3509, %v3918
    %v3920 = vpop.f32.mrb[0].mxu0
    %v3921 = vadd.f32 %v3505, %v3920
    %v3922 = vpop.f32.mrb[0].mxu0
    %v3923 = vadd.f32 %v3509, %v3922
    %3924 = vmatprep.mubr.bf16.mxu0 %v3333
    %3925 = vmatmul.mubr.bf16.gmra.mrb[0].mxu0 %v3332
    %v3926 = vpop.f32.mrb[0].mxu0
    %v3927 = vadd.f32 %v3505, %v3926
    %v3928 = vpop.f32.mrb[0].mxu0
    %v3929 = vadd.f32 %v3509, %v3928
    %v3930 = vpop.f32.mrb[0].mxu0
    %v3931 = vadd.f32 %v3505, %v3930
    %v3932 = vpop.f32.mrb[0].mxu0
    %v3933 = vadd.f32 %v3509, %v3932
    %3934 = vmatprep.mubr.bf16.mxu0 %v3337
    %3935 = vmatmul.mubr.bf16.gmra.mrb[0].mxu0 %v3336
    %v3936 = vpop.f32.mrb[0].mxu0
    %v3937 = vadd.f32 %v3505, %v3936
    %v3938 = vpop.f32.mrb[0].mxu0
    %v3939 = vadd.f32 %v3509, %v3938
    %v3940 = vpop.f32.mrb[0].mxu0
    %v3941 = vadd.f32 %v3505, %v3940
    %v3942 = vpop.f32.mrb[0].mxu0
    %v3943 = vadd.f32 %v3509, %v3942
    %3944 = vmatprep.mubr.bf16.mxu0 %v3341
    %3945 = vmatmul.mubr.bf16.gmra.mrb[0].mxu0 %v3340
    %v3946 = vpop.f32.mrb[0].mxu0
    %v3947 = vadd.f32 %v3505, %v3946
    %v3948 = vpop.f32.mrb[0].mxu0
    %v3949 = vadd.f32 %v3509, %v3948
    %v3950 = vpop.f32.mrb[0].mxu0
    %v3951 = vadd.f32 %v3505, %v3950
    %v3952 = vpop.f32.mrb[0].mxu0
    %v3953 = vadd.f32 %v3509, %v3952
    %3954 = vmatprep.mubr.bf16.mxu0 %v3345
    %3955 = vmatmul.mubr.bf16.gmra.mrb[0].mxu0 %v3344
    %v3956 = vpop.f32.mrb[0].mxu0
    %v3957 = vadd.f32 %v3505, %v3956
    %v3958 = vpop.f32.mrb[0].mxu0
    %v3959 = vadd.f32 %v3509, %v3958
    %v3960 = vpop.f32.mrb[0].mxu0
    %v3961 = vadd.f32 %v3505, %v3960
    %v3962 = vpop.f32.mrb[0].mxu0
    %v3963 = vadd.f32 %v3509, %v3962
    %3964 = vmatprep.mubr.bf16.mxu0 %v3349
    %3965 = vmatmul.mubr.bf16.gmra.mrb[0].mxu0 %v3348
    %v3966 = vpop.f32.mrb[0].mxu0
    %v3967 = vadd.f32 %v3505, %v3966
    %v3968 = vpop.f32.mrb[0].mxu0
    %v3969 = vadd.f32 %v3509, %v3968
    %v3970 = vpop.f32.mrb[0].mxu0
    %v3971 = vadd.f32 %v3505, %v3970
    %v3972 = vpop.f32.mrb[0].mxu0
    %v3973 = vadd.f32 %v3509, %v3972
    %3974 = vmatprep.mubr.bf16.mxu0 %v3353
    %3975 = vmatmul.mubr.bf16.gmra.mrb[0].mxu0 %v3352
    %v3976 = vpop.f32.mrb[0].mxu0
    %v3977 = vadd.f32 %v3505, %v3976
    %v3978 = vpop.f32.mrb[0].mxu0
    %v3979 = vadd.f32 %v3509, %v3978
    %v3980 = vpop.f32.mrb[0].mxu0
    %v3981 = vadd.f32 %v3505, %v3980
    %v3982 = vpop.f32.mrb[0].mxu0
    %v3983 = vadd.f32 %v3509, %v3982
    %3984 = vmatprep.mubr.bf16.mxu0 %v3357
    %3985 = vmatmul.mubr.bf16.gmra.mrb[0].mxu0 %v3356
    %v3986 = vpop.f32.mrb[0].mxu0
    %v3987 = vadd.f32 %v3505, %v3986
    %v3988 = vpop.f32.mrb[0].mxu0
    %v3989 = vadd.f32 %v3509, %v3988
    %v3990 = vpop.f32.mrb[0].mxu0
    %v3991 = vadd.f32 %v3505, %v3990
    %v3992 = vpop.f32.mrb[0].mxu0
    %v3993 = vadd.f32 %v3509, %v3992
    %3994 = vmatprep.mubr.bf16.mxu0 %v3361
    %3995 = vmatmul.mubr.bf16.gmra.mrb[0].mxu0 %v3360
    %v3996 = vpop.f32.mrb[0].mxu0
    %v3997 = vadd.f32 %v3505, %v3996
    %v3998 = vpop.f32.mrb[0].mxu0
    %v3999 = vadd.f32 %v3509, %v3998
    %v4000 = vpop.f32.mrb[0].mxu0
    %v4001 = vadd.f32 %v3505, %v4000
    %v4002 = vpop.f32.mrb[0].mxu0
    %v4003 = vadd.f32 %v3509, %v4002
    %4004 = vmatprep.mubr.bf16.mxu0 %v3365
    %4005 = vmatmul.mubr.bf16.gmra.mrb[0].mxu0 %v3364
    %v4006 = vpop.f32.mrb[0].mxu0
    %v4007 = vadd.f32 %v3505, %v4006
    %v4008 = vpop.f32.mrb[0].mxu0
    %v4009 = vadd.f32 %v3509, %v4008
    %v4010 = vpop.f32.mrb[0].mxu0
    %v4011 = vadd.f32 %v3505, %v4010
    %v4012 = vpop.f32.mrb[0].mxu0
    %v4013 = vadd.f32 %v3509, %v4012
    %4014 = vmatprep.mubr.bf16.mxu0 %v3369
    %4015 = vmatmul.mubr.bf16.gmra.mrb[0].mxu0 %v3368
    %v4016 = vpop.f32.mrb[0].mxu0
    %v4017 = vadd.f32 %v3505, %v4016
    %v4018 = vpop.f32.mrb[0].mxu0
    %v4019 = vadd.f32 %v3509, %v4018
    %v4020 = vpop.f32.mrb[0].mxu0
    %v4021 = vadd.f32 %v3505, %v4020
    %v4022 = vpop.f32.mrb[0].mxu0
    %v4023 = vadd.f32 %v3509, %v4022
    %4024 = vmatprep.mubr.bf16.mxu0 %v3373
    %4025 = vmatmul.mubr.bf16.gmra.mrb[0].mxu0 %v3372
    %v4026 = vpop.f32.mrb[0].mxu0
    %v4027 = vadd.f32 %v3505, %v4026
    %v4028 = vpop.f32.mrb[0].mxu0
    %v4029 = vadd.f32 %v3509, %v4028
    %v4030 = vpop.f32.mrb[0].mxu0
    %v4031 = vadd.f32 %v3505, %v4030
    %v4032 = vpop.f32.mrb[0].mxu0
    %v4033 = vadd.f32 %v3509, %v4032
    %4034 = vmatprep.mubr.bf16.mxu0 %v3377
    %4035 = vmatmul.mubr.bf16.gmra.mrb[0].mxu0 %v3376
    %v4036 = vpop.f32.mrb[0].mxu0
    %v4037 = vadd.f32 %v3505, %v4036
    %v4038 = vpop.f32.mrb[0].mxu0
    %v4039 = vadd.f32 %v3509, %v4038
    %v4040 = vpop.f32.mrb[0].mxu0
    %v4041 = vadd.f32 %v3505, %v4040
    %v4042 = vpop.f32.mrb[0].mxu0
    %v4043 = vadd.f32 %v3509, %v4042
    %4044 = vmatprep.mubr.bf16.mxu0 %v3381
    %4045 = vmatmul.mubr.bf16.gmra.mrb[0].mxu0 %v3380
    %v4046 = vpop.f32.mrb[0].mxu0
    %v4047 = vadd.f32 %v3505, %v4046
    %v4048 = vpop.f32.mrb[0].mxu0
    %v4049 = vadd.f32 %v3509, %v4048
    %v4050 = vpop.f32.mrb[0].mxu0
    %v4051 = vadd.f32 %v3505, %v4050
    %v4052 = vpop.f32.mrb[0].mxu0
    %v4053 = vadd.f32 %v3509, %v4052
    %4054 = vmatprep.mubr.bf16.mxu0 %v3385
    %4055 = vmatmul.mubr.bf16.gmra.mrb[0].mxu0 %v3384
    %v4056 = vpop.f32.mrb[0].mxu0
    %v4057 = vadd.f32 %v3505, %v4056
    %v4058 = vpop.f32.mrb[0].mxu0
    %v4059 = vadd.f32 %v3509, %v4058
    %v4060 = vpop.f32.mrb[0].mxu0
    %v4061 = vadd.f32 %v3505, %v4060
    %v4062 = vpop.f32.mrb[0].mxu0
    %v4063 = vadd.f32 %v3509, %v4062
    %4064 = vmatprep.mubr.bf16.mxu0 %v3389
    %4065 = vmatmul.mubr.bf16.gmra.mrb[0].mxu0 %v3388
    %v4066 = vpop.f32.mrb[0].mxu0
    %v4067 = vadd.f32 %v3505, %v4066
    %v4068 = vpop.f32.mrb[0].mxu0
    %v4069 = vadd.f32 %v3509, %v4068
    %v4070 = vpop.f32.mrb[0].mxu0
    %v4071 = vadd.f32 %v3505, %v4070
    %v4072 = vpop.f32.mrb[0].mxu0
    %v4073 = vadd.f32 %v3509, %v4072
    %4074 = vmatprep.mubr.bf16.mxu0 %v3393
    %4075 = vmatmul.mubr.bf16.gmra.mrb[0].mxu0 %v3392
    %v4076 = vpop.f32.mrb[0].mxu0
    %v4077 = vadd.f32 %v3505, %v4076
    %v4078 = vpop.f32.mrb[0].mxu0
    %v4079 = vadd.f32 %v3509, %v4078
    %v4080 = vpop.f32.mrb[0].mxu0
    %v4081 = vadd.f32 %v3505, %v4080
    %v4082 = vpop.f32.mrb[0].mxu0
    %v4083 = vadd.f32 %v3509, %v4082
    %4084 = vmatprep.mubr.bf16.mxu0 %v3397
    %4085 = vmatmul.mubr.bf16.gmra.mrb[0].mxu0 %v3396
    %v4086 = vpop.f32.mrb[0].mxu0
    %v4087 = vadd.f32 %v3505, %v4086
    %v4088 = vpop.f32.mrb[0].mxu0
    %v4089 = vadd.f32 %v3509, %v4088
    %v4090 = vpop.f32.mrb[0].mxu0
    %v4091 = vadd.f32 %v3505, %v4090
    %v4092 = vpop.f32.mrb[0].mxu0
    %v4093 = vadd.f32 %v3509, %v4092
    %4094 = vmatprep.mubr.bf16.mxu0 %v3401
    %4095 = vmatmul.mubr.bf16.gmra.mrb[0].mxu0 %v3400
    %v4096 = vpop.f32.mrb[0].mxu0
    %v4097 = vadd.f32 %v3505, %v4096
    %v4098 = vpop.f32.mrb[0].mxu0
    %v4099 = vadd.f32 %v3509, %v4098
    %v4100 = vpop.f32.mrb[0].mxu0
    %v4101 = vadd.f32 %v3505, %v4100
    %v4102 = vpop.f32.mrb[0].mxu0
    %v4103 = vadd.f32 %v3509, %v4102
    %4104 = vmatprep.mubr.bf16.mxu0 %v3405
    %4105 = vmatmul.mubr.bf16.gmra.mrb[0].mxu0 %v3404
    %v4106 = vpop.f32.mrb[0].mxu0
    %v4107 = vadd.f32 %v3505, %v4106
    %v4108 = vpop.f32.mrb[0].mxu0
    %v4109 = vadd.f32 %v3509, %v4108
    %v4110 = vpop.f32.mrb[0].mxu0
    %v4111 = vadd.f32 %v3505, %v4110
    %v4112 = vpop.f32.mrb[0].mxu0
    %v4113 = vadd.f32 %v3509, %v4112
    %4114 = vmatprep.mubr.bf16.mxu0 %v3409
    %4115 = vmatmul.mubr.bf16.gmra.mrb[0].mxu0 %v3408
    %v4116 = vpop.f32.mrb[0].mxu0
    %v4117 = vadd.f32 %v3505, %v4116
    %v4118 = vpop.f32.mrb[0].mxu0
    %v4119 = vadd.f32 %v3509, %v4118
    %v4120 = vpop.f32.mrb[0].mxu0
    %v4121 = vadd.f32 %v3505, %v4120
    %v4122 = vpop.f32.mrb[0].mxu0
    %v4123 = vadd.f32 %v3509, %v4122
    %4124 = vmatprep.mubr.bf16.mxu0 %v3413
    %4125 = vmatmul.mubr.bf16.gmra.mrb[0].mxu0 %v3412
    %v4126 = vpop.f32.mrb[0].mxu0
    %v4127 = vadd.f32 %v3505, %v4126
    %v4128 = vpop.f32.mrb[0].mxu0
    %v4129 = vadd.f32 %v3509, %v4128
    %v4130 = vpop.f32.mrb[0].mxu0
    %v4131 = vadd.f32 %v3505, %v4130
    %v4132 = vpop.f32.mrb[0].mxu0
    %v4133 = vadd.f32 %v3509, %v4132
    %4134 = vmatprep.mubr.bf16.mxu0 %v3417
    %4135 = vmatmul.mubr.bf16.gmra.mrb[0].mxu0 %v3416
    %v4136 = vpop.f32.mrb[0].mxu0
    %v4137 = vadd.f32 %v3505, %v4136
    %v4138 = vpop.f32.mrb[0].mxu0
    %v4139 = vadd.f32 %v3509, %v4138
    %v4140 = vpop.f32.mrb[0].mxu0
    %v4141 = vadd.f32 %v3505, %v4140
    %v4142 = vpop.f32.mrb[0].mxu0
    %v4143 = vadd.f32 %v3509, %v4142
    %4144 = vmatprep.mubr.bf16.mxu0 %v3421
    %4145 = vmatmul.mubr.bf16.gmra.mrb[0].mxu0 %v3420
    %v4146 = vpop.f32.mrb[0].mxu0
    %v4147 = vadd.f32 %v3505, %v4146
    %v4148 = vpop.f32.mrb[0].mxu0
    %v4149 = vadd.f32 %v3509, %v4148
    %v4150 = vpop.f32.mrb[0].mxu0
    %v4151 = vadd.f32 %v3505, %v4150
    %v4152 = vpop.f32.mrb[0].mxu0
    %v4153 = vadd.f32 %v3509, %v4152
    %4154 = vmatprep.mubr.bf16.mxu0 %v3425
    %4155 = vmatmul.mubr.bf16.gmra.mrb[0].mxu0 %v3424
    %v4156 = vpop.f32.mrb[0].mxu0
    %v4157 = vadd.f32 %v3505, %v4156
    %v4158 = vpop.f32.mrb[0].mxu0
    %v4159 = vadd.f32 %v3509, %v4158
    %v4160 = vpop.f32.mrb[0].mxu0
    %v4161 = vadd.f32 %v3505, %v4160
    %v4162 = vpop.f32.mrb[0].mxu0
    %v4163 = vadd.f32 %v3509, %v4162
    %4164 = vmatprep.mubr.bf16.mxu0 %v3429
    %4165 = vmatmul.mubr.bf16.gmra.mrb[0].mxu0 %v3428
    %v4166 = vpop.f32.mrb[0].mxu0
    %v4167 = vadd.f32 %v3505, %v4166
    %v4168 = vpop.f32.mrb[0].mxu0
    %v4169 = vadd.f32 %v3509, %v4168
    %v4170 = vpop.f32.mrb[0].mxu0
    %v4171 = vadd.f32 %v3505, %v4170
    %v4172 = vpop.f32.mrb[0].mxu0
    %v4173 = vadd.f32 %v3509, %v4172
    %4174 = vmatprep.mubr.bf16.mxu0 %v3433
    %4175 = vmatmul.mubr.bf16.gmra.mrb[0].mxu0 %v3432
    %v4176 = vpop.f32.mrb[0].mxu0
    %v4177 = vadd.f32 %v3505, %v4176
    %v4178 = vpop.f32.mrb[0].mxu0
    %v4179 = vadd.f32 %v3509, %v4178
    %v4180 = vpop.f32.mrb[0].mxu0
    %v4181 = vadd.f32 %v3505, %v4180
    %v4182 = vpop.f32.mrb[0].mxu0
    %v4183 = vadd.f32 %v3509, %v4182
    %4184 = vdwg.mxu0
    %4185 = vmatprep.subr.bf16.mxu0 %v3737
    %4186 = vmatpush1.bf16.msra.mxu0 %v3736
    %4187 = vmatprep.subr.bf16.mxu0 %v3739
    %4188 = vmatpush1.bf16.msra.mxu0 %v3738
    %4189 = vmatprep.subr.bf16.mxu0 %v3741
    %4190 = vmatpush1.bf16.msra.mxu0 %v3740
    %4191 = vmatprep.subr.bf16.mxu0 %v3743
    %4192 = vmatpush1.bf16.msra.mxu0 %v3742
    %4193 = vmatprep.subr.bf16.mxu0 %v3745
    %4194 = vmatpush1.bf16.msra.mxu0 %v3744
    %4195 = vmatprep.subr.bf16.mxu0 %v3747
    %4196 = vmatpush1.bf16.msra.mxu0 %v3746
    %4197 = vmatprep.subr.bf16.mxu0 %v3749
    %4198 = vmatpush1.bf16.msra.mxu0 %v3748
    %4199 = vmatprep.subr.bf16.mxu0 %v3751
    %4200 = vmatpush1.bf16.msra.mxu0 %v3750
    %4201 = vmatprep.subr.bf16.mxu0 %v3753
    %4202 = vmatpush1.bf16.msra.mxu0 %v3752
    %4203 = vmatprep.subr.bf16.mxu0 %v3755
    %4204 = vmatpush1.bf16.msra.mxu0 %v3754
    %4205 = vmatprep.subr.bf16.mxu0 %v3757
    %4206 = vmatpush1.bf16.msra.mxu0 %v3756
    %4207 = vmatprep.subr.bf16.mxu0 %v3759
    %4208 = vmatpush1.bf16.msra.mxu0 %v3758
    %4209 = vmatprep.subr.bf16.mxu0 %v3761
    %4210 = vmatpush1.bf16.msra.mxu0 %v3760
    %4211 = vmatprep.subr.bf16.mxu0 %v3763
    %4212 = vmatpush1.bf16.msra.mxu0 %v3762
    %4213 = vmatprep.subr.bf16.mxu0 %v3765
    %4214 = vmatpush1.bf16.msra.mxu0 %v3764
    %4215 = vmatprep.subr.bf16.mxu0 %v3767
    %4216 = vmatpush1.bf16.msra.mxu0 %v3766
    %4217 = vmatprep.mubr.bf16.mxu0 %v3311
    %4218 = vmatmul.mubr.bf16.gmra.mrb[0].mxu0 %v3310
    %v4219 = vpop.f32.mrb[0].mxu0
    %v4220 = vadd.f32 %v3867, %v4219
    %v4221 = vpop.f32.mrb[0].mxu0
    %v4222 = vadd.f32 %v3869, %v4221
    %v4223 = vpop.f32.mrb[0].mxu0
    %v4224 = vadd.f32 %v3871, %v4223
    %v4225 = vpop.f32.mrb[0].mxu0
    %v4226 = vadd.f32 %v3873, %v4225
    %4227 = vmatprep.mubr.bf16.mxu0 %v3315
    %4228 = vmatmul.mubr.bf16.gmra.mrb[0].mxu0 %v3314
    %v4229 = vpop.f32.mrb[0].mxu0
    %v4230 = vadd.f32 %v3877, %v4229
    %v4231 = vpop.f32.mrb[0].mxu0
    %v4232 = vadd.f32 %v3879, %v4231
    %v4233 = vpop.f32.mrb[0].mxu0
    %v4234 = vadd.f32 %v3881, %v4233
    %v4235 = vpop.f32.mrb[0].mxu0
    %v4236 = vadd.f32 %v3883, %v4235
    %4237 = vmatprep.mubr.bf16.mxu0 %v3319
    %4238 = vmatmul.mubr.bf16.gmra.mrb[0].mxu0 %v3318
    %v4239 = vpop.f32.mrb[0].mxu0
    %v4240 = vadd.f32 %v3887, %v4239
    %v4241 = vpop.f32.mrb[0].mxu0
    %v4242 = vadd.f32 %v3889, %v4241
    %v4243 = vpop.f32.mrb[0].mxu0
    %v4244 = vadd.f32 %v3891, %v4243
    %v4245 = vpop.f32.mrb[0].mxu0
    %v4246 = vadd.f32 %v3893, %v4245
    %4247 = vmatprep.mubr.bf16.mxu0 %v3323
    %4248 = vmatmul.mubr.bf16.gmra.mrb[0].mxu0 %v3322
    %v4249 = vpop.f32.mrb[0].mxu0
    %v4250 = vadd.f32 %v3897, %v4249
    %v4251 = vpop.f32.mrb[0].mxu0
    %v4252 = vadd.f32 %v3899, %v4251
    %v4253 = vpop.f32.mrb[0].mxu0
    %v4254 = vadd.f32 %v3901, %v4253
    %v4255 = vpop.f32.mrb[0].mxu0
    %v4256 = vadd.f32 %v3903, %v4255
    %4257 = vmatprep.mubr.bf16.mxu0 %v3327
    %4258 = vmatmul.mubr.bf16.gmra.mrb[0].mxu0 %v3326
    %v4259 = vpop.f32.mrb[0].mxu0
    %v4260 = vadd.f32 %v3907, %v4259
    %v4261 = vpop.f32.mrb[0].mxu0
    %v4262 = vadd.f32 %v3909, %v4261
    %v4263 = vpop.f32.mrb[0].mxu0
    %v4264 = vadd.f32 %v3911, %v4263
    %v4265 = vpop.f32.mrb[0].mxu0
    %v4266 = vadd.f32 %v3913, %v4265
    %4267 = vmatprep.mubr.bf16.mxu0 %v3331
    %4268 = vmatmul.mubr.bf16.gmra.mrb[0].mxu0 %v3330
    %v4269 = vpop.f32.mrb[0].mxu0
    %v4270 = vadd.f32 %v3917, %v4269
    %v4271 = vpop.f32.mrb[0].mxu0
    %v4272 = vadd.f32 %v3919, %v4271
    %v4273 = vpop.f32.mrb[0].mxu0
    %v4274 = vadd.f32 %v3921, %v4273
    %v4275 = vpop.f32.mrb[0].mxu0
    %v4276 = vadd.f32 %v3923, %v4275
    %4277 = vmatprep.mubr.bf16.mxu0 %v3335
    %4278 = vmatmul.mubr.bf16.gmra.mrb[0].mxu0 %v3334
    %v4279 = vpop.f32.mrb[0].mxu0
    %v4280 = vadd.f32 %v3927, %v4279
    %v4281 = vpop.f32.mrb[0].mxu0
    %v4282 = vadd.f32 %v3929, %v4281
    %v4283 = vpop.f32.mrb[0].mxu0
    %v4284 = vadd.f32 %v3931, %v4283
    %v4285 = vpop.f32.mrb[0].mxu0
    %v4286 = vadd.f32 %v3933, %v4285
    %4287 = vmatprep.mubr.bf16.mxu0 %v3339
    %4288 = vmatmul.mubr.bf16.gmra.mrb[0].mxu0 %v3338
    %v4289 = vpop.f32.mrb[0].mxu0
    %v4290 = vadd.f32 %v3937, %v4289
    %v4291 = vpop.f32.mrb[0].mxu0
    %v4292 = vadd.f32 %v3939, %v4291
    %v4293 = vpop.f32.mrb[0].mxu0
    %v4294 = vadd.f32 %v3941, %v4293
    %v4295 = vpop.f32.mrb[0].mxu0
    %v4296 = vadd.f32 %v3943, %v4295
    %4297 = vmatprep.mubr.bf16.mxu0 %v3343
    %4298 = vmatmul.mubr.bf16.gmra.mrb[0].mxu0 %v3342
    %v4299 = vpop.f32.mrb[0].mxu0
    %v4300 = vadd.f32 %v3947, %v4299
    %v4301 = vpop.f32.mrb[0].mxu0
    %v4302 = vadd.f32 %v3949, %v4301
    %v4303 = vpop.f32.mrb[0].mxu0
    %v4304 = vadd.f32 %v3951, %v4303
    %v4305 = vpop.f32.mrb[0].mxu0
    %v4306 = vadd.f32 %v3953, %v4305
    %4307 = vmatprep.mubr.bf16.mxu0 %v3347
    %4308 = vmatmul.mubr.bf16.gmra.mrb[0].mxu0 %v3346
    %v4309 = vpop.f32.mrb[0].mxu0
    %v4310 = vadd.f32 %v3957, %v4309
    %v4311 = vpop.f32.mrb[0].mxu0
    %v4312 = vadd.f32 %v3959, %v4311
    %v4313 = vpop.f32.mrb[0].mxu0
    %v4314 = vadd.f32 %v3961, %v4313
    %v4315 = vpop.f32.mrb[0].mxu0
    %v4316 = vadd.f32 %v3963, %v4315
    %4317 = vmatprep.mubr.bf16.mxu0 %v3351
    %4318 = vmatmul.mubr.bf16.gmra.mrb[0].mxu0 %v3350
    %v4319 = vpop.f32.mrb[0].mxu0
    %v4320 = vadd.f32 %v3967, %v4319
    %v4321 = vpop.f32.mrb[0].mxu0
    %v4322 = vadd.f32 %v3969, %v4321
    %v4323 = vpop.f32.mrb[0].mxu0
    %v4324 = vadd.f32 %v3971, %v4323
    %v4325 = vpop.f32.mrb[0].mxu0
    %v4326 = vadd.f32 %v3973, %v4325
    %4327 = vmatprep.mubr.bf16.mxu0 %v3355
    %4328 = vmatmul.mubr.bf16.gmra.mrb[0].mxu0 %v3354
    %v4329 = vpop.f32.mrb[0].mxu0
    %v4330 = vadd.f32 %v3977, %v4329
    %v4331 = vpop.f32.mrb[0].mxu0
    %v4332 = vadd.f32 %v3979, %v4331
    %v4333 = vpop.f32.mrb[0].mxu0
    %v4334 = vadd.f32 %v3981, %v4333
    %v4335 = vpop.f32.mrb[0].mxu0
    %v4336 = vadd.f32 %v3983, %v4335
    %4337 = vmatprep.mubr.bf16.mxu0 %v3359
    %4338 = vmatmul.mubr.bf16.gmra.mrb[0].mxu0 %v3358
    %v4339 = vpop.f32.mrb[0].mxu0
    %v4340 = vadd.f32 %v3987, %v4339
    %v4341 = vpop.f32.mrb[0].mxu0
    %v4342 = vadd.f32 %v3989, %v4341
    %v4343 = vpop.f32.mrb[0].mxu0
    %v4344 = vadd.f32 %v3991, %v4343
    %v4345 = vpop.f32.mrb[0].mxu0
    %v4346 = vadd.f32 %v3993, %v4345
    %4347 = vmatprep.mubr.bf16.mxu0 %v3363
    %4348 = vmatmul.mubr.bf16.gmra.mrb[0].mxu0 %v3362
    %v4349 = vpop.f32.mrb[0].mxu0
    %v4350 = vadd.f32 %v3997, %v4349
    %v4351 = vpop.f32.mrb[0].mxu0
    %v4352 = vadd.f32 %v3999, %v4351
    %v4353 = vpop.f32.mrb[0].mxu0
    %v4354 = vadd.f32 %v4001, %v4353
    %v4355 = vpop.f32.mrb[0].mxu0
    %v4356 = vadd.f32 %v4003, %v4355
    %4357 = vmatprep.mubr.bf16.mxu0 %v3367
    %4358 = vmatmul.mubr.bf16.gmra.mrb[0].mxu0 %v3366
    %v4359 = vpop.f32.mrb[0].mxu0
    %v4360 = vadd.f32 %v4007, %v4359
    %v4361 = vpop.f32.mrb[0].mxu0
    %v4362 = vadd.f32 %v4009, %v4361
    %v4363 = vpop.f32.mrb[0].mxu0
    %v4364 = vadd.f32 %v4011, %v4363
    %v4365 = vpop.f32.mrb[0].mxu0
    %v4366 = vadd.f32 %v4013, %v4365
    %4367 = vmatprep.mubr.bf16.mxu0 %v3371
    %4368 = vmatmul.mubr.bf16.gmra.mrb[0].mxu0 %v3370
    %v4369 = vpop.f32.mrb[0].mxu0
    %v4370 = vadd.f32 %v4017, %v4369
    %v4371 = vpop.f32.mrb[0].mxu0
    %v4372 = vadd.f32 %v4019, %v4371
    %v4373 = vpop.f32.mrb[0].mxu0
    %v4374 = vadd.f32 %v4021, %v4373
    %v4375 = vpop.f32.mrb[0].mxu0
    %v4376 = vadd.f32 %v4023, %v4375
    %4377 = vmatprep.mubr.bf16.mxu0 %v3375
    %4378 = vmatmul.mubr.bf16.gmra.mrb[0].mxu0 %v3374
    %v4379 = vpop.f32.mrb[0].mxu0
    %v4380 = vadd.f32 %v4027, %v4379
    %v4381 = vpop.f32.mrb[0].mxu0
    %v4382 = vadd.f32 %v4029, %v4381
    %v4383 = vpop.f32.mrb[0].mxu0
    %v4384 = vadd.f32 %v4031, %v4383
    %v4385 = vpop.f32.mrb[0].mxu0
    %v4386 = vadd.f32 %v4033, %v4385
    %4387 = vmatprep.mubr.bf16.mxu0 %v3379
    %4388 = vmatmul.mubr.bf16.gmra.mrb[0].mxu0 %v3378
    %v4389 = vpop.f32.mrb[0].mxu0
    %v4390 = vadd.f32 %v4037, %v4389
    %v4391 = vpop.f32.mrb[0].mxu0
    %v4392 = vadd.f32 %v4039, %v4391
    %v4393 = vpop.f32.mrb[0].mxu0
    %v4394 = vadd.f32 %v4041, %v4393
    %v4395 = vpop.f32.mrb[0].mxu0
    %v4396 = vadd.f32 %v4043, %v4395
    %4397 = vmatprep.mubr.bf16.mxu0 %v3383
    %4398 = vmatmul.mubr.bf16.gmra.mrb[0].mxu0 %v3382
    %v4399 = vpop.f32.mrb[0].mxu0
    %v4400 = vadd.f32 %v4047, %v4399
    %v4401 = vpop.f32.mrb[0].mxu0
    %v4402 = vadd.f32 %v4049, %v4401
    %v4403 = vpop.f32.mrb[0].mxu0
    %v4404 = vadd.f32 %v4051, %v4403
    %v4405 = vpop.f32.mrb[0].mxu0
    %v4406 = vadd.f32 %v4053, %v4405
    %4407 = vmatprep.mubr.bf16.mxu0 %v3387
    %4408 = vmatmul.mubr.bf16.gmra.mrb[0].mxu0 %v3386
    %v4409 = vpop.f32.mrb[0].mxu0
    %v4410 = vadd.f32 %v4057, %v4409
    %v4411 = vpop.f32.mrb[0].mxu0
    %v4412 = vadd.f32 %v4059, %v4411
    %v4413 = vpop.f32.mrb[0].mxu0
    %v4414 = vadd.f32 %v4061, %v4413
    %v4415 = vpop.f32.mrb[0].mxu0
    %v4416 = vadd.f32 %v4063, %v4415
    %4417 = vmatprep.mubr.bf16.mxu0 %v3391
    %4418 = vmatmul.mubr.bf16.gmra.mrb[0].mxu0 %v3390
    %v4419 = vpop.f32.mrb[0].mxu0
    %v4420 = vadd.f32 %v4067, %v4419
    %v4421 = vpop.f32.mrb[0].mxu0
    %v4422 = vadd.f32 %v4069, %v4421
    %v4423 = vpop.f32.mrb[0].mxu0
    %v4424 = vadd.f32 %v4071, %v4423
    %v4425 = vpop.f32.mrb[0].mxu0
    %v4426 = vadd.f32 %v4073, %v4425
    %4427 = vmatprep.mubr.bf16.mxu0 %v3395
    %4428 = vmatmul.mubr.bf16.gmra.mrb[0].mxu0 %v3394
    %v4429 = vpop.f32.mrb[0].mxu0
    %v4430 = vadd.f32 %v4077, %v4429
    %v4431 = vpop.f32.mrb[0].mxu0
    %v4432 = vadd.f32 %v4079, %v4431
    %v4433 = vpop.f32.mrb[0].mxu0
    %v4434 = vadd.f32 %v4081, %v4433
    %v4435 = vpop.f32.mrb[0].mxu0
    %v4436 = vadd.f32 %v4083, %v4435
    %4437 = vmatprep.mubr.bf16.mxu0 %v3399
    %4438 = vmatmul.mubr.bf16.gmra.mrb[0].mxu0 %v3398
    %v4439 = vpop.f32.mrb[0].mxu0
    %v4440 = vadd.f32 %v4087, %v4439
    %v4441 = vpop.f32.mrb[0].mxu0
    %v4442 = vadd.f32 %v4089, %v4441
    %v4443 = vpop.f32.mrb[0].mxu0
    %v4444 = vadd.f32 %v4091, %v4443
    %v4445 = vpop.f32.mrb[0].mxu0
    %v4446 = vadd.f32 %v4093, %v4445
    %4447 = vmatprep.mubr.bf16.mxu0 %v3403
    %4448 = vmatmul.mubr.bf16.gmra.mrb[0].mxu0 %v3402
    %v4449 = vpop.f32.mrb[0].mxu0
    %v4450 = vadd.f32 %v4097, %v4449
    %v4451 = vpop.f32.mrb[0].mxu0
    %v4452 = vadd.f32 %v4099, %v4451
    %v4453 = vpop.f32.mrb[0].mxu0
    %v4454 = vadd.f32 %v4101, %v4453
    %v4455 = vpop.f32.mrb[0].mxu0
    %v4456 = vadd.f32 %v4103, %v4455
    %4457 = vmatprep.mubr.bf16.mxu0 %v3407
    %4458 = vmatmul.mubr.bf16.gmra.mrb[0].mxu0 %v3406
    %v4459 = vpop.f32.mrb[0].mxu0
    %v4460 = vadd.f32 %v4107, %v4459
    %v4461 = vpop.f32.mrb[0].mxu0
    %v4462 = vadd.f32 %v4109, %v4461
    %v4463 = vpop.f32.mrb[0].mxu0
    %v4464 = vadd.f32 %v4111, %v4463
    %v4465 = vpop.f32.mrb[0].mxu0
    %v4466 = vadd.f32 %v4113, %v4465
    %4467 = vmatprep.mubr.bf16.mxu0 %v3411
    %4468 = vmatmul.mubr.bf16.gmra.mrb[0].mxu0 %v3410
    %v4469 = vpop.f32.mrb[0].mxu0
    %v4470 = vadd.f32 %v4117, %v4469
    %v4471 = vpop.f32.mrb[0].mxu0
    %v4472 = vadd.f32 %v4119, %v4471
    %v4473 = vpop.f32.mrb[0].mxu0
    %v4474 = vadd.f32 %v4121, %v4473
    %v4475 = vpop.f32.mrb[0].mxu0
    %v4476 = vadd.f32 %v4123, %v4475
    %4477 = vmatprep.mubr.bf16.mxu0 %v3415
    %4478 = vmatmul.mubr.bf16.gmra.mrb[0].mxu0 %v3414
    %v4479 = vpop.f32.mrb[0].mxu0
    %v4480 = vadd.f32 %v4127, %v4479
    %v4481 = vpop.f32.mrb[0].mxu0
    %v4482 = vadd.f32 %v4129, %v4481
    %v4483 = vpop.f32.mrb[0].mxu0
    %v4484 = vadd.f32 %v4131, %v4483
    %v4485 = vpop.f32.mrb[0].mxu0
    %v4486 = vadd.f32 %v4133, %v4485
    %4487 = vmatprep.mubr.bf16.mxu0 %v3419
    %4488 = vmatmul.mubr.bf16.gmra.mrb[0].mxu0 %v3418
    %v4489 = vpop.f32.mrb[0].mxu0
    %v4490 = vadd.f32 %v4137, %v4489
    %v4491 = vpop.f32.mrb[0].mxu0
    %v4492 = vadd.f32 %v4139, %v4491
    %v4493 = vpop.f32.mrb[0].mxu0
    %v4494 = vadd.f32 %v4141, %v4493
    %v4495 = vpop.f32.mrb[0].mxu0
    %v4496 = vadd.f32 %v4143, %v4495
    %4497 = vmatprep.mubr.bf16.mxu0 %v3423
    %4498 = vmatmul.mubr.bf16.gmra.mrb[0].mxu0 %v3422
    %v4499 = vpop.f32.mrb[0].mxu0
    %v4500 = vadd.f32 %v4147, %v4499
    %v4501 = vpop.f32.mrb[0].mxu0
    %v4502 = vadd.f32 %v4149, %v4501
    %v4503 = vpop.f32.mrb[0].mxu0
    %v4504 = vadd.f32 %v4151, %v4503
    %v4505 = vpop.f32.mrb[0].mxu0
    %v4506 = vadd.f32 %v4153, %v4505
    %4507 = vmatprep.mubr.bf16.mxu0 %v3427
    %4508 = vmatmul.mubr.bf16.gmra.mrb[0].mxu0 %v3426
    %v4509 = vpop.f32.mrb[0].mxu0
    %v4510 = vadd.f32 %v4157, %v4509
    %v4511 = vpop.f32.mrb[0].mxu0
    %v4512 = vadd.f32 %v4159, %v4511
    %v4513 = vpop.f32.mrb[0].mxu0
    %v4514 = vadd.f32 %v4161, %v4513
    %v4515 = vpop.f32.mrb[0].mxu0
    %v4516 = vadd.f32 %v4163, %v4515
    %4517 = vmatprep.mubr.bf16.mxu0 %v3431
    %4518 = vmatmul.mubr.bf16.gmra.mrb[0].mxu0 %v3430
    %v4519 = vpop.f32.mrb[0].mxu0
    %v4520 = vadd.f32 %v4167, %v4519
    %v4521 = vpop.f32.mrb[0].mxu0
    %v4522 = vadd.f32 %v4169, %v4521
    %v4523 = vpop.f32.mrb[0].mxu0
    %v4524 = vadd.f32 %v4171, %v4523
    %v4525 = vpop.f32.mrb[0].mxu0
    %v4526 = vadd.f32 %v4173, %v4525
    %4527 = vmatprep.mubr.bf16.mxu0 %v3435
    %4528 = vmatmul.mubr.bf16.gmra.mrb[0].mxu0 %v3434
    %v4529 = vpop.f32.mrb[0].mxu0
    %v4530 = vadd.f32 %v4177, %v4529
    %v4531 = vpop.f32.mrb[0].mxu0
    %v4532 = vadd.f32 %v4179, %v4531
    %v4533 = vpop.f32.mrb[0].mxu0
    %v4534 = vadd.f32 %v4181, %v4533
    %v4535 = vpop.f32.mrb[0].mxu0
    %v4536 = vadd.f32 %v4183, %v4535
    %4537 = vdwg.mxu0
    %v4538 = vmax.f32 %v4220, 0.0
    %v4539 = vmax.f32 %v4222, 0.0
    %v4540 = vmax.f32 %v4224, 0.0
    %v4541 = vmax.f32 %v4226, 0.0
    %v4542 = vmax.f32 %v4230, 0.0
    %v4543 = vmax.f32 %v4232, 0.0
    %v4544 = vmax.f32 %v4234, 0.0
    %v4545 = vmax.f32 %v4236, 0.0
    %v4546 = vmax.f32 %v4240, 0.0
    %v4547 = vmax.f32 %v4242, 0.0
    %v4548 = vmax.f32 %v4244, 0.0
    %v4549 = vmax.f32 %v4246, 0.0
    %v4550 = vmax.f32 %v4250, 0.0
    %v4551 = vmax.f32 %v4252, 0.0
    %v4552 = vmax.f32 %v4254, 0.0
    %v4553 = vmax.f32 %v4256, 0.0
    %v4554 = vmax.f32 %v4260, 0.0
    %v4555 = vmax.f32 %v4262, 0.0
    %v4556 = vmax.f32 %v4264, 0.0
    %v4557 = vmax.f32 %v4266, 0.0
    %v4558 = vmax.f32 %v4270, 0.0
    %v4559 = vmax.f32 %v4272, 0.0
    %v4560 = vmax.f32 %v4274, 0.0
    %v4561 = vmax.f32 %v4276, 0.0
    %v4562 = vmax.f32 %v4280, 0.0
    %v4563 = vmax.f32 %v4282, 0.0
    %v4564 = vmax.f32 %v4284, 0.0
    %v4565 = vmax.f32 %v4286, 0.0
    %v4566 = vmax.f32 %v4290, 0.0
    %v4567 = vmax.f32 %v4292, 0.0
    %v4568 = vmax.f32 %v4294, 0.0
    %v4569 = vmax.f32 %v4296, 0.0
    %v4570 = vmax.f32 %v4300, 0.0
    %v4571 = vmax.f32 %v4302, 0.0
    %v4572 = vmax.f32 %v4304, 0.0
    %v4573 = vmax.f32 %v4306, 0.0
    %v4574 = vmax.f32 %v4310, 0.0
    %v4575 = vmax.f32 %v4312, 0.0
    %v4576 = vmax.f32 %v4314, 0.0
    %v4577 = vmax.f32 %v4316, 0.0
    %v4578 = vmax.f32 %v4320, 0.0
    %v4579 = vmax.f32 %v4322, 0.0
    %v4580 = vmax.f32 %v4324, 0.0
    %v4581 = vmax.f32 %v4326, 0.0
    %v4582 = vmax.f32 %v4330, 0.0
    %v4583 = vmax.f32 %v4332, 0.0
    %v4584 = vmax.f32 %v4334, 0.0
    %v4585 = vmax.f32 %v4336, 0.0
    %v4586 = vmax.f32 %v4340, 0.0
    %v4587 = vmax.f32 %v4342, 0.0
    %v4588 = vmax.f32 %v4344, 0.0
    %v4589 = vmax.f32 %v4346, 0.0
    %v4590 = vmax.f32 %v4350, 0.0
    %v4591 = vmax.f32 %v4352, 0.0
    %v4592 = vmax.f32 %v4354, 0.0
    %v4593 = vmax.f32 %v4356, 0.0
    %v4594 = vmax.f32 %v4360, 0.0
    %v4595 = vmax.f32 %v4362, 0.0
    %v4596 = vmax.f32 %v4364, 0.0
    %v4597 = vmax.f32 %v4366, 0.0
    %v4598 = vmax.f32 %v4370, 0.0
    %v4599 = vmax.f32 %v4372, 0.0
    %v4600 = vmax.f32 %v4374, 0.0
    %v4601 = vmax.f32 %v4376, 0.0
    %v4602 = vmax.f32 %v4380, 0.0
    %v4603 = vmax.f32 %v4382, 0.0
    %v4604 = vmax.f32 %v4384, 0.0
    %v4605 = vmax.f32 %v4386, 0.0
    %v4606 = vmax.f32 %v4390, 0.0
    %v4607 = vmax.f32 %v4392, 0.0
    %v4608 = vmax.f32 %v4394, 0.0
    %v4609 = vmax.f32 %v4396, 0.0
    %v4610 = vmax.f32 %v4400, 0.0
    %v4611 = vmax.f32 %v4402, 0.0
    %v4612 = vmax.f32 %v4404, 0.0
    %v4613 = vmax.f32 %v4406, 0.0
    %v4614 = vmax.f32 %v4410, 0.0
    %v4615 = vmax.f32 %v4412, 0.0
    %v4616 = vmax.f32 %v4414, 0.0
    %v4617 = vmax.f32 %v4416, 0.0
    %v4618 = vmax.f32 %v4420, 0.0
    %v4619 = vmax.f32 %v4422, 0.0
    %v4620 = vmax.f32 %v4424, 0.0
    %v4621 = vmax.f32 %v4426, 0.0
    %v4622 = vmax.f32 %v4430, 0.0
    %v4623 = vmax.f32 %v4432, 0.0
    %v4624 = vmax.f32 %v4434, 0.0
    %v4625 = vmax.f32 %v4436, 0.0
    %v4626 = vmax.f32 %v4440, 0.0
    %v4627 = vmax.f32 %v4442, 0.0
    %v4628 = vmax.f32 %v4444, 0.0
    %v4629 = vmax.f32 %v4446, 0.0
    %v4630 = vmax.f32 %v4450, 0.0
    %v4631 = vmax.f32 %v4452, 0.0
    %v4632 = vmax.f32 %v4454, 0.0
    %v4633 = vmax.f32 %v4456, 0.0
    %v4634 = vmax.f32 %v4460, 0.0
    %v4635 = vmax.f32 %v4462, 0.0
    %v4636 = vmax.f32 %v4464, 0.0
    %v4637 = vmax.f32 %v4466, 0.0
    %v4638 = vmax.f32 %v4470, 0.0
    %v4639 = vmax.f32 %v4472, 0.0
    %v4640 = vmax.f32 %v4474, 0.0
    %v4641 = vmax.f32 %v4476, 0.0
    %v4642 = vmax.f32 %v4480, 0.0
    %v4643 = vmax.f32 %v4482, 0.0
    %v4644 = vmax.f32 %v4484, 0.0
    %v4645 = vmax.f32 %v4486, 0.0
    %v4646 = vmax.f32 %v4490, 0.0
    %v4647 = vmax.f32 %v4492, 0.0
    %v4648 = vmax.f32 %v4494, 0.0
    %v4649 = vmax.f32 %v4496, 0.0
    %v4650 = vmax.f32 %v4500, 0.0
    %v4651 = vmax.f32 %v4502, 0.0
    %v4652 = vmax.f32 %v4504, 0.0
    %v4653 = vmax.f32 %v4506, 0.0
    %v4654 = vmax.f32 %v4510, 0.0
    %v4655 = vmax.f32 %v4512, 0.0
    %v4656 = vmax.f32 %v4514, 0.0
    %v4657 = vmax.f32 %v4516, 0.0
    %v4658 = vmax.f32 %v4520, 0.0
    %v4659 = vmax.f32 %v4522, 0.0
    %v4660 = vmax.f32 %v4524, 0.0
    %v4661 = vmax.f32 %v4526, 0.0
    %v4662 = vmax.f32 %v4530, 0.0
    %v4663 = vmax.f32 %v4532, 0.0
    %v4664 = vmax.f32 %v4534, 0.0
    %v4665 = vmax.f32 %v4536, 0.0
    %v4666 = vpack.c.bf16 %v4540, %v4538
    %v4667 = vpack.c.bf16 %v4541, %v4539
    %v4668 = vpack.c.bf16 %v4544, %v4542
    %v4669 = vpack.c.bf16 %v4545, %v4543
    %v4670 = vpack.c.bf16 %v4548, %v4546
    %v4671 = vpack.c.bf16 %v4549, %v4547
    %v4672 = vpack.c.bf16 %v4552, %v4550
    %v4673 = vpack.c.bf16 %v4553, %v4551
    %v4674 = vpack.c.bf16 %v4556, %v4554
    %v4675 = vpack.c.bf16 %v4557, %v4555
    %v4676 = vpack.c.bf16 %v4560, %v4558
    %v4677 = vpack.c.bf16 %v4561, %v4559
    %v4678 = vpack.c.bf16 %v4564, %v4562
    %v4679 = vpack.c.bf16 %v4565, %v4563
    %v4680 = vpack.c.bf16 %v4568, %v4566
    %v4681 = vpack.c.bf16 %v4569, %v4567
    %v4682 = vpack.c.bf16 %v4572, %v4570
    %v4683 = vpack.c.bf16 %v4573, %v4571
    %v4684 = vpack.c.bf16 %v4576, %v4574
    %v4685 = vpack.c.bf16 %v4577, %v4575
    %v4686 = vpack.c.bf16 %v4580, %v4578
    %v4687 = vpack.c.bf16 %v4581, %v4579
    %v4688 = vpack.c.bf16 %v4584, %v4582
    %v4689 = vpack.c.bf16 %v4585, %v4583
    %v4690 = vpack.c.bf16 %v4588, %v4586
    %v4691 = vpack.c.bf16 %v4589, %v4587
    %v4692 = vpack.c.bf16 %v4592, %v4590
    %v4693 = vpack.c.bf16 %v4593, %v4591
    %v4694 = vpack.c.bf16 %v4596, %v4594
    %v4695 = vpack.c.bf16 %v4597, %v4595
    %v4696 = vpack.c.bf16 %v4600, %v4598
    %v4697 = vpack.c.bf16 %v4601, %v4599
    %v4698 = vpack.c.bf16 %v4604, %v4602
    %v4699 = vpack.c.bf16 %v4605, %v4603
    %v4700 = vpack.c.bf16 %v4608, %v4606
    %v4701 = vpack.c.bf16 %v4609, %v4607
    %v4702 = vpack.c.bf16 %v4612, %v4610
    %v4703 = vpack.c.bf16 %v4613, %v4611
    %v4704 = vpack.c.bf16 %v4616, %v4614
    %v4705 = vpack.c.bf16 %v4617, %v4615
    %v4706 = vpack.c.bf16 %v4620, %v4618
    %v4707 = vpack.c.bf16 %v4621, %v4619
    %v4708 = vpack.c.bf16 %v4624, %v4622
    %v4709 = vpack.c.bf16 %v4625, %v4623
    %v4710 = vpack.c.bf16 %v4628, %v4626
    %v4711 = vpack.c.bf16 %v4629, %v4627
    %v4712 = vpack.c.bf16 %v4632, %v4630
    %v4713 = vpack.c.bf16 %v4633, %v4631
    %v4714 = vpack.c.bf16 %v4636, %v4634
    %v4715 = vpack.c.bf16 %v4637, %v4635
    %v4716 = vpack.c.bf16 %v4640, %v4638
    %v4717 = vpack.c.bf16 %v4641, %v4639
    %v4718 = vpack.c.bf16 %v4644, %v4642
    %v4719 = vpack.c.bf16 %v4645, %v4643
    %v4720 = vpack.c.bf16 %v4648, %v4646
    %v4721 = vpack.c.bf16 %v4649, %v4647
    %v4722 = vpack.c.bf16 %v4652, %v4650
    %v4723 = vpack.c.bf16 %v4653, %v4651
    %v4724 = vpack.c.bf16 %v4656, %v4654
    %v4725 = vpack.c.bf16 %v4657, %v4655
    %v4726 = vpack.c.bf16 %v4660, %v4658
    %v4727 = vpack.c.bf16 %v4661, %v4659
    %v4728 = vpack.c.bf16 %v4664, %v4662
    %v4729 = vpack.c.bf16 %v4665, %v4663
    %v4730 = vld [vmem:[#allocation5] sm:$0xf]
    %v4731 = vld [vmem:[#allocation5 + $0x4] sm:$0xf]
    %v4732 = vld [vmem:[#allocation5 + $0x8] sm:$0xf]
    %v4733 = vld [vmem:[#allocation5 + $0xc] sm:$0xf]
    %v4734 = vld [vmem:[#allocation5 + $0x10] sm:$0xf]
    %v4735 = vld [vmem:[#allocation5 + $0x14] sm:$0xf]
    %v4736 = vld [vmem:[#allocation5 + $0x18] sm:$0xf]
    %v4737 = vld [vmem:[#allocation5 + $0x1c] sm:$0xf]
    %v4738 = vld [vmem:[#allocation5 + $0x20] sm:$0xf]
    %v4739 = vld [vmem:[#allocation5 + $0x24] sm:$0xf]
    %v4740 = vld [vmem:[#allocation5 + $0x28] sm:$0xf]
    %v4741 = vld [vmem:[#allocation5 + $0x2c] sm:$0xf]
    %v4742 = vld [vmem:[#allocation5 + $0x30] sm:$0xf]
    %v4743 = vld [vmem:[#allocation5 + $0x34] sm:$0xf]
    %v4744 = vld [vmem:[#allocation5 + $0x38] sm:$0xf]
    %v4745 = vld [vmem:[#allocation5 + $0x3c] sm:$0xf]
    %v4746 = vld [vmem:[#allocation5 + $0x40] sm:$0xf]
    %v4747 = vld [vmem:[#allocation5 + $0x44] sm:$0xf]
    %v4748 = vld [vmem:[#allocation5 + $0x48] sm:$0xf]
    %v4749 = vld [vmem:[#allocation5 + $0x4c] sm:$0xf]
    %v4750 = vld [vmem:[#allocation5 + $0x50] sm:$0xf]
    %v4751 = vld [vmem:[#allocation5 + $0x54] sm:$0xf]
    %v4752 = vld [vmem:[#allocation5 + $0x58] sm:$0xf]
    %v4753 = vld [vmem:[#allocation5 + $0x5c] sm:$0xf]
    %v4754 = vld [vmem:[#allocation5 + $0x60] sm:$0xf]
    %v4755 = vld [vmem:[#allocation5 + $0x64] sm:$0xf]
    %v4756 = vld [vmem:[#allocation5 + $0x68] sm:$0xf]
    %v4757 = vld [vmem:[#allocation5 + $0x6c] sm:$0xf]
    %v4758 = vld [vmem:[#allocation5 + $0x70] sm:$0xf]
    %v4759 = vld [vmem:[#allocation5 + $0x74] sm:$0xf]
    %v4760 = vld [vmem:[#allocation5 + $0x78] sm:$0xf]
    %v4761 = vld [vmem:[#allocation5 + $0x7c] sm:$0xf]
    %v4762 = vld [vmem:[%s6] sm:$0x1]
    %v4764 = vlaneseq
    %v4765 = vshrl.u32 %v4764, 7
    %v4766 = vsub.s32 0, %v4765
    %v4767 = vrot.slane %v4762, %v4766
    %v4801 = vunpack.c.l.b16 %v4730
    %v4802 = vunpack.c.l.b16 %v4731
    %v4803 = vunpack.c.l.b16 %v4732
    %v4804 = vunpack.c.l.b16 %v4733
    %v4805 = vunpack.c.l.b16 %v4734
    %v4806 = vunpack.c.l.b16 %v4735
    %v4807 = vunpack.c.l.b16 %v4736
    %v4808 = vunpack.c.l.b16 %v4737
    %v4809 = vunpack.c.l.b16 %v4738
    %v4810 = vunpack.c.l.b16 %v4739
    %v4811 = vunpack.c.l.b16 %v4740
    %v4812 = vunpack.c.l.b16 %v4741
    %v4813 = vunpack.c.l.b16 %v4742
    %v4814 = vunpack.c.l.b16 %v4743
    %v4815 = vunpack.c.l.b16 %v4744
    %v4816 = vunpack.c.l.b16 %v4745
    %v4817 = vunpack.c.l.b16 %v4746
    %v4818 = vunpack.c.l.b16 %v4747
    %v4819 = vunpack.c.l.b16 %v4748
    %v4820 = vunpack.c.l.b16 %v4749
    %v4821 = vunpack.c.l.b16 %v4750
    %v4822 = vunpack.c.l.b16 %v4751
    %v4823 = vunpack.c.l.b16 %v4752
    %v4824 = vunpack.c.l.b16 %v4753
    %v4825 = vunpack.c.l.b16 %v4754
    %v4826 = vunpack.c.l.b16 %v4755
    %v4827 = vunpack.c.l.b16 %v4756
    %v4828 = vunpack.c.l.b16 %v4757
    %v4829 = vunpack.c.l.b16 %v4758
    %v4830 = vunpack.c.l.b16 %v4759
    %v4831 = vunpack.c.l.b16 %v4760
    %v4832 = vunpack.c.l.b16 %v4761
    %v4833 = vpack.c.b16 %v4802, %v4801
    %v4834 = vpack.c.b16 %v4804, %v4803
    %v4835 = vpack.c.b16 %v4806, %v4805
    %v4836 = vpack.c.b16 %v4808, %v4807
    %v4837 = vpack.c.b16 %v4810, %v4809
    %v4838 = vpack.c.b16 %v4812, %v4811
    %v4839 = vpack.c.b16 %v4814, %v4813
    %v4840 = vpack.c.b16 %v4816, %v4815
    %v4841 = vpack.c.b16 %v4818, %v4817
    %v4842 = vpack.c.b16 %v4820, %v4819
    %v4843 = vpack.c.b16 %v4822, %v4821
    %v4844 = vpack.c.b16 %v4824, %v4823
    %v4845 = vpack.c.b16 %v4826, %v4825
    %v4846 = vpack.c.b16 %v4828, %v4827
    %v4847 = vpack.c.b16 %v4830, %v4829
    %v4848 = vpack.c.b16 %v4832, %v4831
    %4865 = vmatprep.subr.bf16.mxu0 0
    %4866 = vmatpush1.bf16.msra.mxu0 %v4833
    %4867 = vmatprep.subr.bf16.mxu0 0
    %4868 = vmatpush1.bf16.msra.mxu0 %v4834
    %4869 = vmatprep.subr.bf16.mxu0 0
    %4870 = vmatpush1.bf16.msra.mxu0 %v4835
    %4871 = vmatprep.subr.bf16.mxu0 0
    %4872 = vmatpush1.bf16.msra.mxu0 %v4836
    %4873 = vmatprep.subr.bf16.mxu0 0
    %4874 = vmatpush1.bf16.msra.mxu0 %v4837
    %4875 = vmatprep.subr.bf16.mxu0 0
    %4876 = vmatpush1.bf16.msra.mxu0 %v4838
    %4877 = vmatprep.subr.bf16.mxu0 0
    %4878 = vmatpush1.bf16.msra.mxu0 %v4839
    %4879 = vmatprep.subr.bf16.mxu0 0
    %4880 = vmatpush1.bf16.msra.mxu0 %v4840
    %4881 = vmatprep.subr.bf16.mxu0 0
    %4882 = vmatpush1.bf16.msra.mxu0 %v4841
    %4883 = vmatprep.subr.bf16.mxu0 0
    %4884 = vmatpush1.bf16.msra.mxu0 %v4842
    %4885 = vmatprep.subr.bf16.mxu0 0
    %4886 = vmatpush1.bf16.msra.mxu0 %v4843
    %4887 = vmatprep.subr.bf16.mxu0 0
    %4888 = vmatpush1.bf16.msra.mxu0 %v4844
    %4889 = vmatprep.subr.bf16.mxu0 0
    %4890 = vmatpush1.bf16.msra.mxu0 %v4845
    %4891 = vmatprep.subr.bf16.mxu0 0
    %4892 = vmatpush1.bf16.msra.mxu0 %v4846
    %4893 = vmatprep.subr.bf16.mxu0 0
    %4894 = vmatpush1.bf16.msra.mxu0 %v4847
    %4895 = vmatprep.subr.bf16.mxu0 0
    %4896 = vmatpush1.bf16.msra.mxu0 %v4848
    %4897 = vmatprep.mubr.bf16.mxu0 %v4667
    %4898 = vmatmul.mubr.bf16.gmra.mrb[0].mxu0 %v4666
    %v4899 = vpop.f32.mrb[0].mxu0
    %v4900 = vadd.f32 %v4767, %v4899
    %v4901 = vpop.f32.mrb[0].mxu0
    %v4902 = vpop.f32.mrb[0].mxu0
    %v4903 = vadd.f32 %v4767, %v4902
    %v4904 = vpop.f32.mrb[0].mxu0
    %4905 = vmatprep.mubr.bf16.mxu0 %v4669
    %4906 = vmatmul.mubr.bf16.gmra.mrb[0].mxu0 %v4668
    %v4907 = vpop.f32.mrb[0].mxu0
    %v4908 = vadd.f32 %v4767, %v4907
    %v4909 = vpop.f32.mrb[0].mxu0
    %v4910 = vpop.f32.mrb[0].mxu0
    %v4911 = vadd.f32 %v4767, %v4910
    %v4912 = vpop.f32.mrb[0].mxu0
    %4913 = vmatprep.mubr.bf16.mxu0 %v4671
    %4914 = vmatmul.mubr.bf16.gmra.mrb[0].mxu0 %v4670
    %v4915 = vpop.f32.mrb[0].mxu0
    %v4916 = vadd.f32 %v4767, %v4915
    %v4917 = vpop.f32.mrb[0].mxu0
    %v4918 = vpop.f32.mrb[0].mxu0
    %v4919 = vadd.f32 %v4767, %v4918
    %v4920 = vpop.f32.mrb[0].mxu0
    %4921 = vmatprep.mubr.bf16.mxu0 %v4673
    %4922 = vmatmul.mubr.bf16.gmra.mrb[0].mxu0 %v4672
    %v4923 = vpop.f32.mrb[0].mxu0
    %v4924 = vadd.f32 %v4767, %v4923
    %v4925 = vpop.f32.mrb[0].mxu0
    %v4926 = vpop.f32.mrb[0].mxu0
    %v4927 = vadd.f32 %v4767, %v4926
    %v4928 = vpop.f32.mrb[0].mxu0
    %4929 = vmatprep.mubr.bf16.mxu0 %v4675
    %4930 = vmatmul.mubr.bf16.gmra.mrb[0].mxu0 %v4674
    %v4931 = vpop.f32.mrb[0].mxu0
    %v4932 = vadd.f32 %v4767, %v4931
    %v4933 = vpop.f32.mrb[0].mxu0
    %v4934 = vpop.f32.mrb[0].mxu0
    %v4935 = vadd.f32 %v4767, %v4934
    %v4936 = vpop.f32.mrb[0].mxu0
    %4937 = vmatprep.mubr.bf16.mxu0 %v4677
    %4938 = vmatmul.mubr.bf16.gmra.mrb[0].mxu0 %v4676
    %v4939 = vpop.f32.mrb[0].mxu0
    %v4940 = vadd.f32 %v4767, %v4939
    %v4941 = vpop.f32.mrb[0].mxu0
    %v4942 = vpop.f32.mrb[0].mxu0
    %v4943 = vadd.f32 %v4767, %v4942
    %v4944 = vpop.f32.mrb[0].mxu0
    %4945 = vmatprep.mubr.bf16.mxu0 %v4679
    %4946 = vmatmul.mubr.bf16.gmra.mrb[0].mxu0 %v4678
    %v4947 = vpop.f32.mrb[0].mxu0
    %v4948 = vadd.f32 %v4767, %v4947
    %v4949 = vpop.f32.mrb[0].mxu0
    %v4950 = vpop.f32.mrb[0].mxu0
    %v4951 = vadd.f32 %v4767, %v4950
    %v4952 = vpop.f32.mrb[0].mxu0
    %4953 = vmatprep.mubr.bf16.mxu0 %v4681
    %4954 = vmatmul.mubr.bf16.gmra.mrb[0].mxu0 %v4680
    %v4955 = vpop.f32.mrb[0].mxu0
    %v4956 = vadd.f32 %v4767, %v4955
    %v4957 = vpop.f32.mrb[0].mxu0
    %v4958 = vpop.f32.mrb[0].mxu0
    %v4959 = vadd.f32 %v4767, %v4958
    %v4960 = vpop.f32.mrb[0].mxu0
    %4961 = vmatprep.mubr.bf16.mxu0 %v4683
    %4962 = vmatmul.mubr.bf16.gmra.mrb[0].mxu0 %v4682
    %v4963 = vpop.f32.mrb[0].mxu0
    %v4964 = vadd.f32 %v4767, %v4963
    %v4965 = vpop.f32.mrb[0].mxu0
    %v4966 = vpop.f32.mrb[0].mxu0
    %v4967 = vadd.f32 %v4767, %v4966
    %v4968 = vpop.f32.mrb[0].mxu0
    %4969 = vmatprep.mubr.bf16.mxu0 %v4685
    %4970 = vmatmul.mubr.bf16.gmra.mrb[0].mxu0 %v4684
    %v4971 = vpop.f32.mrb[0].mxu0
    %v4972 = vadd.f32 %v4767, %v4971
    %v4973 = vpop.f32.mrb[0].mxu0
    %v4974 = vpop.f32.mrb[0].mxu0
    %v4975 = vadd.f32 %v4767, %v4974
    %v4976 = vpop.f32.mrb[0].mxu0
    %4977 = vmatprep.mubr.bf16.mxu0 %v4687
    %4978 = vmatmul.mubr.bf16.gmra.mrb[0].mxu0 %v4686
    %v4979 = vpop.f32.mrb[0].mxu0
    %v4980 = vadd.f32 %v4767, %v4979
    %v4981 = vpop.f32.mrb[0].mxu0
    %v4982 = vpop.f32.mrb[0].mxu0
    %v4983 = vadd.f32 %v4767, %v4982
    %v4984 = vpop.f32.mrb[0].mxu0
    %4985 = vmatprep.mubr.bf16.mxu0 %v4689
    %4986 = vmatmul.mubr.bf16.gmra.mrb[0].mxu0 %v4688
    %v4987 = vpop.f32.mrb[0].mxu0
    %v4988 = vadd.f32 %v4767, %v4987
    %v4989 = vpop.f32.mrb[0].mxu0
    %v4990 = vpop.f32.mrb[0].mxu0
    %v4991 = vadd.f32 %v4767, %v4990
    %v4992 = vpop.f32.mrb[0].mxu0
    %4993 = vmatprep.mubr.bf16.mxu0 %v4691
    %4994 = vmatmul.mubr.bf16.gmra.mrb[0].mxu0 %v4690
    %v4995 = vpop.f32.mrb[0].mxu0
    %v4996 = vadd.f32 %v4767, %v4995
    %v4997 = vpop.f32.mrb[0].mxu0
    %v4998 = vpop.f32.mrb[0].mxu0
    %v4999 = vadd.f32 %v4767, %v4998
    %v5000 = vpop.f32.mrb[0].mxu0
    %5001 = vmatprep.mubr.bf16.mxu0 %v4693
    %5002 = vmatmul.mubr.bf16.gmra.mrb[0].mxu0 %v4692
    %v5003 = vpop.f32.mrb[0].mxu0
    %v5004 = vadd.f32 %v4767, %v5003
    %v5005 = vpop.f32.mrb[0].mxu0
    %v5006 = vpop.f32.mrb[0].mxu0
    %v5007 = vadd.f32 %v4767, %v5006
    %v5008 = vpop.f32.mrb[0].mxu0
    %5009 = vmatprep.mubr.bf16.mxu0 %v4695
    %5010 = vmatmul.mubr.bf16.gmra.mrb[0].mxu0 %v4694
    %v5011 = vpop.f32.mrb[0].mxu0
    %v5012 = vadd.f32 %v4767, %v5011
    %v5013 = vpop.f32.mrb[0].mxu0
    %v5014 = vpop.f32.mrb[0].mxu0
    %v5015 = vadd.f32 %v4767, %v5014
    %v5016 = vpop.f32.mrb[0].mxu0
    %5017 = vmatprep.mubr.bf16.mxu0 %v4697
    %5018 = vmatmul.mubr.bf16.gmra.mrb[0].mxu0 %v4696
    %v5019 = vpop.f32.mrb[0].mxu0
    %v5020 = vadd.f32 %v4767, %v5019
    %v5021 = vpop.f32.mrb[0].mxu0
    %v5022 = vpop.f32.mrb[0].mxu0
    %v5023 = vadd.f32 %v4767, %v5022
    %v5024 = vpop.f32.mrb[0].mxu0
    %5025 = vmatprep.mubr.bf16.mxu0 %v4699
    %5026 = vmatmul.mubr.bf16.gmra.mrb[0].mxu0 %v4698
    %v5027 = vpop.f32.mrb[0].mxu0
    %v5028 = vadd.f32 %v4767, %v5027
    %v5029 = vpop.f32.mrb[0].mxu0
    %v5030 = vpop.f32.mrb[0].mxu0
    %v5031 = vadd.f32 %v4767, %v5030
    %v5032 = vpop.f32.mrb[0].mxu0
    %5033 = vmatprep.mubr.bf16.mxu0 %v4701
    %5034 = vmatmul.mubr.bf16.gmra.mrb[0].mxu0 %v4700
    %v5035 = vpop.f32.mrb[0].mxu0
    %v5036 = vadd.f32 %v4767, %v5035
    %v5037 = vpop.f32.mrb[0].mxu0
    %v5038 = vpop.f32.mrb[0].mxu0
    %v5039 = vadd.f32 %v4767, %v5038
    %v5040 = vpop.f32.mrb[0].mxu0
    %5041 = vmatprep.mubr.bf16.mxu0 %v4703
    %5042 = vmatmul.mubr.bf16.gmra.mrb[0].mxu0 %v4702
    %v5043 = vpop.f32.mrb[0].mxu0
    %v5044 = vadd.f32 %v4767, %v5043
    %v5045 = vpop.f32.mrb[0].mxu0
    %v5046 = vpop.f32.mrb[0].mxu0
    %v5047 = vadd.f32 %v4767, %v5046
    %v5048 = vpop.f32.mrb[0].mxu0
    %5049 = vmatprep.mubr.bf16.mxu0 %v4705
    %5050 = vmatmul.mubr.bf16.gmra.mrb[0].mxu0 %v4704
    %v5051 = vpop.f32.mrb[0].mxu0
    %v5052 = vadd.f32 %v4767, %v5051
    %v5053 = vpop.f32.mrb[0].mxu0
    %v5054 = vpop.f32.mrb[0].mxu0
    %v5055 = vadd.f32 %v4767, %v5054
    %v5056 = vpop.f32.mrb[0].mxu0
    %5057 = vmatprep.mubr.bf16.mxu0 %v4707
    %5058 = vmatmul.mubr.bf16.gmra.mrb[0].mxu0 %v4706
    %v5059 = vpop.f32.mrb[0].mxu0
    %v5060 = vadd.f32 %v4767, %v5059
    %v5061 = vpop.f32.mrb[0].mxu0
    %v5062 = vpop.f32.mrb[0].mxu0
    %v5063 = vadd.f32 %v4767, %v5062
    %v5064 = vpop.f32.mrb[0].mxu0
    %5065 = vmatprep.mubr.bf16.mxu0 %v4709
    %5066 = vmatmul.mubr.bf16.gmra.mrb[0].mxu0 %v4708
    %v5067 = vpop.f32.mrb[0].mxu0
    %v5068 = vadd.f32 %v4767, %v5067
    %v5069 = vpop.f32.mrb[0].mxu0
    %v5070 = vpop.f32.mrb[0].mxu0
    %v5071 = vadd.f32 %v4767, %v5070
    %v5072 = vpop.f32.mrb[0].mxu0
    %5073 = vmatprep.mubr.bf16.mxu0 %v4711
    %5074 = vmatmul.mubr.bf16.gmra.mrb[0].mxu0 %v4710
    %v5075 = vpop.f32.mrb[0].mxu0
    %v5076 = vadd.f32 %v4767, %v5075
    %v5077 = vpop.f32.mrb[0].mxu0
    %v5078 = vpop.f32.mrb[0].mxu0
    %v5079 = vadd.f32 %v4767, %v5078
    %v5080 = vpop.f32.mrb[0].mxu0
    %5081 = vmatprep.mubr.bf16.mxu0 %v4713
    %5082 = vmatmul.mubr.bf16.gmra.mrb[0].mxu0 %v4712
    %v5083 = vpop.f32.mrb[0].mxu0
    %v5084 = vadd.f32 %v4767, %v5083
    %v5085 = vpop.f32.mrb[0].mxu0
    %v5086 = vpop.f32.mrb[0].mxu0
    %v5087 = vadd.f32 %v4767, %v5086
    %v5088 = vpop.f32.mrb[0].mxu0
    %5089 = vmatprep.mubr.bf16.mxu0 %v4715
    %5090 = vmatmul.mubr.bf16.gmra.mrb[0].mxu0 %v4714
    %v5091 = vpop.f32.mrb[0].mxu0
    %v5092 = vadd.f32 %v4767, %v5091
    %v5093 = vpop.f32.mrb[0].mxu0
    %v5094 = vpop.f32.mrb[0].mxu0
    %v5095 = vadd.f32 %v4767, %v5094
    %v5096 = vpop.f32.mrb[0].mxu0
    %5097 = vmatprep.mubr.bf16.mxu0 %v4717
    %5098 = vmatmul.mubr.bf16.gmra.mrb[0].mxu0 %v4716
    %v5099 = vpop.f32.mrb[0].mxu0
    %v5100 = vadd.f32 %v4767, %v5099
    %v5101 = vpop.f32.mrb[0].mxu0
    %v5102 = vpop.f32.mrb[0].mxu0
    %v5103 = vadd.f32 %v4767, %v5102
    %v5104 = vpop.f32.mrb[0].mxu0
    %5105 = vmatprep.mubr.bf16.mxu0 %v4719
    %5106 = vmatmul.mubr.bf16.gmra.mrb[0].mxu0 %v4718
    %v5107 = vpop.f32.mrb[0].mxu0
    %v5108 = vadd.f32 %v4767, %v5107
    %v5109 = vpop.f32.mrb[0].mxu0
    %v5110 = vpop.f32.mrb[0].mxu0
    %v5111 = vadd.f32 %v4767, %v5110
    %v5112 = vpop.f32.mrb[0].mxu0
    %5113 = vmatprep.mubr.bf16.mxu0 %v4721
    %5114 = vmatmul.mubr.bf16.gmra.mrb[0].mxu0 %v4720
    %v5115 = vpop.f32.mrb[0].mxu0
    %v5116 = vadd.f32 %v4767, %v5115
    %v5117 = vpop.f32.mrb[0].mxu0
    %v5118 = vpop.f32.mrb[0].mxu0
    %v5119 = vadd.f32 %v4767, %v5118
    %v5120 = vpop.f32.mrb[0].mxu0
    %5121 = vmatprep.mubr.bf16.mxu0 %v4723
    %5122 = vmatmul.mubr.bf16.gmra.mrb[0].mxu0 %v4722
    %v5123 = vpop.f32.mrb[0].mxu0
    %v5124 = vadd.f32 %v4767, %v5123
    %v5125 = vpop.f32.mrb[0].mxu0
    %v5126 = vpop.f32.mrb[0].mxu0
    %v5127 = vadd.f32 %v4767, %v5126
    %v5128 = vpop.f32.mrb[0].mxu0
    %5129 = vmatprep.mubr.bf16.mxu0 %v4725
    %5130 = vmatmul.mubr.bf16.gmra.mrb[0].mxu0 %v4724
    %v5131 = vpop.f32.mrb[0].mxu0
    %v5132 = vadd.f32 %v4767, %v5131
    %v5133 = vpop.f32.mrb[0].mxu0
    %v5134 = vpop.f32.mrb[0].mxu0
    %v5135 = vadd.f32 %v4767, %v5134
    %v5136 = vpop.f32.mrb[0].mxu0
    %5137 = vmatprep.mubr.bf16.mxu0 %v4727
    %5138 = vmatmul.mubr.bf16.gmra.mrb[0].mxu0 %v4726
    %v5139 = vpop.f32.mrb[0].mxu0
    %v5140 = vadd.f32 %v4767, %v5139
    %v5141 = vpop.f32.mrb[0].mxu0
    %v5142 = vpop.f32.mrb[0].mxu0
    %v5143 = vadd.f32 %v4767, %v5142
    %v5144 = vpop.f32.mrb[0].mxu0
    %5145 = vmatprep.mubr.bf16.mxu0 %v4729
    %5146 = vmatmul.mubr.bf16.gmra.mrb[0].mxu0 %v4728
    %v5147 = vpop.f32.mrb[0].mxu0
    %v5148 = vadd.f32 %v4767, %v5147
    %v5149 = vpop.f32.mrb[0].mxu0
    %v5150 = vpop.f32.mrb[0].mxu0
    %v5151 = vadd.f32 %v4767, %v5150
    %v5152 = vpop.f32.mrb[0].mxu0
    %5153 = vdwg.mxu0
    %v5154 = vmax.f32 %v4900, 0.0
    %v5155 = vmax.f32 %v4903, 0.0
    %v5156 = vmax.f32 %v4908, 0.0
    %v5157 = vmax.f32 %v4911, 0.0
    %v5158 = vmax.f32 %v4916, 0.0
    %v5159 = vmax.f32 %v4919, 0.0
    %v5160 = vmax.f32 %v4924, 0.0
    %v5161 = vmax.f32 %v4927, 0.0
    %v5162 = vmax.f32 %v4932, 0.0
    %v5163 = vmax.f32 %v4935, 0.0
    %v5164 = vmax.f32 %v4940, 0.0
    %v5165 = vmax.f32 %v4943, 0.0
    %v5166 = vmax.f32 %v4948, 0.0
    %v5167 = vmax.f32 %v4951, 0.0
    %v5168 = vmax.f32 %v4956, 0.0
    %v5169 = vmax.f32 %v4959, 0.0
    %v5170 = vmax.f32 %v4964, 0.0
    %v5171 = vmax.f32 %v4967, 0.0
    %v5172 = vmax.f32 %v4972, 0.0
    %v5173 = vmax.f32 %v4975, 0.0
    %v5174 = vmax.f32 %v4980, 0.0
    %v5175 = vmax.f32 %v4983, 0.0
    %v5176 = vmax.f32 %v4988, 0.0
    %v5177 = vmax.f32 %v4991, 0.0
    %v5178 = vmax.f32 %v4996, 0.0
    %v5179 = vmax.f32 %v4999, 0.0
    %v5180 = vmax.f32 %v5004, 0.0
    %v5181 = vmax.f32 %v5007, 0.0
    %v5182 = vmax.f32 %v5012, 0.0
    %v5183 = vmax.f32 %v5015, 0.0
    %v5184 = vmax.f32 %v5020, 0.0
    %v5185 = vmax.f32 %v5023, 0.0
    %v5186 = vmax.f32 %v5028, 0.0
    %v5187 = vmax.f32 %v5031, 0.0
    %v5188 = vmax.f32 %v5036, 0.0
    %v5189 = vmax.f32 %v5039, 0.0
    %v5190 = vmax.f32 %v5044, 0.0
    %v5191 = vmax.f32 %v5047, 0.0
    %v5192 = vmax.f32 %v5052, 0.0
    %v5193 = vmax.f32 %v5055, 0.0
    %v5194 = vmax.f32 %v5060, 0.0
    %v5195 = vmax.f32 %v5063, 0.0
    %v5196 = vmax.f32 %v5068, 0.0
    %v5197 = vmax.f32 %v5071, 0.0
    %v5198 = vmax.f32 %v5076, 0.0
    %v5199 = vmax.f32 %v5079, 0.0
    %v5200 = vmax.f32 %v5084, 0.0
    %v5201 = vmax.f32 %v5087, 0.0
    %v5202 = vmax.f32 %v5092, 0.0
    %v5203 = vmax.f32 %v5095, 0.0
    %v5204 = vmax.f32 %v5100, 0.0
    %v5205 = vmax.f32 %v5103, 0.0
    %v5206 = vmax.f32 %v5108, 0.0
    %v5207 = vmax.f32 %v5111, 0.0
    %v5208 = vmax.f32 %v5116, 0.0
    %v5209 = vmax.f32 %v5119, 0.0
    %v5210 = vmax.f32 %v5124, 0.0
    %v5211 = vmax.f32 %v5127, 0.0
    %v5212 = vmax.f32 %v5132, 0.0
    %v5213 = vmax.f32 %v5135, 0.0
    %v5214 = vmax.f32 %v5140, 0.0
    %v5215 = vmax.f32 %v5143, 0.0
    %v5216 = vmax.f32 %v5148, 0.0
    %v5217 = vmax.f32 %v5151, 0.0
    %v5218 = vpack.c.bf16 %v5155, %v5154
    %v5219 = vpack.c.bf16 %v5157, %v5156
    %v5220 = vpack.c.bf16 %v5159, %v5158
    %v5221 = vpack.c.bf16 %v5161, %v5160
    %v5222 = vpack.c.bf16 %v5163, %v5162
    %v5223 = vpack.c.bf16 %v5165, %v5164
    %v5224 = vpack.c.bf16 %v5167, %v5166
    %v5225 = vpack.c.bf16 %v5169, %v5168
    %v5226 = vpack.c.bf16 %v5171, %v5170
    %v5227 = vpack.c.bf16 %v5173, %v5172
    %v5228 = vpack.c.bf16 %v5175, %v5174
    %v5229 = vpack.c.bf16 %v5177, %v5176
    %v5230 = vpack.c.bf16 %v5179, %v5178
    %v5231 = vpack.c.bf16 %v5181, %v5180
    %v5232 = vpack.c.bf16 %v5183, %v5182
    %v5233 = vpack.c.bf16 %v5185, %v5184
    %v5234 = vpack.c.bf16 %v5187, %v5186
    %v5235 = vpack.c.bf16 %v5189, %v5188
    %v5236 = vpack.c.bf16 %v5191, %v5190
    %v5237 = vpack.c.bf16 %v5193, %v5192
    %v5238 = vpack.c.bf16 %v5195, %v5194
    %v5239 = vpack.c.bf16 %v5197, %v5196
    %v5240 = vpack.c.bf16 %v5199, %v5198
    %v5241 = vpack.c.bf16 %v5201, %v5200
    %v5242 = vpack.c.bf16 %v5203, %v5202
    %v5243 = vpack.c.bf16 %v5205, %v5204
    %v5244 = vpack.c.bf16 %v5207, %v5206
    %v5245 = vpack.c.bf16 %v5209, %v5208
    %v5246 = vpack.c.bf16 %v5211, %v5210
    %v5247 = vpack.c.bf16 %v5213, %v5212
    %v5248 = vpack.c.bf16 %v5215, %v5214
    %v5249 = vpack.c.bf16 %v5217, %v5216
    %v5250 = vld [vmem:[#allocation7] sm:$0xf]
    %v5251 = vld [vmem:[#allocation7 + $0x4] sm:$0xf]
    %v5252 = vld [vmem:[#allocation7 + $0x8] sm:$0xf]
    %v5253 = vld [vmem:[#allocation7 + $0xc] sm:$0xf]
    %v5254 = vld [vmem:[#allocation7 + $0x10] sm:$0xf]
    %v5255 = vld [vmem:[#allocation7 + $0x14] sm:$0xf]
    %v5256 = vld [vmem:[#allocation7 + $0x18] sm:$0xf]
    %v5257 = vld [vmem:[#allocation7 + $0x1c] sm:$0xf]
    %v5258 = vld [vmem:[#allocation7 + $0x20] sm:$0xf]
    %v5259 = vld [vmem:[#allocation7 + $0x24] sm:$0xf]
    %v5260 = vld [vmem:[#allocation7 + $0x28] sm:$0xf]
    %v5261 = vld [vmem:[#allocation7 + $0x2c] sm:$0xf]
    %v5262 = vld [vmem:[#allocation7 + $0x30] sm:$0xf]
    %v5263 = vld [vmem:[#allocation7 + $0x34] sm:$0xf]
    %v5264 = vld [vmem:[#allocation7 + $0x38] sm:$0xf]
    %v5265 = vld [vmem:[#allocation7 + $0x3c] sm:$0xf]
    %v5266 = vld [vmem:[%s8] sm:$0x1]
    %v5268 = vlaneseq
    %v5269 = vshrl.u32 %v5268, 7
    %v5270 = vsub.s32 0, %v5269
    %v5271 = vrot.slane %v5266, %v5270
    %v5289 = vunpack.c.l.b16 %v5250
    %v5290 = vunpack.c.l.b16 %v5251
    %v5291 = vunpack.c.l.b16 %v5252
    %v5292 = vunpack.c.l.b16 %v5253
    %v5293 = vunpack.c.l.b16 %v5254
    %v5294 = vunpack.c.l.b16 %v5255
    %v5295 = vunpack.c.l.b16 %v5256
    %v5296 = vunpack.c.l.b16 %v5257
    %v5297 = vunpack.c.l.b16 %v5258
    %v5298 = vunpack.c.l.b16 %v5259
    %v5299 = vunpack.c.l.b16 %v5260
    %v5300 = vunpack.c.l.b16 %v5261
    %v5301 = vunpack.c.l.b16 %v5262
    %v5302 = vunpack.c.l.b16 %v5263
    %v5303 = vunpack.c.l.b16 %v5264
    %v5304 = vunpack.c.l.b16 %v5265
    %v5305 = vpack.c.b16 %v5290, %v5289
    %v5306 = vpack.c.b16 %v5292, %v5291
    %v5307 = vpack.c.b16 %v5294, %v5293
    %v5308 = vpack.c.b16 %v5296, %v5295
    %v5309 = vpack.c.b16 %v5298, %v5297
    %v5310 = vpack.c.b16 %v5300, %v5299
    %v5311 = vpack.c.b16 %v5302, %v5301
    %v5312 = vpack.c.b16 %v5304, %v5303
    %5321 = vmatprep.subr.bf16.mxu0 0
    %5322 = vmatpush1.bf16.msra.mxu0 %v5305
    %5323 = vmatprep.subr.bf16.mxu0 0
    %5324 = vmatpush1.bf16.msra.mxu0 %v5306
    %5325 = vmatprep.subr.bf16.mxu0 0
    %5326 = vmatpush1.bf16.msra.mxu0 %v5307
    %5327 = vmatprep.subr.bf16.mxu0 0
    %5328 = vmatpush1.bf16.msra.mxu0 %v5308
    %5329 = vmatprep.subr.bf16.mxu0 0
    %5330 = vmatpush1.bf16.msra.mxu0 %v5309
    %5331 = vmatprep.subr.bf16.mxu0 0
    %5332 = vmatpush1.bf16.msra.mxu0 %v5310
    %5333 = vmatprep.subr.bf16.mxu0 0
    %5334 = vmatpush1.bf16.msra.mxu0 %v5311
    %5335 = vmatprep.subr.bf16.mxu0 0
    %5336 = vmatpush1.bf16.msra.mxu0 %v5312
    %5337 = vmatprep.subr.bf16.mxu0 0
    %5338 = vmatpush1.bf16.msra.mxu0 0
    %5339 = vmatprep.subr.bf16.mxu0 0
    %5340 = vmatpush1.bf16.msra.mxu0 0
    %5341 = vmatprep.subr.bf16.mxu0 0
    %5342 = vmatpush1.bf16.msra.mxu0 0
    %5343 = vmatprep.subr.bf16.mxu0 0
    %5344 = vmatpush1.bf16.msra.mxu0 0
    %5345 = vmatprep.subr.bf16.mxu0 0
    %5346 = vmatpush1.bf16.msra.mxu0 0
    %5347 = vmatprep.subr.bf16.mxu0 0
    %5348 = vmatpush1.bf16.msra.mxu0 0
    %5349 = vmatprep.subr.bf16.mxu0 0
    %5350 = vmatpush1.bf16.msra.mxu0 0
    %5351 = vmatprep.subr.bf16.mxu0 0
    %5352 = vmatpush1.bf16.msra.mxu0 0
    %5353 = vmatprep.mubr.bf16.mxu0 0
    %5354 = vmatmul.mubr.bf16.gmra.mrb[0].mxu0 %v5218
    %v5355 = vpop.f32.mrb[0].mxu0
    %v5356 = vadd.f32 %v5271, %v5355
    %v5357 = vpop.f32.mrb[0].mxu0
    %v5358 = vpop.f32.mrb[0].mxu0
    %v5359 = vadd.f32 %v5271, %v5358
    %v5360 = vpop.f32.mrb[0].mxu0
    %5361 = vmatprep.mubr.bf16.mxu0 0
    %5362 = vmatmul.mubr.bf16.gmra.mrb[0].mxu0 %v5219
    %v5363 = vpop.f32.mrb[0].mxu0
    %v5364 = vadd.f32 %v5271, %v5363
    %v5365 = vpop.f32.mrb[0].mxu0
    %v5366 = vpop.f32.mrb[0].mxu0
    %v5367 = vadd.f32 %v5271, %v5366
    %v5368 = vpop.f32.mrb[0].mxu0
    %5369 = vmatprep.mubr.bf16.mxu0 0
    %5370 = vmatmul.mubr.bf16.gmra.mrb[0].mxu0 %v5220
    %v5371 = vpop.f32.mrb[0].mxu0
    %v5372 = vadd.f32 %v5271, %v5371
    %v5373 = vpop.f32.mrb[0].mxu0
    %v5374 = vpop.f32.mrb[0].mxu0
    %v5375 = vadd.f32 %v5271, %v5374
    %v5376 = vpop.f32.mrb[0].mxu0
    %5377 = vmatprep.mubr.bf16.mxu0 0
    %5378 = vmatmul.mubr.bf16.gmra.mrb[0].mxu0 %v5221
    %v5379 = vpop.f32.mrb[0].mxu0
    %v5380 = vadd.f32 %v5271, %v5379
    %v5381 = vpop.f32.mrb[0].mxu0
    %v5382 = vpop.f32.mrb[0].mxu0
    %v5383 = vadd.f32 %v5271, %v5382
    %v5384 = vpop.f32.mrb[0].mxu0
    %5385 = vmatprep.mubr.bf16.mxu0 0
    %5386 = vmatmul.mubr.bf16.gmra.mrb[0].mxu0 %v5222
    %v5387 = vpop.f32.mrb[0].mxu0
    %v5388 = vadd.f32 %v5271, %v5387
    %v5389 = vpop.f32.mrb[0].mxu0
    %v5390 = vpop.f32.mrb[0].mxu0
    %v5391 = vadd.f32 %v5271, %v5390
    %v5392 = vpop.f32.mrb[0].mxu0
    %5393 = vmatprep.mubr.bf16.mxu0 0
    %5394 = vmatmul.mubr.bf16.gmra.mrb[0].mxu0 %v5223
    %v5395 = vpop.f32.mrb[0].mxu0
    %v5396 = vadd.f32 %v5271, %v5395
    %v5397 = vpop.f32.mrb[0].mxu0
    %v5398 = vpop.f32.mrb[0].mxu0
    %v5399 = vadd.f32 %v5271, %v5398
    %v5400 = vpop.f32.mrb[0].mxu0
    %5401 = vmatprep.mubr.bf16.mxu0 0
    %5402 = vmatmul.mubr.bf16.gmra.mrb[0].mxu0 %v5224
    %v5403 = vpop.f32.mrb[0].mxu0
    %v5404 = vadd.f32 %v5271, %v5403
    %v5405 = vpop.f32.mrb[0].mxu0
    %v5406 = vpop.f32.mrb[0].mxu0
    %v5407 = vadd.f32 %v5271, %v5406
    %v5408 = vpop.f32.mrb[0].mxu0
    %5409 = vmatprep.mubr.bf16.mxu0 0
    %5410 = vmatmul.mubr.bf16.gmra.mrb[0].mxu0 %v5225
    %v5411 = vpop.f32.mrb[0].mxu0
    %v5412 = vadd.f32 %v5271, %v5411
    %v5413 = vpop.f32.mrb[0].mxu0
    %v5414 = vpop.f32.mrb[0].mxu0
    %v5415 = vadd.f32 %v5271, %v5414
    %v5416 = vpop.f32.mrb[0].mxu0
    %5417 = vmatprep.mubr.bf16.mxu0 0
    %5418 = vmatmul.mubr.bf16.gmra.mrb[0].mxu0 %v5226
    %v5419 = vpop.f32.mrb[0].mxu0
    %v5420 = vadd.f32 %v5271, %v5419
    %v5421 = vpop.f32.mrb[0].mxu0
    %v5422 = vpop.f32.mrb[0].mxu0
    %v5423 = vadd.f32 %v5271, %v5422
    %v5424 = vpop.f32.mrb[0].mxu0
    %5425 = vmatprep.mubr.bf16.mxu0 0
    %5426 = vmatmul.mubr.bf16.gmra.mrb[0].mxu0 %v5227
    %v5427 = vpop.f32.mrb[0].mxu0
    %v5428 = vadd.f32 %v5271, %v5427
    %v5429 = vpop.f32.mrb[0].mxu0
    %v5430 = vpop.f32.mrb[0].mxu0
    %v5431 = vadd.f32 %v5271, %v5430
    %v5432 = vpop.f32.mrb[0].mxu0
    %5433 = vmatprep.mubr.bf16.mxu0 0
    %5434 = vmatmul.mubr.bf16.gmra.mrb[0].mxu0 %v5228
    %v5435 = vpop.f32.mrb[0].mxu0
    %v5436 = vadd.f32 %v5271, %v5435
    %v5437 = vpop.f32.mrb[0].mxu0
    %v5438 = vpop.f32.mrb[0].mxu0
    %v5439 = vadd.f32 %v5271, %v5438
    %v5440 = vpop.f32.mrb[0].mxu0
    %5441 = vmatprep.mubr.bf16.mxu0 0
    %5442 = vmatmul.mubr.bf16.gmra.mrb[0].mxu0 %v5229
    %v5443 = vpop.f32.mrb[0].mxu0
    %v5444 = vadd.f32 %v5271, %v5443
    %v5445 = vpop.f32.mrb[0].mxu0
    %v5446 = vpop.f32.mrb[0].mxu0
    %v5447 = vadd.f32 %v5271, %v5446
    %v5448 = vpop.f32.mrb[0].mxu0
    %5449 = vmatprep.mubr.bf16.mxu0 0
    %5450 = vmatmul.mubr.bf16.gmra.mrb[0].mxu0 %v5230
    %v5451 = vpop.f32.mrb[0].mxu0
    %v5452 = vadd.f32 %v5271, %v5451
    %v5453 = vpop.f32.mrb[0].mxu0
    %v5454 = vpop.f32.mrb[0].mxu0
    %v5455 = vadd.f32 %v5271, %v5454
    %v5456 = vpop.f32.mrb[0].mxu0
    %5457 = vmatprep.mubr.bf16.mxu0 0
    %5458 = vmatmul.mubr.bf16.gmra.mrb[0].mxu0 %v5231
    %v5459 = vpop.f32.mrb[0].mxu0
    %v5460 = vadd.f32 %v5271, %v5459
    %v5461 = vpop.f32.mrb[0].mxu0
    %v5462 = vpop.f32.mrb[0].mxu0
    %v5463 = vadd.f32 %v5271, %v5462
    %v5464 = vpop.f32.mrb[0].mxu0
    %5465 = vmatprep.mubr.bf16.mxu0 0
    %5466 = vmatmul.mubr.bf16.gmra.mrb[0].mxu0 %v5232
    %v5467 = vpop.f32.mrb[0].mxu0
    %v5468 = vadd.f32 %v5271, %v5467
    %v5469 = vpop.f32.mrb[0].mxu0
    %v5470 = vpop.f32.mrb[0].mxu0
    %v5471 = vadd.f32 %v5271, %v5470
    %v5472 = vpop.f32.mrb[0].mxu0
    %5473 = vmatprep.mubr.bf16.mxu0 0
    %5474 = vmatmul.mubr.bf16.gmra.mrb[0].mxu0 %v5233
    %v5475 = vpop.f32.mrb[0].mxu0
    %v5476 = vadd.f32 %v5271, %v5475
    %v5477 = vpop.f32.mrb[0].mxu0
    %v5478 = vpop.f32.mrb[0].mxu0
    %v5479 = vadd.f32 %v5271, %v5478
    %v5480 = vpop.f32.mrb[0].mxu0
    %5481 = vmatprep.mubr.bf16.mxu0 0
    %5482 = vmatmul.mubr.bf16.gmra.mrb[0].mxu0 %v5234
    %v5483 = vpop.f32.mrb[0].mxu0
    %v5484 = vadd.f32 %v5271, %v5483
    %v5485 = vpop.f32.mrb[0].mxu0
    %v5486 = vpop.f32.mrb[0].mxu0
    %v5487 = vadd.f32 %v5271, %v5486
    %v5488 = vpop.f32.mrb[0].mxu0
    %5489 = vmatprep.mubr.bf16.mxu0 0
    %5490 = vmatmul.mubr.bf16.gmra.mrb[0].mxu0 %v5235
    %v5491 = vpop.f32.mrb[0].mxu0
    %v5492 = vadd.f32 %v5271, %v5491
    %v5493 = vpop.f32.mrb[0].mxu0
    %v5494 = vpop.f32.mrb[0].mxu0
    %v5495 = vadd.f32 %v5271, %v5494
    %v5496 = vpop.f32.mrb[0].mxu0
    %5497 = vmatprep.mubr.bf16.mxu0 0
    %5498 = vmatmul.mubr.bf16.gmra.mrb[0].mxu0 %v5236
    %v5499 = vpop.f32.mrb[0].mxu0
    %v5500 = vadd.f32 %v5271, %v5499
    %v5501 = vpop.f32.mrb[0].mxu0
    %v5502 = vpop.f32.mrb[0].mxu0
    %v5503 = vadd.f32 %v5271, %v5502
    %v5504 = vpop.f32.mrb[0].mxu0
    %5505 = vmatprep.mubr.bf16.mxu0 0
    %5506 = vmatmul.mubr.bf16.gmra.mrb[0].mxu0 %v5237
    %v5507 = vpop.f32.mrb[0].mxu0
    %v5508 = vadd.f32 %v5271, %v5507
    %v5509 = vpop.f32.mrb[0].mxu0
    %v5510 = vpop.f32.mrb[0].mxu0
    %v5511 = vadd.f32 %v5271, %v5510
    %v5512 = vpop.f32.mrb[0].mxu0
    %5513 = vmatprep.mubr.bf16.mxu0 0
    %5514 = vmatmul.mubr.bf16.gmra.mrb[0].mxu0 %v5238
    %v5515 = vpop.f32.mrb[0].mxu0
    %v5516 = vadd.f32 %v5271, %v5515
    %v5517 = vpop.f32.mrb[0].mxu0
    %v5518 = vpop.f32.mrb[0].mxu0
    %v5519 = vadd.f32 %v5271, %v5518
    %v5520 = vpop.f32.mrb[0].mxu0
    %5521 = vmatprep.mubr.bf16.mxu0 0
    %5522 = vmatmul.mubr.bf16.gmra.mrb[0].mxu0 %v5239
    %v5523 = vpop.f32.mrb[0].mxu0
    %v5524 = vadd.f32 %v5271, %v5523
    %v5525 = vpop.f32.mrb[0].mxu0
    %v5526 = vpop.f32.mrb[0].mxu0
    %v5527 = vadd.f32 %v5271, %v5526
    %v5528 = vpop.f32.mrb[0].mxu0
    %5529 = vmatprep.mubr.bf16.mxu0 0
    %5530 = vmatmul.mubr.bf16.gmra.mrb[0].mxu0 %v5240
    %v5531 = vpop.f32.mrb[0].mxu0
    %v5532 = vadd.f32 %v5271, %v5531
    %v5533 = vpop.f32.mrb[0].mxu0
    %v5534 = vpop.f32.mrb[0].mxu0
    %v5535 = vadd.f32 %v5271, %v5534
    %v5536 = vpop.f32.mrb[0].mxu0
    %5537 = vmatprep.mubr.bf16.mxu0 0
    %5538 = vmatmul.mubr.bf16.gmra.mrb[0].mxu0 %v5241
    %v5539 = vpop.f32.mrb[0].mxu0
    %v5540 = vadd.f32 %v5271, %v5539
    %v5541 = vpop.f32.mrb[0].mxu0
    %v5542 = vpop.f32.mrb[0].mxu0
    %v5543 = vadd.f32 %v5271, %v5542
    %v5544 = vpop.f32.mrb[0].mxu0
    %5545 = vmatprep.mubr.bf16.mxu0 0
    %5546 = vmatmul.mubr.bf16.gmra.mrb[0].mxu0 %v5242
    %v5547 = vpop.f32.mrb[0].mxu0
    %v5548 = vadd.f32 %v5271, %v5547
    %v5549 = vpop.f32.mrb[0].mxu0
    %v5550 = vpop.f32.mrb[0].mxu0
    %v5551 = vadd.f32 %v5271, %v5550
    %v5552 = vpop.f32.mrb[0].mxu0
    %5553 = vmatprep.mubr.bf16.mxu0 0
    %5554 = vmatmul.mubr.bf16.gmra.mrb[0].mxu0 %v5243
    %v5555 = vpop.f32.mrb[0].mxu0
    %v5556 = vadd.f32 %v5271, %v5555
    %v5557 = vpop.f32.mrb[0].mxu0
    %v5558 = vpop.f32.mrb[0].mxu0
    %v5559 = vadd.f32 %v5271, %v5558
    %v5560 = vpop.f32.mrb[0].mxu0
    %5561 = vmatprep.mubr.bf16.mxu0 0
    %5562 = vmatmul.mubr.bf16.gmra.mrb[0].mxu0 %v5244
    %v5563 = vpop.f32.mrb[0].mxu0
    %v5564 = vadd.f32 %v5271, %v5563
    %v5565 = vpop.f32.mrb[0].mxu0
    %v5566 = vpop.f32.mrb[0].mxu0
    %v5567 = vadd.f32 %v5271, %v5566
    %v5568 = vpop.f32.mrb[0].mxu0
    %5569 = vmatprep.mubr.bf16.mxu0 0
    %5570 = vmatmul.mubr.bf16.gmra.mrb[0].mxu0 %v5245
    %v5571 = vpop.f32.mrb[0].mxu0
    %v5572 = vadd.f32 %v5271, %v5571
    %v5573 = vpop.f32.mrb[0].mxu0
    %v5574 = vpop.f32.mrb[0].mxu0
    %v5575 = vadd.f32 %v5271, %v5574
    %v5576 = vpop.f32.mrb[0].mxu0
    %5577 = vmatprep.mubr.bf16.mxu0 0
    %5578 = vmatmul.mubr.bf16.gmra.mrb[0].mxu0 %v5246
    %v5579 = vpop.f32.mrb[0].mxu0
    %v5580 = vadd.f32 %v5271, %v5579
    %v5581 = vpop.f32.mrb[0].mxu0
    %v5582 = vpop.f32.mrb[0].mxu0
    %v5583 = vadd.f32 %v5271, %v5582
    %v5584 = vpop.f32.mrb[0].mxu0
    %5585 = vmatprep.mubr.bf16.mxu0 0
    %5586 = vmatmul.mubr.bf16.gmra.mrb[0].mxu0 %v5247
    %v5587 = vpop.f32.mrb[0].mxu0
    %v5588 = vadd.f32 %v5271, %v5587
    %v5589 = vpop.f32.mrb[0].mxu0
    %v5590 = vpop.f32.mrb[0].mxu0
    %v5591 = vadd.f32 %v5271, %v5590
    %v5592 = vpop.f32.mrb[0].mxu0
    %5593 = vmatprep.mubr.bf16.mxu0 0
    %5594 = vmatmul.mubr.bf16.gmra.mrb[0].mxu0 %v5248
    %v5595 = vpop.f32.mrb[0].mxu0
    %v5596 = vadd.f32 %v5271, %v5595
    %v5597 = vpop.f32.mrb[0].mxu0
    %v5598 = vpop.f32.mrb[0].mxu0
    %v5599 = vadd.f32 %v5271, %v5598
    %v5600 = vpop.f32.mrb[0].mxu0
    %5601 = vmatprep.mubr.bf16.mxu0 0
    %5602 = vmatmul.mubr.bf16.gmra.mrb[0].mxu0 %v5249
    %v5603 = vpop.f32.mrb[0].mxu0
    %v5604 = vadd.f32 %v5271, %v5603
    %v5605 = vpop.f32.mrb[0].mxu0
    %v5606 = vpop.f32.mrb[0].mxu0
    %v5607 = vadd.f32 %v5271, %v5606
    %v5608 = vpop.f32.mrb[0].mxu0
    %5609 = vdwg.mxu0
    %v5610 = vmax.f32 %v5356, 0.0
    %v5611 = vmax.f32 %v5359, 0.0
    %v5612 = vmax.f32 %v5364, 0.0
    %v5613 = vmax.f32 %v5367, 0.0
    %v5614 = vmax.f32 %v5372, 0.0
    %v5615 = vmax.f32 %v5375, 0.0
    %v5616 = vmax.f32 %v5380, 0.0
    %v5617 = vmax.f32 %v5383, 0.0
    %v5618 = vmax.f32 %v5388, 0.0
    %v5619 = vmax.f32 %v5391, 0.0
    %v5620 = vmax.f32 %v5396, 0.0
    %v5621 = vmax.f32 %v5399, 0.0
    %v5622 = vmax.f32 %v5404, 0.0
    %v5623 = vmax.f32 %v5407, 0.0
    %v5624 = vmax.f32 %v5412, 0.0
    %v5625 = vmax.f32 %v5415, 0.0
    %v5626 = vmax.f32 %v5420, 0.0
    %v5627 = vmax.f32 %v5423, 0.0
    %v5628 = vmax.f32 %v5428, 0.0
    %v5629 = vmax.f32 %v5431, 0.0
    %v5630 = vmax.f32 %v5436, 0.0
    %v5631 = vmax.f32 %v5439, 0.0
    %v5632 = vmax.f32 %v5444, 0.0
    %v5633 = vmax.f32 %v5447, 0.0
    %v5634 = vmax.f32 %v5452, 0.0
    %v5635 = vmax.f32 %v5455, 0.0
    %v5636 = vmax.f32 %v5460, 0.0
    %v5637 = vmax.f32 %v5463, 0.0
    %v5638 = vmax.f32 %v5468, 0.0
    %v5639 = vmax.f32 %v5471, 0.0
    %v5640 = vmax.f32 %v5476, 0.0
    %v5641 = vmax.f32 %v5479, 0.0
    %v5642 = vmax.f32 %v5484, 0.0
    %v5643 = vmax.f32 %v5487, 0.0
    %v5644 = vmax.f32 %v5492, 0.0
    %v5645 = vmax.f32 %v5495, 0.0
    %v5646 = vmax.f32 %v5500, 0.0
    %v5647 = vmax.f32 %v5503, 0.0
    %v5648 = vmax.f32 %v5508, 0.0
    %v5649 = vmax.f32 %v5511, 0.0
    %v5650 = vmax.f32 %v5516, 0.0
    %v5651 = vmax.f32 %v5519, 0.0
    %v5652 = vmax.f32 %v5524, 0.0
    %v5653 = vmax.f32 %v5527, 0.0
    %v5654 = vmax.f32 %v5532, 0.0
    %v5655 = vmax.f32 %v5535, 0.0
    %v5656 = vmax.f32 %v5540, 0.0
    %v5657 = vmax.f32 %v5543, 0.0
    %v5658 = vmax.f32 %v5548, 0.0
    %v5659 = vmax.f32 %v5551, 0.0
    %v5660 = vmax.f32 %v5556, 0.0
    %v5661 = vmax.f32 %v5559, 0.0
    %v5662 = vmax.f32 %v5564, 0.0
    %v5663 = vmax.f32 %v5567, 0.0
    %v5664 = vmax.f32 %v5572, 0.0
    %v5665 = vmax.f32 %v5575, 0.0
    %v5666 = vmax.f32 %v5580, 0.0
    %v5667 = vmax.f32 %v5583, 0.0
    %v5668 = vmax.f32 %v5588, 0.0
    %v5669 = vmax.f32 %v5591, 0.0
    %v5670 = vmax.f32 %v5596, 0.0
    %v5671 = vmax.f32 %v5599, 0.0
    %v5672 = vmax.f32 %v5604, 0.0
    %v5673 = vmax.f32 %v5607, 0.0
    %v5674 = vld [vmem:[%s9] sm:$0x1]
    %v5676 = vlaneseq
    %v5677 = vshrl.u32 %v5676, 7
    %v5678 = vsub.s32 0, %v5677
    %v5679 = vrot.slane %v5674, %v5678
    %v5681 = vmul.f32 %v5610, %v5679
    %v5682 = vmul.f32 %v5611, %v5679
    %v5683 = vmul.f32 %v5612, %v5679
    %v5684 = vmul.f32 %v5613, %v5679
    %v5685 = vmul.f32 %v5614, %v5679
    %v5686 = vmul.f32 %v5615, %v5679
    %v5687 = vmul.f32 %v5616, %v5679
    %v5688 = vmul.f32 %v5617, %v5679
    %v5689 = vmul.f32 %v5618, %v5679
    %v5690 = vmul.f32 %v5619, %v5679
    %v5691 = vmul.f32 %v5620, %v5679
    %v5692 = vmul.f32 %v5621, %v5679
    %v5693 = vmul.f32 %v5622, %v5679
    %v5694 = vmul.f32 %v5623, %v5679
    %v5695 = vmul.f32 %v5624, %v5679
    %v5696 = vmul.f32 %v5625, %v5679
    %v5697 = vmul.f32 %v5626, %v5679
    %v5698 = vmul.f32 %v5627, %v5679
    %v5699 = vmul.f32 %v5628, %v5679
    %v5700 = vmul.f32 %v5629, %v5679
    %v5701 = vmul.f32 %v5630, %v5679
    %v5702 = vmul.f32 %v5631, %v5679
    %v5703 = vmul.f32 %v5632, %v5679
    %v5704 = vmul.f32 %v5633, %v5679
    %v5705 = vmul.f32 %v5634, %v5679
    %v5706 = vmul.f32 %v5635, %v5679
    %v5707 = vmul.f32 %v5636, %v5679
    %v5708 = vmul.f32 %v5637, %v5679
    %v5709 = vmul.f32 %v5638, %v5679
    %v5710 = vmul.f32 %v5639, %v5679
    %v5711 = vmul.f32 %v5640, %v5679
    %v5712 = vmul.f32 %v5641, %v5679
    %v5713 = vmul.f32 %v5642, %v5679
    %v5714 = vmul.f32 %v5643, %v5679
    %v5715 = vmul.f32 %v5644, %v5679
    %v5716 = vmul.f32 %v5645, %v5679
    %v5717 = vmul.f32 %v5646, %v5679
    %v5718 = vmul.f32 %v5647, %v5679
    %v5719 = vmul.f32 %v5648, %v5679
    %v5720 = vmul.f32 %v5649, %v5679
    %v5721 = vmul.f32 %v5650, %v5679
    %v5722 = vmul.f32 %v5651, %v5679
    %v5723 = vmul.f32 %v5652, %v5679
    %v5724 = vmul.f32 %v5653, %v5679
    %v5725 = vmul.f32 %v5654, %v5679
    %v5726 = vmul.f32 %v5655, %v5679
    %v5727 = vmul.f32 %v5656, %v5679
    %v5728 = vmul.f32 %v5657, %v5679
    %v5729 = vmul.f32 %v5658, %v5679
    %v5730 = vmul.f32 %v5659, %v5679
    %v5731 = vmul.f32 %v5660, %v5679
    %v5732 = vmul.f32 %v5661, %v5679
    %v5733 = vmul.f32 %v5662, %v5679
    %v5734 = vmul.f32 %v5663, %v5679
    %v5735 = vmul.f32 %v5664, %v5679
    %v5736 = vmul.f32 %v5665, %v5679
    %v5737 = vmul.f32 %v5666, %v5679
    %v5738 = vmul.f32 %v5667, %v5679
    %v5739 = vmul.f32 %v5668, %v5679
    %v5740 = vmul.f32 %v5669, %v5679
    %v5741 = vmul.f32 %v5670, %v5679
    %v5742 = vmul.f32 %v5671, %v5679
    %v5743 = vmul.f32 %v5672, %v5679
    %v5744 = vmul.f32 %v5673, %v5679
    %5745 = vadd.xlane.f32.xlu0 %v5681
    %v5746 = vpop.xlane.xlu0 %5745
    %5747 = vadd.xlane.f32.xlu0 %v5682
    %v5748 = vpop.xlane.xlu0 %5747
    %5749 = vadd.xlane.f32.xlu0 %v5683
    %v5750 = vpop.xlane.xlu0 %5749
    %5751 = vadd.xlane.f32.xlu0 %v5684
    %v5752 = vpop.xlane.xlu0 %5751
    %5753 = vadd.xlane.f32.xlu0 %v5685
    %v5754 = vpop.xlane.xlu0 %5753
    %5755 = vadd.xlane.f32.xlu0 %v5686
    %v5756 = vpop.xlane.xlu0 %5755
    %5757 = vadd.xlane.f32.xlu0 %v5687
    %v5758 = vpop.xlane.xlu0 %5757
    %5759 = vadd.xlane.f32.xlu0 %v5688
    %v5760 = vpop.xlane.xlu0 %5759
    %5761 = vadd.xlane.f32.xlu0 %v5689
    %v5762 = vpop.xlane.xlu0 %5761
    %5763 = vadd.xlane.f32.xlu0 %v5690
    %v5764 = vpop.xlane.xlu0 %5763
    %5765 = vadd.xlane.f32.xlu0 %v5691
    %v5766 = vpop.xlane.xlu0 %5765
    %5767 = vadd.xlane.f32.xlu0 %v5692
    %v5768 = vpop.xlane.xlu0 %5767
    %5769 = vadd.xlane.f32.xlu0 %v5693
    %v5770 = vpop.xlane.xlu0 %5769
    %5771 = vadd.xlane.f32.xlu0 %v5694
    %v5772 = vpop.xlane.xlu0 %5771
    %5773 = vadd.xlane.f32.xlu0 %v5695
    %v5774 = vpop.xlane.xlu0 %5773
    %5775 = vadd.xlane.f32.xlu0 %v5696
    %v5776 = vpop.xlane.xlu0 %5775
    %5777 = vadd.xlane.f32.xlu0 %v5697
    %v5778 = vpop.xlane.xlu0 %5777
    %5779 = vadd.xlane.f32.xlu0 %v5698
    %v5780 = vpop.xlane.xlu0 %5779
    %5781 = vadd.xlane.f32.xlu0 %v5699
    %v5782 = vpop.xlane.xlu0 %5781
    %5783 = vadd.xlane.f32.xlu0 %v5700
    %v5784 = vpop.xlane.xlu0 %5783
    %5785 = vadd.xlane.f32.xlu0 %v5701
    %v5786 = vpop.xlane.xlu0 %5785
    %5787 = vadd.xlane.f32.xlu0 %v5702
    %v5788 = vpop.xlane.xlu0 %5787
    %5789 = vadd.xlane.f32.xlu0 %v5703
    %v5790 = vpop.xlane.xlu0 %5789
    %5791 = vadd.xlane.f32.xlu0 %v5704
    %v5792 = vpop.xlane.xlu0 %5791
    %5793 = vadd.xlane.f32.xlu0 %v5705
    %v5794 = vpop.xlane.xlu0 %5793
    %5795 = vadd.xlane.f32.xlu0 %v5706
    %v5796 = vpop.xlane.xlu0 %5795
    %5797 = vadd.xlane.f32.xlu0 %v5707
    %v5798 = vpop.xlane.xlu0 %5797
    %5799 = vadd.xlane.f32.xlu0 %v5708
    %v5800 = vpop.xlane.xlu0 %5799
    %5801 = vadd.xlane.f32.xlu0 %v5709
    %v5802 = vpop.xlane.xlu0 %5801
    %5803 = vadd.xlane.f32.xlu0 %v5710
    %v5804 = vpop.xlane.xlu0 %5803
    %5805 = vadd.xlane.f32.xlu0 %v5711
    %v5806 = vpop.xlane.xlu0 %5805
    %5807 = vadd.xlane.f32.xlu0 %v5712
    %v5808 = vpop.xlane.xlu0 %5807
    %5809 = vadd.xlane.f32.xlu0 %v5713
    %v5810 = vpop.xlane.xlu0 %5809
    %5811 = vadd.xlane.f32.xlu0 %v5714
    %v5812 = vpop.xlane.xlu0 %5811
    %5813 = vadd.xlane.f32.xlu0 %v5715
    %v5814 = vpop.xlane.xlu0 %5813
    %5815 = vadd.xlane.f32.xlu0 %v5716
    %v5816 = vpop.xlane.xlu0 %5815
    %5817 = vadd.xlane.f32.xlu0 %v5717
    %v5818 = vpop.xlane.xlu0 %5817
    %5819 = vadd.xlane.f32.xlu0 %v5718
    %v5820 = vpop.xlane.xlu0 %5819
    %5821 = vadd.xlane.f32.xlu0 %v5719
    %v5822 = vpop.xlane.xlu0 %5821
    %5823 = vadd.xlane.f32.xlu0 %v5720
    %v5824 = vpop.xlane.xlu0 %5823
    %5825 = vadd.xlane.f32.xlu0 %v5721
    %v5826 = vpop.xlane.xlu0 %5825
    %5827 = vadd.xlane.f32.xlu0 %v5722
    %v5828 = vpop.xlane.xlu0 %5827
    %5829 = vadd.xlane.f32.xlu0 %v5723
    %v5830 = vpop.xlane.xlu0 %5829
    %5831 = vadd.xlane.f32.xlu0 %v5724
    %v5832 = vpop.xlane.xlu0 %5831
    %5833 = vadd.xlane.f32.xlu0 %v5725
    %v5834 = vpop.xlane.xlu0 %5833
    %5835 = vadd.xlane.f32.xlu0 %v5726
    %v5836 = vpop.xlane.xlu0 %5835
    %5837 = vadd.xlane.f32.xlu0 %v5727
    %v5838 = vpop.xlane.xlu0 %5837
    %5839 = vadd.xlane.f32.xlu0 %v5728
    %v5840 = vpop.xlane.xlu0 %5839
    %5841 = vadd.xlane.f32.xlu0 %v5729
    %v5842 = vpop.xlane.xlu0 %5841
    %5843 = vadd.xlane.f32.xlu0 %v5730
    %v5844 = vpop.xlane.xlu0 %5843
    %5845 = vadd.xlane.f32.xlu0 %v5731
    %v5846 = vpop.xlane.xlu0 %5845
    %5847 = vadd.xlane.f32.xlu0 %v5732
    %v5848 = vpop.xlane.xlu0 %5847
    %5849 = vadd.xlane.f32.xlu0 %v5733
    %v5850 = vpop.xlane.xlu0 %5849
    %5851 = vadd.xlane.f32.xlu0 %v5734
    %v5852 = vpop.xlane.xlu0 %5851
    %5853 = vadd.xlane.f32.xlu0 %v5735
    %v5854 = vpop.xlane.xlu0 %5853
    %5855 = vadd.xlane.f32.xlu0 %v5736
    %v5856 = vpop.xlane.xlu0 %5855
    %5857 = vadd.xlane.f32.xlu0 %v5737
    %v5858 = vpop.xlane.xlu0 %5857
    %5859 = vadd.xlane.f32.xlu0 %v5738
    %v5860 = vpop.xlane.xlu0 %5859
    %5861 = vadd.xlane.f32.xlu0 %v5739
    %v5862 = vpop.xlane.xlu0 %5861
    %5863 = vadd.xlane.f32.xlu0 %v5740
    %v5864 = vpop.xlane.xlu0 %5863
    %5865 = vadd.xlane.f32.xlu0 %v5741
    %v5866 = vpop.xlane.xlu0 %5865
    %5867 = vadd.xlane.f32.xlu0 %v5742
    %v5868 = vpop.xlane.xlu0 %5867
    %5869 = vadd.xlane.f32.xlu0 %v5743
    %v5870 = vpop.xlane.xlu0 %5869
    %5871 = vadd.xlane.f32.xlu0 %v5744
    %v5872 = vpop.xlane.xlu0 %5871
    %v5873 = vld [vmem:[#allocation2] sm:$0x1]
    %v5875 = vlaneseq
    %v5876 = vshrl.u32 %v5875, 7
    %v5877 = vsub.s32 0, %v5876
    %v5878 = vrot.slane %v5873, %v5877
    %v5880 = vadd.f32 %v5746, %v5878
    %v5881 = vadd.f32 %v5748, %v5878
    %v5882 = vadd.f32 %v5750, %v5878
    %v5883 = vadd.f32 %v5752, %v5878
    %v5884 = vadd.f32 %v5754, %v5878
    %v5885 = vadd.f32 %v5756, %v5878
    %v5886 = vadd.f32 %v5758, %v5878
    %v5887 = vadd.f32 %v5760, %v5878
    %v5888 = vadd.f32 %v5762, %v5878
    %v5889 = vadd.f32 %v5764, %v5878
    %v5890 = vadd.f32 %v5766, %v5878
    %v5891 = vadd.f32 %v5768, %v5878
    %v5892 = vadd.f32 %v5770, %v5878
    %v5893 = vadd.f32 %v5772, %v5878
    %v5894 = vadd.f32 %v5774, %v5878
    %v5895 = vadd.f32 %v5776, %v5878
    %v5896 = vadd.f32 %v5778, %v5878
    %v5897 = vadd.f32 %v5780, %v5878
    %v5898 = vadd.f32 %v5782, %v5878
    %v5899 = vadd.f32 %v5784, %v5878
    %v5900 = vadd.f32 %v5786, %v5878
    %v5901 = vadd.f32 %v5788, %v5878
    %v5902 = vadd.f32 %v5790, %v5878
    %v5903 = vadd.f32 %v5792, %v5878
    %v5904 = vadd.f32 %v5794, %v5878
    %v5905 = vadd.f32 %v5796, %v5878
    %v5906 = vadd.f32 %v5798, %v5878
    %v5907 = vadd.f32 %v5800, %v5878
    %v5908 = vadd.f32 %v5802, %v5878
    %v5909 = vadd.f32 %v5804, %v5878
    %v5910 = vadd.f32 %v5806, %v5878
    %v5911 = vadd.f32 %v5808, %v5878
    %v5912 = vadd.f32 %v5810, %v5878
    %v5913 = vadd.f32 %v5812, %v5878
    %v5914 = vadd.f32 %v5814, %v5878
    %v5915 = vadd.f32 %v5816, %v5878
    %v5916 = vadd.f32 %v5818, %v5878
    %v5917 = vadd.f32 %v5820, %v5878
    %v5918 = vadd.f32 %v5822, %v5878
    %v5919 = vadd.f32 %v5824, %v5878
    %v5920 = vadd.f32 %v5826, %v5878
    %v5921 = vadd.f32 %v5828, %v5878
    %v5922 = vadd.f32 %v5830, %v5878
    %v5923 = vadd.f32 %v5832, %v5878
    %v5924 = vadd.f32 %v5834, %v5878
    %v5925 = vadd.f32 %v5836, %v5878
    %v5926 = vadd.f32 %v5838, %v5878
    %v5927 = vadd.f32 %v5840, %v5878
    %v5928 = vadd.f32 %v5842, %v5878
    %v5929 = vadd.f32 %v5844, %v5878
    %v5930 = vadd.f32 %v5846, %v5878
    %v5931 = vadd.f32 %v5848, %v5878
    %v5932 = vadd.f32 %v5850, %v5878
    %v5933 = vadd.f32 %v5852, %v5878
    %v5934 = vadd.f32 %v5854, %v5878
    %v5935 = vadd.f32 %v5856, %v5878
    %v5936 = vadd.f32 %v5858, %v5878
    %v5937 = vadd.f32 %v5860, %v5878
    %v5938 = vadd.f32 %v5862, %v5878
    %v5939 = vadd.f32 %v5864, %v5878
    %v5940 = vadd.f32 %v5866, %v5878
    %v5941 = vadd.f32 %v5868, %v5878
    %v5942 = vadd.f32 %v5870, %v5878
    %v5943 = vadd.f32 %v5872, %v5878
    %vm5944 = vcmask 7168
    %5945 = vst.msk [vmem:[%s11] sm:$0xff] %vm5944, %v5880
    %5946 = vst.msk [vmem:[%s11 + $0x8] sm:$0xff] %vm5944, %v5881
    %5947 = vst.msk [vmem:[%s11 + $0x10] sm:$0xff] %vm5944, %v5882
    %5948 = vst.msk [vmem:[%s11 + $0x18] sm:$0xff] %vm5944, %v5883
    %5949 = vst.msk [vmem:[%s11 + $0x20] sm:$0xff] %vm5944, %v5884
    %5950 = vst.msk [vmem:[%s11 + $0x28] sm:$0xff] %vm5944, %v5885
    %5951 = vst.msk [vmem:[%s11 + $0x30] sm:$0xff] %vm5944, %v5886
    %5952 = vst.msk [vmem:[%s11 + $0x38] sm:$0xff] %vm5944, %v5887
    %5953 = vst.msk [vmem:[%s11 + $0x40] sm:$0xff] %vm5944, %v5888
    %5954 = vst.msk [vmem:[%s11 + $0x48] sm:$0xff] %vm5944, %v5889
    %5955 = vst.msk [vmem:[%s11 + $0x50] sm:$0xff] %vm5944, %v5890
    %5956 = vst.msk [vmem:[%s11 + $0x58] sm:$0xff] %vm5944, %v5891
    %5957 = vst.msk [vmem:[%s11 + $0x60] sm:$0xff] %vm5944, %v5892
    %5958 = vst.msk [vmem:[%s11 + $0x68] sm:$0xff] %vm5944, %v5893
    %5959 = vst.msk [vmem:[%s11 + $0x70] sm:$0xff] %vm5944, %v5894
    %5960 = vst.msk [vmem:[%s11 + $0x78] sm:$0xff] %vm5944, %v5895
    %5961 = vst.msk [vmem:[%s11 + $0x80] sm:$0xff] %vm5944, %v5896
    %5962 = vst.msk [vmem:[%s11 + $0x88] sm:$0xff] %vm5944, %v5897
    %5963 = vst.msk [vmem:[%s11 + $0x90] sm:$0xff] %vm5944, %v5898
    %5964 = vst.msk [vmem:[%s11 + $0x98] sm:$0xff] %vm5944, %v5899
    %5965 = vst.msk [vmem:[%s11 + $0xa0] sm:$0xff] %vm5944, %v5900
    %5966 = vst.msk [vmem:[%s11 + $0xa8] sm:$0xff] %vm5944, %v5901
    %5967 = vst.msk [vmem:[%s11 + $0xb0] sm:$0xff] %vm5944, %v5902
    %5968 = vst.msk [vmem:[%s11 + $0xb8] sm:$0xff] %vm5944, %v5903
    %5969 = vst.msk [vmem:[%s11 + $0xc0] sm:$0xff] %vm5944, %v5904
    %5970 = vst.msk [vmem:[%s11 + $0xc8] sm:$0xff] %vm5944, %v5905
    %5971 = vst.msk [vmem:[%s11 + $0xd0] sm:$0xff] %vm5944, %v5906
    %5972 = vst.msk [vmem:[%s11 + $0xd8] sm:$0xff] %vm5944, %v5907
    %5973 = vst.msk [vmem:[%s11 + $0xe0] sm:$0xff] %vm5944, %v5908
    %5974 = vst.msk [vmem:[%s11 + $0xe8] sm:$0xff] %vm5944, %v5909
    %5975 = vst.msk [vmem:[%s11 + $0xf0] sm:$0xff] %vm5944, %v5910
    %5976 = vst.msk [vmem:[%s11 + $0xf8] sm:$0xff] %vm5944, %v5911
    %5977 = vst.msk [vmem:[%s11 + $0x100] sm:$0xff] %vm5944, %v5912
    %5978 = vst.msk [vmem:[%s11 + $0x108] sm:$0xff] %vm5944, %v5913
    %5979 = vst.msk [vmem:[%s11 + $0x110] sm:$0xff] %vm5944, %v5914
    %5980 = vst.msk [vmem:[%s11 + $0x118] sm:$0xff] %vm5944, %v5915
    %5981 = vst.msk [vmem:[%s11 + $0x120] sm:$0xff] %vm5944, %v5916
    %5982 = vst.msk [vmem:[%s11 + $0x128] sm:$0xff] %vm5944, %v5917
    %5983 = vst.msk [vmem:[%s11 + $0x130] sm:$0xff] %vm5944, %v5918
    %5984 = vst.msk [vmem:[%s11 + $0x138] sm:$0xff] %vm5944, %v5919
    %5985 = vst.msk [vmem:[%s11 + $0x140] sm:$0xff] %vm5944, %v5920
    %5986 = vst.msk [vmem:[%s11 + $0x148] sm:$0xff] %vm5944, %v5921
    %5987 = vst.msk [vmem:[%s11 + $0x150] sm:$0xff] %vm5944, %v5922
    %5988 = vst.msk [vmem:[%s11 + $0x158] sm:$0xff] %vm5944, %v5923
    %5989 = vst.msk [vmem:[%s11 + $0x160] sm:$0xff] %vm5944, %v5924
    %5990 = vst.msk [vmem:[%s11 + $0x168] sm:$0xff] %vm5944, %v5925
    %5991 = vst.msk [vmem:[%s11 + $0x170] sm:$0xff] %vm5944, %v5926
    %5992 = vst.msk [vmem:[%s11 + $0x178] sm:$0xff] %vm5944, %v5927
    %5993 = vst.msk [vmem:[%s11 + $0x180] sm:$0xff] %vm5944, %v5928
    %5994 = vst.msk [vmem:[%s11 + $0x188] sm:$0xff] %vm5944, %v5929
    %5995 = vst.msk [vmem:[%s11 + $0x190] sm:$0xff] %vm5944, %v5930
    %5996 = vst.msk [vmem:[%s11 + $0x198] sm:$0xff] %vm5944, %v5931
    %5997 = vst.msk [vmem:[%s11 + $0x1a0] sm:$0xff] %vm5944, %v5932
    %5998 = vst.msk [vmem:[%s11 + $0x1a8] sm:$0xff] %vm5944, %v5933
    %5999 = vst.msk [vmem:[%s11 + $0x1b0] sm:$0xff] %vm5944, %v5934
    %6000 = vst.msk [vmem:[%s11 + $0x1b8] sm:$0xff] %vm5944, %v5935
    %6001 = vst.msk [vmem:[%s11 + $0x1c0] sm:$0xff] %vm5944, %v5936
    %6002 = vst.msk [vmem:[%s11 + $0x1c8] sm:$0xff] %vm5944, %v5937
    %6003 = vst.msk [vmem:[%s11 + $0x1d0] sm:$0xff] %vm5944, %v5938
    %6004 = vst.msk [vmem:[%s11 + $0x1d8] sm:$0xff] %vm5944, %v5939
    %6005 = vst.msk [vmem:[%s11 + $0x1e0] sm:$0xff] %vm5944, %v5940
    %6006 = vst.msk [vmem:[%s11 + $0x1e8] sm:$0xff] %vm5944, %v5941
    %6007 = vst.msk [vmem:[%s11 + $0x1f0] sm:$0xff] %vm5944, %v5942
    %6008 = vst.msk [vmem:[%s11 + $0x1f8] sm:$0xff] %vm5944, %v5943
    // Predicated region
    $region58: #{ridinet_forward_batched.1} parent=1 // pred_check
      _
    $region59: #{ridinet_forward_batched.1} parent=1 // pred_check_branch
      %6010 = sbr.rel (0) target = $region61
    $region60: #{ridinet_forward_batched.1} parent=1 // pred_region
      _
    $region61: #{ridinet_forward_batched.1} parent=1 // pred_fallthru
      _
    // Predicated region
    $region62: #{ridinet_forward_batched.1} parent=1 // pred_check
      _
    $region63: #{ridinet_forward_batched.1} parent=1 // pred_check_branch
      %6012 = sbr.rel (0) target = $region65
    $region64: #{ridinet_forward_batched.1} parent=1 // pred_region
      _
    $region65: #{ridinet_forward_batched.1} parent=1 // pred_fallthru
      _
    %6013 = vsyncpa [#allocation4], 1
    %6014 = vsyncpa [#allocation6], 1

</llo_original>
